<compile_context>
chip_gen: v5e
topology: v5e:2x2
jax: 0.10.0
libtpu: 0.0.40
codegen_flags: <defaults>
</compile_context>

<pallas_src>
import functools
import math

import jax
import jax.numpy as jnp
from jax import lax
from jax.experimental import pallas as pl
from jax.experimental.pallas import tpu as pltpu


# ----------------------------------------------------------------------------
# The fused forward kernel (one grid program per batch chunk)
# ----------------------------------------------------------------------------
def _fused_forward_kernel(
    x_ref, img_ref,
    enc_w_ref, enc_b_ref,
    sa_w_ref, sa_b_ref, sao_w_ref, sao_b_ref,
    ca_w_ref, ca_b_ref,
    ff1_w_ref, ff1_b_ref, ff2_w_ref, ff2_b_ref,
    ln_g_ref, ln_b_ref,
    fco_w_ref, fco_b_ref,
    out_ref,
    *, num_heads, num_layers, eps):
  Bblk, S, E = x_ref.shape
  N = Bblk * S
  V = out_ref.shape[2]
  Dh = E // num_heads
  f32 = jnp.float32

  def layernorm(h, g, b):
    mu = jnp.mean(h, axis=-1, keepdims=True)
    var = jnp.mean(jnp.square(h - mu), axis=-1, keepdims=True)
    return (h - mu) * lax.rsqrt(var + eps) * g + b

  # ---- encoder head stand-in: global average pool over spatial + linear ----
  # TODO(synk): the pretrained/frozen timm tf_efficientnetv2_s backbone is not
  # reproducible here; raw input channels are GAP'd and projected instead.
  feat_rows = []
  for b in range(Bblk):                                  # static, tiny C
    pooled = jnp.mean(img_ref[b], axis=-1, keepdims=True)           # (C, 1)
    feat_rows.append(jnp.sum(pooled * enc_w_ref[...], axis=0,
                             keepdims=True))                        # (1, E)
  feat = (jnp.concatenate(feat_rows, axis=0) if Bblk > 1 else feat_rows[0])
  feat = feat + enc_b_ref[...]                                      # (Bblk, E)

  # Broadcast the per-image feature over the S query positions once, in the
  # same flattened (Bblk*S, E) row order used by all dense matmuls below.
  if Bblk > 1:
    feat_exp = jnp.concatenate(
        [jnp.broadcast_to(feat[b:b + 1, :], (S, E)) for b in range(Bblk)],
        axis=0)                                                     # (N, E)
  else:
    feat_exp = jnp.broadcast_to(feat[0:1, :], (S, E))

  # ---- cross attention, hoisted out of the layer loop ----
  # Memory length is 1 so the softmax weight is exactly 1; with the V- and
  # out-projections pre-folded into one (E, E) matrix per layer, each layer's
  # cross-attention output is x-independent:  ca_l = feat @ ca_w[l] + ca_b[l].
  ca_exp = [
      jnp.dot(feat_exp, ca_w_ref[l], preferred_element_type=f32) + ca_b_ref[l]
      for l in range(num_layers)
  ]

  # ---- causal mask generated in-kernel (no HBM input) ----
  row = lax.broadcasted_iota(jnp.int32, (S, S), 0)
  col = lax.broadcasted_iota(jnp.int32, (S, S), 1)
  causal_ok = col <= row                                            # (S, S)
  neg_inf = jnp.float32(-jnp.inf)

  x = x_ref[...].reshape(N, E)                                      # (N, E)

  for l in range(num_layers):
    sa_w_l, sa_b_l = sa_w_ref[l], sa_b_ref[l]
    sao_w_l, sao_b_l = sao_w_ref[l], sao_b_ref[l]
    ff1_w_l, ff1_b_l = ff1_w_ref[l], ff1_b_ref[l]
    ff2_w_l, ff2_b_l = ff2_w_ref[l], ff2_b_ref[l]
    ln_g_l, ln_b_l = ln_g_ref[l], ln_b_ref[l]                       # (3, E)

    # ----- self attention: one fused QKV matmul (q-scale pre-folded) -----
    qkv = jnp.dot(x, sa_w_l, preferred_element_type=f32) + sa_b_l   # (N, 3E)
    q, k, v = qkv[:, :E], qkv[:, E:2 * E], qkv[:, 2 * E:]

    # Per (batch, head) scores; every head's PV result is accumulated straight
    # into the output projection (no lane-axis concat of sub-vreg head tiles).
    sa_rows = []
    for b in range(Bblk):                          # static loops, all in VMEM
      rs = slice(b * S, (b + 1) * S)
      acc = jnp.zeros((S, E), f32)
      for h in range(num_heads):
        cs = slice(h * Dh, (h + 1) * Dh)
        s = lax.dot_general(q[rs, cs], k[rs, cs], (((1,), (1,)), ((), ())),
                            preferred_element_type=f32)             # (S, S)
        s = jnp.where(causal_ok, s, neg_inf)
        p = jnp.exp(s - jnp.max(s, axis=-1, keepdims=True))
        p = p * pl.reciprocal(jnp.sum(p, axis=-1, keepdims=True), approx=True)
        hv = jnp.dot(p, v[rs, cs], preferred_element_type=f32)      # (S, Dh)
        acc = acc + jnp.dot(hv, sao_w_l[cs, :],
                            preferred_element_type=f32)             # (S, E)
      sa_rows.append(acc)
    sa = (jnp.concatenate(sa_rows, axis=0) if Bblk > 1 else sa_rows[0])
    sa = sa + sao_b_l
    x = layernorm(x + sa, ln_g_l[0:1, :], ln_b_l[0:1, :])

    # ----- cross attention (precomputed above, x-independent) -----
    x = layernorm(x + ca_exp[l], ln_g_l[1:2, :], ln_b_l[1:2, :])

    # ----- feed forward -----
    hdn = jnp.dot(x, ff1_w_l, preferred_element_type=f32) + ff1_b_l
    hdn = jnp.maximum(hdn, 0.0)
    y = jnp.dot(hdn, ff2_w_l, preferred_element_type=f32) + ff2_b_l
    x = layernorm(x + y, ln_g_l[2:3, :], ln_b_l[2:3, :])

  # ----- output head: lane-dense (N, V) matmul + store -----
  logits = jnp.dot(x, fco_w_ref[...], preferred_element_type=f32) + fco_b_ref[...]
  out_ref[...] = logits.reshape(Bblk, S, V).astype(out_ref.dtype)


# ----------------------------------------------------------------------------
# Wrapper: one pallas_call for the whole forward
# ----------------------------------------------------------------------------
def image_captioning_forward(prep, images, captions, num_heads,
                             num_batch_blocks=1):
  """num_batch_blocks=1 (default): single grid step, best on single-TC
  v5e/v6e.  Pass num_batch_blocks=2 on v7x to shard batch halves across the
  two TensorCores (the grid axis is marked "parallel")."""
  B, C, Himg, Wimg = images.shape
  S = captions.shape[1]
  E = prep["embed"].shape[1]
  V = prep["fco_w"].shape[1]
  L = prep["sa_w"].shape[0]
  HW = Himg * Wimg
  assert B % num_batch_blocks == 0
  Bblk = B // num_batch_blocks

  # Token embedding gather + positional encoding (tiny XLA ops, PE precomputed)
  x = jnp.take(prep["embed"], captions, axis=0) + prep["pos_enc"][None, :S, :]
  img = images.reshape(B, C, HW)

  weight_names = ("enc_w", "enc_b", "sa_w", "sa_b", "sao_w", "sao_b",
                  "ca_w", "ca_b",
                  "ff1_w", "ff1_b", "ff2_w", "ff2_b",
                  "ln_g", "ln_b", "fco_w", "fco_b")
  weights = [prep[n] for n in weight_names]

  def full_spec(arr):
    zeros = (0,) * arr.ndim          # constant block index -> fetched once
    return pl.BlockSpec(arr.shape, lambda i: zeros)

  kernel = functools.partial(_fused_forward_kernel,
                             num_heads=num_heads, num_layers=L, eps=1e-5)

  return pl.pallas_call(
      kernel,
      out_shape=jax.ShapeDtypeStruct((B, S, V), jnp.float32),
      grid=(num_batch_blocks,),
      in_specs=[pl.BlockSpec((Bblk, S, E), lambda i: (i, 0, 0)),
                pl.BlockSpec((Bblk, C, HW), lambda i: (i, 0, 0))]
               + [full_spec(w) for w in weights],
      out_specs=pl.BlockSpec((Bblk, S, V), lambda i: (i, 0, 0)),
      compiler_params=pltpu.CompilerParams(
          dimension_semantics=("parallel",)),   # shards batch chunks on v7x
  )(x, img, *weights)


# ----------------------------------------------------------------------------
# Parameter handling
# ----------------------------------------------------------------------------
def positional_encoding(max_len, embed_size):
  pos = jnp.arange(max_len, dtype=jnp.float32)[:, None]
  div = jnp.exp(jnp.arange(0, embed_size, 2, dtype=jnp.float32)
                * (-math.log(10000.0) / embed_size))
  pe = jnp.zeros((max_len, embed_size), jnp.float32)
  pe = pe.at[:, 0::2].set(jnp.sin(pos * div))
  pe = pe.at[:, 1::2].set(jnp.cos(pos * div))
  return pe


def prepare_params(params, num_heads, max_len=128):
  """One-time, OUTSIDE-jit repacking: torch (out,in) -> (in,out) transposes,
  1/sqrt(Dh) q-scale folded into Wq/bq, per-layer weights stacked along a
  leading layer axis, cross-attention reduced to its exact Sk==1 form with the
  V- and out-projections folded into a single (E,E) matrix + (1,E) bias per
  layer, positional encoding precomputed."""
  E = params["embed"].shape[1]
  scale = 1.0 / math.sqrt(E // num_heads)

  def stack(fn):
    return jnp.stack([fn(lp) for lp in params["layers"]], axis=0)

  def self_in_w(lp):
    w = lp["self"]["in_proj_w"]                          # (3E, E) torch (out,in)
    return jnp.concatenate([w[:E] * scale, w[E:2 * E], w[2 * E:]], axis=0).T

  def self_in_b(lp):
    b = lp["self"]["in_proj_b"]
    return jnp.concatenate([b[:E] * scale, b[E:]], axis=0)[None, :]

  def cross_fold_w(lp):
    wv = lp["cross"]["in_proj_w"][2 * E:].T              # (E, E) in->v
    wo = lp["cross"]["out_proj_w"].T                     # (E, E) v->out
    return wv @ wo                                       # (E, E)

  def cross_fold_b(lp):
    bv = lp["cross"]["in_proj_b"][2 * E:]                # (E,)
    wo = lp["cross"]["out_proj_w"].T
    bo = lp["cross"]["out_proj_b"]
    return (bv @ wo + bo)[None, :]                       # (1, E)

  return {
      "embed": params["embed"],
      "pos_enc": positional_encoding(max_len, E),
      "enc_w": params["enc_fc_w"].T,                               # (C, E)
      "enc_b": params["enc_fc_b"][None, :],
      "sa_w": stack(self_in_w),                                    # (L, E, 3E)
      "sa_b": stack(self_in_b),                                    # (L, 1, 3E)
      "sao_w": stack(lambda lp: lp["self"]["out_proj_w"].T),       # (L, E, E)
      "sao_b": stack(lambda lp: lp["self"]["out_proj_b"][None, :]),
      "ca_w": stack(cross_fold_w),                                 # (L, E, E)
      "ca_b": stack(cross_fold_b),                                 # (L, 1, E)
      "ff1_w": stack(lambda lp: lp["lin1_w"].T),
      "ff1_b": stack(lambda lp: lp["lin1_b"][None, :]),
      "ff2_w": stack(lambda lp: lp["lin2_w"].T),
      "ff2_b": stack(lambda lp: lp["lin2_b"][None, :]),
      "ln_g": stack(lambda lp: jnp.stack(
          [lp["norm1_g"], lp["norm2_g"], lp["norm3_g"]], axis=0)), # (L, 3, E)
      "ln_b": stack(lambda lp: jnp.stack(
          [lp["norm1_b"], lp["norm2_b"], lp["norm3_b"]], axis=0)),
      "fco_w": params["fc_out_w"].T,                               # (E, V)
      "fco_b": params["fc_out_b"][None, :],
  }


def init_params(key, vocab, E, H_ff, num_layers, feat_dim):
  """Weights stored in PyTorch (out, in) convention, as the reference module."""
  keys = iter(jax.random.split(key, 16 + 8 * num_layers))

  def dense(shape):
    return jax.random.normal(next(keys), shape, jnp.float32) * 0.02

  params = {
      "embed": dense((vocab, E)),
      "enc_fc_w": dense((E, feat_dim)),
      "enc_fc_b": jnp.zeros((E,), jnp.float32),
      "fc_out_w": dense((vocab, E)),
      "fc_out_b": jnp.zeros((vocab,), jnp.float32),
      "layers": [],
  }
  for _ in range(num_layers):
    params["layers"].append({
        "self": {
            "in_proj_w": dense((3 * E, E)),
            "in_proj_b": jnp.zeros((3 * E,), jnp.float32),
            "out_proj_w": dense((E, E)),
            "out_proj_b": jnp.zeros((E,), jnp.float32),
        },
        "cross": {
            "in_proj_w": dense((3 * E, E)),
            "in_proj_b": jnp.zeros((3 * E,), jnp.float32),
            "out_proj_w": dense((E, E)),
            "out_proj_b": jnp.zeros((E,), jnp.float32),
        },
        "lin1_w": dense((H_ff, E)),
        "lin1_b": jnp.zeros((H_ff,), jnp.float32),
        "lin2_w": dense((E, H_ff)),
        "lin2_b": jnp.zeros((E,), jnp.float32),
        "norm1_g": jnp.ones((E,), jnp.float32),
        "norm1_b": jnp.zeros((E,), jnp.float32),
        "norm2_g": jnp.ones((E,), jnp.float32),
        "norm2_b": jnp.zeros((E,), jnp.float32),
        "norm3_g": jnp.ones((E,), jnp.float32),
        "norm3_b": jnp.zeros((E,), jnp.float32),
    })
  return params


if __name__ == "__main__":
  # small config consistent with the module's structure
  B, C, Himg, Wimg = 2, 4, 16, 16
  S = 8
  embed_size, hidden_size, num_heads, num_layers, vocab_size = 32, 64, 4, 2, 128

  key = jax.random.PRNGKey(0)
  k_img, k_cap, k_par = jax.random.split(key, 3)
  images = jax.random.normal(k_img, (B, C, Himg, Wimg), jnp.float32)
  captions = jax.random.randint(k_cap, (B, S), 0, vocab_size, dtype=jnp.int32)

  params = init_params(k_par, vocab_size, embed_size, hidden_size, num_layers, C)
  prep = prepare_params(params, num_heads)   # one-time repack, outside jit

  # num_batch_blocks=1: single grid step with all B*S rows flattened into each
  # dense matmul (best on single-TC v5e/v6e; pass 2 on v7x for megacore).
  fwd = jax.jit(functools.partial(image_captioning_forward,
                                  num_heads=num_heads, num_batch_blocks=1))
  logits = jax.block_until_ready(fwd(prep, images, captions))

  assert logits.shape == (B, S, vocab_size), logits.shape
  assert bool(jnp.all(jnp.isfinite(logits)))
  print("KERNEL_OK")
</pallas_src>

<mosaic_0001>
module attributes {stable_mosaic.version = 11 : i64} {
  func.func @_fused_forward_kernel(%arg0: i32, %arg1: memref<2x8x32xf32, #tpu.memory_space<vmem>>, %arg2: memref<2x4x256xf32, #tpu.memory_space<vmem>>, %arg3: memref<4x32xf32, #tpu.memory_space<vmem>>, %arg4: memref<1x32xf32, #tpu.memory_space<vmem>>, %arg5: memref<2x32x96xf32, #tpu.memory_space<vmem>>, %arg6: memref<2x1x96xf32, #tpu.memory_space<vmem>>, %arg7: memref<2x32x32xf32, #tpu.memory_space<vmem>>, %arg8: memref<2x1x32xf32, #tpu.memory_space<vmem>>, %arg9: memref<2x32x32xf32, #tpu.memory_space<vmem>>, %arg10: memref<2x1x32xf32, #tpu.memory_space<vmem>>, %arg11: memref<2x32x64xf32, #tpu.memory_space<vmem>>, %arg12: memref<2x1x64xf32, #tpu.memory_space<vmem>>, %arg13: memref<2x64x32xf32, #tpu.memory_space<vmem>>, %arg14: memref<2x1x32xf32, #tpu.memory_space<vmem>>, %arg15: memref<2x3x32xf32, #tpu.memory_space<vmem>>, %arg16: memref<2x3x32xf32, #tpu.memory_space<vmem>>, %arg17: memref<32x128xf32, #tpu.memory_space<vmem>>, %arg18: memref<1x128xf32, #tpu.memory_space<vmem>>, %arg19: memref<2x8x128xf32, #tpu.memory_space<vmem>>) attributes {dimension_semantics = [#tpu.dimension_semantics<parallel>], iteration_bounds = array<i64: 1>, scalar_prefetch = 0 : i64, scratch_operands = 0 : i64, tpu.core_type = #tpu.core_type<tc>, window_params = [{transform_indices = @transform_0, window_bounds = array<i64: 2, 8, 32>}, {transform_indices = @transform_1, window_bounds = array<i64: 2, 4, 256>}, {pipeline_mode = #tpu.pipeline_mode<synchronous>, transform_indices = @transform_2, window_bounds = array<i64: 4, 32>}, {pipeline_mode = #tpu.pipeline_mode<synchronous>, transform_indices = @transform_3, window_bounds = array<i64: 1, 32>}, {pipeline_mode = #tpu.pipeline_mode<synchronous>, transform_indices = @transform_4, window_bounds = array<i64: 2, 32, 96>}, {pipeline_mode = #tpu.pipeline_mode<synchronous>, transform_indices = @transform_5, window_bounds = array<i64: 2, 1, 96>}, {pipeline_mode = #tpu.pipeline_mode<synchronous>, transform_indices = @transform_6, window_bounds = array<i64: 2, 32, 32>}, {pipeline_mode = #tpu.pipeline_mode<synchronous>, transform_indices = @transform_7, window_bounds = array<i64: 2, 1, 32>}, {pipeline_mode = #tpu.pipeline_mode<synchronous>, transform_indices = @transform_8, window_bounds = array<i64: 2, 32, 32>}, {pipeline_mode = #tpu.pipeline_mode<synchronous>, transform_indices = @transform_9, window_bounds = array<i64: 2, 1, 32>}, {pipeline_mode = #tpu.pipeline_mode<synchronous>, transform_indices = @transform_10, window_bounds = array<i64: 2, 32, 64>}, {pipeline_mode = #tpu.pipeline_mode<synchronous>, transform_indices = @transform_11, window_bounds = array<i64: 2, 1, 64>}, {pipeline_mode = #tpu.pipeline_mode<synchronous>, transform_indices = @transform_12, window_bounds = array<i64: 2, 64, 32>}, {pipeline_mode = #tpu.pipeline_mode<synchronous>, transform_indices = @transform_13, window_bounds = array<i64: 2, 1, 32>}, {pipeline_mode = #tpu.pipeline_mode<synchronous>, transform_indices = @transform_14, window_bounds = array<i64: 2, 3, 32>}, {pipeline_mode = #tpu.pipeline_mode<synchronous>, transform_indices = @transform_15, window_bounds = array<i64: 2, 3, 32>}, {pipeline_mode = #tpu.pipeline_mode<synchronous>, transform_indices = @transform_16, window_bounds = array<i64: 32, 128>}, {pipeline_mode = #tpu.pipeline_mode<synchronous>, transform_indices = @transform_17, window_bounds = array<i64: 1, 128>}, {transform_indices = @transform_18, window_bounds = array<i64: 2, 8, 128>}]} {
    %c0 = arith.constant 0 : index
    %c0_0 = arith.constant 0 : index
    %c0_1 = arith.constant 0 : index
    %0 = vector.load %arg2[%c0, %c0_0, %c0_1] : memref<2x4x256xf32, #tpu.memory_space<vmem>>, vector<1x4x256xf32>
    %1 = vector.shape_cast %0 : vector<1x4x256xf32> to vector<4x256xf32>
    %cst = arith.constant dense<0.000000e+00> : vector<4xf32>
    %2 = vector.multi_reduction <add>, %1, %cst [1] : vector<4x256xf32> to vector<4xf32>
    %3 = vector.shape_cast %2 : vector<4xf32> to vector<4x1xf32>
    %cst_2 = arith.constant 2.560000e+02 : f32
    %4 = vector.broadcast %cst_2 : f32 to vector<4x1xf32>
    %5 = arith.divf %3, %4 : vector<4x1xf32>
    %c0_3 = arith.constant 0 : index
    %c0_4 = arith.constant 0 : index
    %6 = vector.load %arg3[%c0_3, %c0_4] : memref<4x32xf32, #tpu.memory_space<vmem>>, vector<4x32xf32>
    %7 = vector.broadcast %5 : vector<4x1xf32> to vector<4x32xf32>
    %8 = arith.mulf %7, %6 : vector<4x32xf32>
    %cst_5 = arith.constant dense<0.000000e+00> : vector<32xf32>
    %9 = vector.multi_reduction <add>, %8, %cst_5 [0] : vector<4x32xf32> to vector<32xf32>
    %10 = vector.shape_cast %9 : vector<32xf32> to vector<1x32xf32>
    %c1 = arith.constant 1 : index
    %c0_6 = arith.constant 0 : index
    %c0_7 = arith.constant 0 : index
    %11 = vector.load %arg2[%c1, %c0_6, %c0_7] : memref<2x4x256xf32, #tpu.memory_space<vmem>>, vector<1x4x256xf32>
    %12 = vector.shape_cast %11 : vector<1x4x256xf32> to vector<4x256xf32>
    %cst_8 = arith.constant dense<0.000000e+00> : vector<4xf32>
    %13 = vector.multi_reduction <add>, %12, %cst_8 [1] : vector<4x256xf32> to vector<4xf32>
    %14 = vector.shape_cast %13 : vector<4xf32> to vector<4x1xf32>
    %cst_9 = arith.constant 2.560000e+02 : f32
    %15 = vector.broadcast %cst_9 : f32 to vector<4x1xf32>
    %16 = arith.divf %14, %15 : vector<4x1xf32>
    %c0_10 = arith.constant 0 : index
    %c0_11 = arith.constant 0 : index
    %17 = vector.load %arg3[%c0_10, %c0_11] : memref<4x32xf32, #tpu.memory_space<vmem>>, vector<4x32xf32>
    %18 = vector.broadcast %16 : vector<4x1xf32> to vector<4x32xf32>
    %19 = arith.mulf %18, %17 : vector<4x32xf32>
    %cst_12 = arith.constant dense<0.000000e+00> : vector<32xf32>
    %20 = vector.multi_reduction <add>, %19, %cst_12 [0] : vector<4x32xf32> to vector<32xf32>
    %21 = vector.shape_cast %20 : vector<32xf32> to vector<1x32xf32>
    %22 = tpu.concatenate %10, %21 in 0 : vector<1x32xf32>, vector<1x32xf32> -> vector<2x32xf32>
    %c0_13 = arith.constant 0 : index
    %c0_14 = arith.constant 0 : index
    %23 = vector.load %arg4[%c0_13, %c0_14] : memref<1x32xf32, #tpu.memory_space<vmem>>, vector<1x32xf32>
    %24 = vector.broadcast %23 : vector<1x32xf32> to vector<2x32xf32>
    %25 = arith.addf %22, %24 : vector<2x32xf32>
    %26 = vector.extract_strided_slice %25 {offsets = [0, 0], sizes = [1, 32], strides = [1, 1]} : vector<2x32xf32> to vector<1x32xf32>
    %27 = vector.shape_cast %26 : vector<1x32xf32> to vector<1x32xf32>
    %28 = vector.broadcast %27 : vector<1x32xf32> to vector<8x32xf32>
    %29 = vector.extract_strided_slice %25 {offsets = [1, 0], sizes = [1, 32], strides = [1, 1]} : vector<2x32xf32> to vector<1x32xf32>
    %30 = vector.shape_cast %29 : vector<1x32xf32> to vector<1x32xf32>
    %31 = vector.broadcast %30 : vector<1x32xf32> to vector<8x32xf32>
    %32 = tpu.concatenate %28, %31 in 0 : vector<8x32xf32>, vector<8x32xf32> -> vector<16x32xf32>
    %c0_15 = arith.constant 0 : index
    %c0_16 = arith.constant 0 : index
    %c0_17 = arith.constant 0 : index
    %33 = vector.load %arg9[%c0_15, %c0_16, %c0_17] : memref<2x32x32xf32, #tpu.memory_space<vmem>>, vector<1x32x32xf32>
    %34 = vector.shape_cast %33 : vector<1x32x32xf32> to vector<32x32xf32>
    %cst_18 = arith.constant dense<0.000000e+00> : vector<16x32xf32>
    %35 = tpu.matmul %32, %34, %cst_18 {dimension_numbers = #tpu.dot_dimension_numbers<[1], [0], [0], [1], [0, 0, 1, 1], [], []>} : vector<16x32xf32>, vector<32x32xf32>, vector<16x32xf32> -> vector<16x32xf32>
    %c0_19 = arith.constant 0 : index
    %c0_20 = arith.constant 0 : index
    %c0_21 = arith.constant 0 : index
    %36 = vector.load %arg10[%c0_19, %c0_20, %c0_21] : memref<2x1x32xf32, #tpu.memory_space<vmem>>, vector<1x1x32xf32>
    %37 = vector.shape_cast %36 : vector<1x1x32xf32> to vector<1x32xf32>
    %38 = vector.broadcast %37 : vector<1x32xf32> to vector<16x32xf32>
    %39 = arith.addf %35, %38 : vector<16x32xf32>
    %c1_22 = arith.constant 1 : index
    %c0_23 = arith.constant 0 : index
    %c0_24 = arith.constant 0 : index
    %40 = vector.load %arg9[%c1_22, %c0_23, %c0_24] : memref<2x32x32xf32, #tpu.memory_space<vmem>>, vector<1x32x32xf32>
    %41 = vector.shape_cast %40 : vector<1x32x32xf32> to vector<32x32xf32>
    %cst_25 = arith.constant dense<0.000000e+00> : vector<16x32xf32>
    %42 = tpu.matmul %32, %41, %cst_25 {dimension_numbers = #tpu.dot_dimension_numbers<[1], [0], [0], [1], [0, 0, 1, 1], [], []>} : vector<16x32xf32>, vector<32x32xf32>, vector<16x32xf32> -> vector<16x32xf32>
    %c1_26 = arith.constant 1 : index
    %c0_27 = arith.constant 0 : index
    %c0_28 = arith.constant 0 : index
    %43 = vector.load %arg10[%c1_26, %c0_27, %c0_28] : memref<2x1x32xf32, #tpu.memory_space<vmem>>, vector<1x1x32xf32>
    %44 = vector.shape_cast %43 : vector<1x1x32xf32> to vector<1x32xf32>
    %45 = vector.broadcast %44 : vector<1x32xf32> to vector<16x32xf32>
    %46 = arith.addf %42, %45 : vector<16x32xf32>
    %47 = tpu.iota {dimensions = array<i32: 0>} : vector<8x8xi32>
    %48 = tpu.iota {dimensions = array<i32: 1>} : vector<8x8xi32>
    %49 = arith.cmpi sle, %48, %47 : vector<8x8xi32>
    %c0_29 = arith.constant 0 : index
    %c0_30 = arith.constant 0 : index
    %c0_31 = arith.constant 0 : index
    %50 = vector.load %arg1[%c0_29, %c0_30, %c0_31] : memref<2x8x32xf32, #tpu.memory_space<vmem>>, vector<2x8x32xf32>
    %51 = vector.shape_cast %50 : vector<2x8x32xf32> to vector<16x32xf32>
    %c0_32 = arith.constant 0 : index
    %c0_33 = arith.constant 0 : index
    %c0_34 = arith.constant 0 : index
    %52 = vector.load %arg5[%c0_32, %c0_33, %c0_34] : memref<2x32x96xf32, #tpu.memory_space<vmem>>, vector<1x32x96xf32>
    %53 = vector.shape_cast %52 : vector<1x32x96xf32> to vector<32x96xf32>
    %c0_35 = arith.constant 0 : index
    %c0_36 = arith.constant 0 : index
    %c0_37 = arith.constant 0 : index
    %54 = vector.load %arg6[%c0_35, %c0_36, %c0_37] : memref<2x1x96xf32, #tpu.memory_space<vmem>>, vector<1x1x96xf32>
    %55 = vector.shape_cast %54 : vector<1x1x96xf32> to vector<1x96xf32>
    %c0_38 = arith.constant 0 : index
    %c0_39 = arith.constant 0 : index
    %c0_40 = arith.constant 0 : index
    %56 = vector.load %arg7[%c0_38, %c0_39, %c0_40] : memref<2x32x32xf32, #tpu.memory_space<vmem>>, vector<1x32x32xf32>
    %57 = vector.shape_cast %56 : vector<1x32x32xf32> to vector<32x32xf32>
    %c0_41 = arith.constant 0 : index
    %c0_42 = arith.constant 0 : index
    %c0_43 = arith.constant 0 : index
    %58 = vector.load %arg8[%c0_41, %c0_42, %c0_43] : memref<2x1x32xf32, #tpu.memory_space<vmem>>, vector<1x1x32xf32>
    %59 = vector.shape_cast %58 : vector<1x1x32xf32> to vector<1x32xf32>
    %c0_44 = arith.constant 0 : index
    %c0_45 = arith.constant 0 : index
    %c0_46 = arith.constant 0 : index
    %60 = vector.load %arg11[%c0_44, %c0_45, %c0_46] : memref<2x32x64xf32, #tpu.memory_space<vmem>>, vector<1x32x64xf32>
    %61 = vector.shape_cast %60 : vector<1x32x64xf32> to vector<32x64xf32>
    %c0_47 = arith.constant 0 : index
    %c0_48 = arith.constant 0 : index
    %c0_49 = arith.constant 0 : index
    %62 = vector.load %arg12[%c0_47, %c0_48, %c0_49] : memref<2x1x64xf32, #tpu.memory_space<vmem>>, vector<1x1x64xf32>
    %63 = vector.shape_cast %62 : vector<1x1x64xf32> to vector<1x64xf32>
    %c0_50 = arith.constant 0 : index
    %c0_51 = arith.constant 0 : index
    %c0_52 = arith.constant 0 : index
    %64 = vector.load %arg13[%c0_50, %c0_51, %c0_52] : memref<2x64x32xf32, #tpu.memory_space<vmem>>, vector<1x64x32xf32>
    %65 = vector.shape_cast %64 : vector<1x64x32xf32> to vector<64x32xf32>
    %c0_53 = arith.constant 0 : index
    %c0_54 = arith.constant 0 : index
    %c0_55 = arith.constant 0 : index
    %66 = vector.load %arg14[%c0_53, %c0_54, %c0_55] : memref<2x1x32xf32, #tpu.memory_space<vmem>>, vector<1x1x32xf32>
    %67 = vector.shape_cast %66 : vector<1x1x32xf32> to vector<1x32xf32>
    %c0_56 = arith.constant 0 : index
    %c0_57 = arith.constant 0 : index
    %c0_58 = arith.constant 0 : index
    %68 = vector.load %arg15[%c0_56, %c0_57, %c0_58] : memref<2x3x32xf32, #tpu.memory_space<vmem>>, vector<1x3x32xf32>
    %69 = vector.shape_cast %68 : vector<1x3x32xf32> to vector<3x32xf32>
    %c0_59 = arith.constant 0 : index
    %c0_60 = arith.constant 0 : index
    %c0_61 = arith.constant 0 : index
    %70 = vector.load %arg16[%c0_59, %c0_60, %c0_61] : memref<2x3x32xf32, #tpu.memory_space<vmem>>, vector<1x3x32xf32>
    %71 = vector.shape_cast %70 : vector<1x3x32xf32> to vector<3x32xf32>
    %cst_62 = arith.constant dense<0.000000e+00> : vector<16x96xf32>
    %72 = tpu.matmul %51, %53, %cst_62 {dimension_numbers = #tpu.dot_dimension_numbers<[1], [0], [0], [1], [0, 0, 1, 1], [], []>} : vector<16x32xf32>, vector<32x96xf32>, vector<16x96xf32> -> vector<16x96xf32>
    %73 = vector.broadcast %55 : vector<1x96xf32> to vector<16x96xf32>
    %74 = arith.addf %72, %73 : vector<16x96xf32>
    %75 = vector.extract_strided_slice %74 {offsets = [0, 0], sizes = [16, 32], strides = [1, 1]} : vector<16x96xf32> to vector<16x32xf32>
    %76 = vector.extract_strided_slice %74 {offsets = [0, 32], sizes = [16, 32], strides = [1, 1]} : vector<16x96xf32> to vector<16x32xf32>
    %77 = vector.extract_strided_slice %74 {offsets = [0, 64], sizes = [16, 32], strides = [1, 1]} : vector<16x96xf32> to vector<16x32xf32>
    %cst_63 = arith.constant 0.000000e+00 : f32
    %78 = vector.broadcast %cst_63 : f32 to vector<8x32xf32>
    %79 = vector.extract_strided_slice %75 {offsets = [0, 0], sizes = [8, 8], strides = [1, 1]} : vector<16x32xf32> to vector<8x8xf32>
    %80 = vector.extract_strided_slice %76 {offsets = [0, 0], sizes = [8, 8], strides = [1, 1]} : vector<16x32xf32> to vector<8x8xf32>
    %cst_64 = arith.constant dense<0.000000e+00> : vector<8x8xf32>
    %81 = tpu.matmul %79, %80, %cst_64 {dimension_numbers = #tpu.dot_dimension_numbers<[1], [1], [0], [0], [0, 0, 1, 0], [], []>} : vector<8x8xf32>, vector<8x8xf32>, vector<8x8xf32> -> vector<8x8xf32>
    %cst_65 = arith.constant 0xFF800000 : f32
    %82 = vector.broadcast %cst_65 : f32 to vector<8x8xf32>
    %83 = arith.select %49, %81, %82 : vector<8x8xi1>, vector<8x8xf32>
    %cst_66 = arith.constant dense<0xFF800000> : vector<8xf32>
    %84 = vector.multi_reduction <maximumf>, %83, %cst_66 [1] : vector<8x8xf32> to vector<8xf32>
    %85 = vector.shape_cast %84 : vector<8xf32> to vector<8x1xf32>
    %86 = vector.broadcast %85 : vector<8x1xf32> to vector<8x8xf32>
    %87 = arith.subf %83, %86 : vector<8x8xf32>
    %88 = math.exp %87 : vector<8x8xf32>
    %cst_67 = arith.constant dense<0.000000e+00> : vector<8xf32>
    %89 = vector.multi_reduction <add>, %88, %cst_67 [1] : vector<8x8xf32> to vector<8xf32>
    %90 = vector.shape_cast %89 : vector<8xf32> to vector<8x1xf32>
    %91 = tpu.reciprocal %90 {approx = true} : vector<8x1xf32> -> vector<8x1xf32>
    %92 = vector.broadcast %91 : vector<8x1xf32> to vector<8x8xf32>
    %93 = arith.mulf %88, %92 : vector<8x8xf32>
    %94 = vector.extract_strided_slice %77 {offsets = [0, 0], sizes = [8, 8], strides = [1, 1]} : vector<16x32xf32> to vector<8x8xf32>
    %cst_68 = arith.constant dense<0.000000e+00> : vector<8x8xf32>
    %95 = tpu.matmul %93, %94, %cst_68 {dimension_numbers = #tpu.dot_dimension_numbers<[1], [0], [0], [1], [0, 0, 1, 1], [], []>} : vector<8x8xf32>, vector<8x8xf32>, vector<8x8xf32> -> vector<8x8xf32>
    %96 = vector.extract_strided_slice %57 {offsets = [0, 0], sizes = [8, 32], strides = [1, 1]} : vector<32x32xf32> to vector<8x32xf32>
    %cst_69 = arith.constant dense<0.000000e+00> : vector<8x32xf32>
    %97 = tpu.matmul %95, %96, %cst_69 {dimension_numbers = #tpu.dot_dimension_numbers<[1], [0], [0], [1], [0, 0, 1, 1], [], []>} : vector<8x8xf32>, vector<8x32xf32>, vector<8x32xf32> -> vector<8x32xf32>
    %98 = arith.addf %78, %97 : vector<8x32xf32>
    %99 = vector.extract_strided_slice %75 {offsets = [0, 8], sizes = [8, 8], strides = [1, 1]} : vector<16x32xf32> to vector<8x8xf32>
    %100 = vector.extract_strided_slice %76 {offsets = [0, 8], sizes = [8, 8], strides = [1, 1]} : vector<16x32xf32> to vector<8x8xf32>
    %cst_70 = arith.constant dense<0.000000e+00> : vector<8x8xf32>
    %101 = tpu.matmul %99, %100, %cst_70 {dimension_numbers = #tpu.dot_dimension_numbers<[1], [1], [0], [0], [0, 0, 1, 0], [], []>} : vector<8x8xf32>, vector<8x8xf32>, vector<8x8xf32> -> vector<8x8xf32>
    %cst_71 = arith.constant 0xFF800000 : f32
    %102 = vector.broadcast %cst_71 : f32 to vector<8x8xf32>
    %103 = arith.select %49, %101, %102 : vector<8x8xi1>, vector<8x8xf32>
    %cst_72 = arith.constant dense<0xFF800000> : vector<8xf32>
    %104 = vector.multi_reduction <maximumf>, %103, %cst_72 [1] : vector<8x8xf32> to vector<8xf32>
    %105 = vector.shape_cast %104 : vector<8xf32> to vector<8x1xf32>
    %106 = vector.broadcast %105 : vector<8x1xf32> to vector<8x8xf32>
    %107 = arith.subf %103, %106 : vector<8x8xf32>
    %108 = math.exp %107 : vector<8x8xf32>
    %cst_73 = arith.constant dense<0.000000e+00> : vector<8xf32>
    %109 = vector.multi_reduction <add>, %108, %cst_73 [1] : vector<8x8xf32> to vector<8xf32>
    %110 = vector.shape_cast %109 : vector<8xf32> to vector<8x1xf32>
    %111 = tpu.reciprocal %110 {approx = true} : vector<8x1xf32> -> vector<8x1xf32>
    %112 = vector.broadcast %111 : vector<8x1xf32> to vector<8x8xf32>
    %113 = arith.mulf %108, %112 : vector<8x8xf32>
    %114 = vector.extract_strided_slice %77 {offsets = [0, 8], sizes = [8, 8], strides = [1, 1]} : vector<16x32xf32> to vector<8x8xf32>
    %cst_74 = arith.constant dense<0.000000e+00> : vector<8x8xf32>
    %115 = tpu.matmul %113, %114, %cst_74 {dimension_numbers = #tpu.dot_dimension_numbers<[1], [0], [0], [1], [0, 0, 1, 1], [], []>} : vector<8x8xf32>, vector<8x8xf32>, vector<8x8xf32> -> vector<8x8xf32>
    %116 = vector.extract_strided_slice %57 {offsets = [8, 0], sizes = [8, 32], strides = [1, 1]} : vector<32x32xf32> to vector<8x32xf32>
    %cst_75 = arith.constant dense<0.000000e+00> : vector<8x32xf32>
    %117 = tpu.matmul %115, %116, %cst_75 {dimension_numbers = #tpu.dot_dimension_numbers<[1], [0], [0], [1], [0, 0, 1, 1], [], []>} : vector<8x8xf32>, vector<8x32xf32>, vector<8x32xf32> -> vector<8x32xf32>
    %118 = arith.addf %98, %117 : vector<8x32xf32>
    %119 = vector.extract_strided_slice %75 {offsets = [0, 16], sizes = [8, 8], strides = [1, 1]} : vector<16x32xf32> to vector<8x8xf32>
    %120 = vector.extract_strided_slice %76 {offsets = [0, 16], sizes = [8, 8], strides = [1, 1]} : vector<16x32xf32> to vector<8x8xf32>
    %cst_76 = arith.constant dense<0.000000e+00> : vector<8x8xf32>
    %121 = tpu.matmul %119, %120, %cst_76 {dimension_numbers = #tpu.dot_dimension_numbers<[1], [1], [0], [0], [0, 0, 1, 0], [], []>} : vector<8x8xf32>, vector<8x8xf32>, vector<8x8xf32> -> vector<8x8xf32>
    %cst_77 = arith.constant 0xFF800000 : f32
    %122 = vector.broadcast %cst_77 : f32 to vector<8x8xf32>
    %123 = arith.select %49, %121, %122 : vector<8x8xi1>, vector<8x8xf32>
    %cst_78 = arith.constant dense<0xFF800000> : vector<8xf32>
    %124 = vector.multi_reduction <maximumf>, %123, %cst_78 [1] : vector<8x8xf32> to vector<8xf32>
    %125 = vector.shape_cast %124 : vector<8xf32> to vector<8x1xf32>
    %126 = vector.broadcast %125 : vector<8x1xf32> to vector<8x8xf32>
    %127 = arith.subf %123, %126 : vector<8x8xf32>
    %128 = math.exp %127 : vector<8x8xf32>
    %cst_79 = arith.constant dense<0.000000e+00> : vector<8xf32>
    %129 = vector.multi_reduction <add>, %128, %cst_79 [1] : vector<8x8xf32> to vector<8xf32>
    %130 = vector.shape_cast %129 : vector<8xf32> to vector<8x1xf32>
    %131 = tpu.reciprocal %130 {approx = true} : vector<8x1xf32> -> vector<8x1xf32>
    %132 = vector.broadcast %131 : vector<8x1xf32> to vector<8x8xf32>
    %133 = arith.mulf %128, %132 : vector<8x8xf32>
    %134 = vector.extract_strided_slice %77 {offsets = [0, 16], sizes = [8, 8], strides = [1, 1]} : vector<16x32xf32> to vector<8x8xf32>
    %cst_80 = arith.constant dense<0.000000e+00> : vector<8x8xf32>
    %135 = tpu.matmul %133, %134, %cst_80 {dimension_numbers = #tpu.dot_dimension_numbers<[1], [0], [0], [1], [0, 0, 1, 1], [], []>} : vector<8x8xf32>, vector<8x8xf32>, vector<8x8xf32> -> vector<8x8xf32>
    %136 = vector.extract_strided_slice %57 {offsets = [16, 0], sizes = [8, 32], strides = [1, 1]} : vector<32x32xf32> to vector<8x32xf32>
    %cst_81 = arith.constant dense<0.000000e+00> : vector<8x32xf32>
    %137 = tpu.matmul %135, %136, %cst_81 {dimension_numbers = #tpu.dot_dimension_numbers<[1], [0], [0], [1], [0, 0, 1, 1], [], []>} : vector<8x8xf32>, vector<8x32xf32>, vector<8x32xf32> -> vector<8x32xf32>
    %138 = arith.addf %118, %137 : vector<8x32xf32>
    %139 = vector.extract_strided_slice %75 {offsets = [0, 24], sizes = [8, 8], strides = [1, 1]} : vector<16x32xf32> to vector<8x8xf32>
    %140 = vector.extract_strided_slice %76 {offsets = [0, 24], sizes = [8, 8], strides = [1, 1]} : vector<16x32xf32> to vector<8x8xf32>
    %cst_82 = arith.constant dense<0.000000e+00> : vector<8x8xf32>
    %141 = tpu.matmul %139, %140, %cst_82 {dimension_numbers = #tpu.dot_dimension_numbers<[1], [1], [0], [0], [0, 0, 1, 0], [], []>} : vector<8x8xf32>, vector<8x8xf32>, vector<8x8xf32> -> vector<8x8xf32>
    %cst_83 = arith.constant 0xFF800000 : f32
    %142 = vector.broadcast %cst_83 : f32 to vector<8x8xf32>
    %143 = arith.select %49, %141, %142 : vector<8x8xi1>, vector<8x8xf32>
    %cst_84 = arith.constant dense<0xFF800000> : vector<8xf32>
    %144 = vector.multi_reduction <maximumf>, %143, %cst_84 [1] : vector<8x8xf32> to vector<8xf32>
    %145 = vector.shape_cast %144 : vector<8xf32> to vector<8x1xf32>
    %146 = vector.broadcast %145 : vector<8x1xf32> to vector<8x8xf32>
    %147 = arith.subf %143, %146 : vector<8x8xf32>
    %148 = math.exp %147 : vector<8x8xf32>
    %cst_85 = arith.constant dense<0.000000e+00> : vector<8xf32>
    %149 = vector.multi_reduction <add>, %148, %cst_85 [1] : vector<8x8xf32> to vector<8xf32>
    %150 = vector.shape_cast %149 : vector<8xf32> to vector<8x1xf32>
    %151 = tpu.reciprocal %150 {approx = true} : vector<8x1xf32> -> vector<8x1xf32>
    %152 = vector.broadcast %151 : vector<8x1xf32> to vector<8x8xf32>
    %153 = arith.mulf %148, %152 : vector<8x8xf32>
    %154 = vector.extract_strided_slice %77 {offsets = [0, 24], sizes = [8, 8], strides = [1, 1]} : vector<16x32xf32> to vector<8x8xf32>
    %cst_86 = arith.constant dense<0.000000e+00> : vector<8x8xf32>
    %155 = tpu.matmul %153, %154, %cst_86 {dimension_numbers = #tpu.dot_dimension_numbers<[1], [0], [0], [1], [0, 0, 1, 1], [], []>} : vector<8x8xf32>, vector<8x8xf32>, vector<8x8xf32> -> vector<8x8xf32>
    %156 = vector.extract_strided_slice %57 {offsets = [24, 0], sizes = [8, 32], strides = [1, 1]} : vector<32x32xf32> to vector<8x32xf32>
    %cst_87 = arith.constant dense<0.000000e+00> : vector<8x32xf32>
    %157 = tpu.matmul %155, %156, %cst_87 {dimension_numbers = #tpu.dot_dimension_numbers<[1], [0], [0], [1], [0, 0, 1, 1], [], []>} : vector<8x8xf32>, vector<8x32xf32>, vector<8x32xf32> -> vector<8x32xf32>
    %158 = arith.addf %138, %157 : vector<8x32xf32>
    %cst_88 = arith.constant 0.000000e+00 : f32
    %159 = vector.broadcast %cst_88 : f32 to vector<8x32xf32>
    %160 = vector.extract_strided_slice %75 {offsets = [8, 0], sizes = [8, 8], strides = [1, 1]} : vector<16x32xf32> to vector<8x8xf32>
    %161 = vector.extract_strided_slice %76 {offsets = [8, 0], sizes = [8, 8], strides = [1, 1]} : vector<16x32xf32> to vector<8x8xf32>
    %cst_89 = arith.constant dense<0.000000e+00> : vector<8x8xf32>
    %162 = tpu.matmul %160, %161, %cst_89 {dimension_numbers = #tpu.dot_dimension_numbers<[1], [1], [0], [0], [0, 0, 1, 0], [], []>} : vector<8x8xf32>, vector<8x8xf32>, vector<8x8xf32> -> vector<8x8xf32>
    %cst_90 = arith.constant 0xFF800000 : f32
    %163 = vector.broadcast %cst_90 : f32 to vector<8x8xf32>
    %164 = arith.select %49, %162, %163 : vector<8x8xi1>, vector<8x8xf32>
    %cst_91 = arith.constant dense<0xFF800000> : vector<8xf32>
    %165 = vector.multi_reduction <maximumf>, %164, %cst_91 [1] : vector<8x8xf32> to vector<8xf32>
    %166 = vector.shape_cast %165 : vector<8xf32> to vector<8x1xf32>
    %167 = vector.broadcast %166 : vector<8x1xf32> to vector<8x8xf32>
    %168 = arith.subf %164, %167 : vector<8x8xf32>
    %169 = math.exp %168 : vector<8x8xf32>
    %cst_92 = arith.constant dense<0.000000e+00> : vector<8xf32>
    %170 = vector.multi_reduction <add>, %169, %cst_92 [1] : vector<8x8xf32> to vector<8xf32>
    %171 = vector.shape_cast %170 : vector<8xf32> to vector<8x1xf32>
    %172 = tpu.reciprocal %171 {approx = true} : vector<8x1xf32> -> vector<8x1xf32>
    %173 = vector.broadcast %172 : vector<8x1xf32> to vector<8x8xf32>
    %174 = arith.mulf %169, %173 : vector<8x8xf32>
    %175 = vector.extract_strided_slice %77 {offsets = [8, 0], sizes = [8, 8], strides = [1, 1]} : vector<16x32xf32> to vector<8x8xf32>
    %cst_93 = arith.constant dense<0.000000e+00> : vector<8x8xf32>
    %176 = tpu.matmul %174, %175, %cst_93 {dimension_numbers = #tpu.dot_dimension_numbers<[1], [0], [0], [1], [0, 0, 1, 1], [], []>} : vector<8x8xf32>, vector<8x8xf32>, vector<8x8xf32> -> vector<8x8xf32>
    %177 = vector.extract_strided_slice %57 {offsets = [0, 0], sizes = [8, 32], strides = [1, 1]} : vector<32x32xf32> to vector<8x32xf32>
    %cst_94 = arith.constant dense<0.000000e+00> : vector<8x32xf32>
    %178 = tpu.matmul %176, %177, %cst_94 {dimension_numbers = #tpu.dot_dimension_numbers<[1], [0], [0], [1], [0, 0, 1, 1], [], []>} : vector<8x8xf32>, vector<8x32xf32>, vector<8x32xf32> -> vector<8x32xf32>
    %179 = arith.addf %159, %178 : vector<8x32xf32>
    %180 = vector.extract_strided_slice %75 {offsets = [8, 8], sizes = [8, 8], strides = [1, 1]} : vector<16x32xf32> to vector<8x8xf32>
    %181 = vector.extract_strided_slice %76 {offsets = [8, 8], sizes = [8, 8], strides = [1, 1]} : vector<16x32xf32> to vector<8x8xf32>
    %cst_95 = arith.constant dense<0.000000e+00> : vector<8x8xf32>
    %182 = tpu.matmul %180, %181, %cst_95 {dimension_numbers = #tpu.dot_dimension_numbers<[1], [1], [0], [0], [0, 0, 1, 0], [], []>} : vector<8x8xf32>, vector<8x8xf32>, vector<8x8xf32> -> vector<8x8xf32>
    %cst_96 = arith.constant 0xFF800000 : f32
    %183 = vector.broadcast %cst_96 : f32 to vector<8x8xf32>
    %184 = arith.select %49, %182, %183 : vector<8x8xi1>, vector<8x8xf32>
    %cst_97 = arith.constant dense<0xFF800000> : vector<8xf32>
    %185 = vector.multi_reduction <maximumf>, %184, %cst_97 [1] : vector<8x8xf32> to vector<8xf32>
    %186 = vector.shape_cast %185 : vector<8xf32> to vector<8x1xf32>
    %187 = vector.broadcast %186 : vector<8x1xf32> to vector<8x8xf32>
    %188 = arith.subf %184, %187 : vector<8x8xf32>
    %189 = math.exp %188 : vector<8x8xf32>
    %cst_98 = arith.constant dense<0.000000e+00> : vector<8xf32>
    %190 = vector.multi_reduction <add>, %189, %cst_98 [1] : vector<8x8xf32> to vector<8xf32>
    %191 = vector.shape_cast %190 : vector<8xf32> to vector<8x1xf32>
    %192 = tpu.reciprocal %191 {approx = true} : vector<8x1xf32> -> vector<8x1xf32>
    %193 = vector.broadcast %192 : vector<8x1xf32> to vector<8x8xf32>
    %194 = arith.mulf %189, %193 : vector<8x8xf32>
    %195 = vector.extract_strided_slice %77 {offsets = [8, 8], sizes = [8, 8], strides = [1, 1]} : vector<16x32xf32> to vector<8x8xf32>
    %cst_99 = arith.constant dense<0.000000e+00> : vector<8x8xf32>
    %196 = tpu.matmul %194, %195, %cst_99 {dimension_numbers = #tpu.dot_dimension_numbers<[1], [0], [0], [1], [0, 0, 1, 1], [], []>} : vector<8x8xf32>, vector<8x8xf32>, vector<8x8xf32> -> vector<8x8xf32>
    %197 = vector.extract_strided_slice %57 {offsets = [8, 0], sizes = [8, 32], strides = [1, 1]} : vector<32x32xf32> to vector<8x32xf32>
    %cst_100 = arith.constant dense<0.000000e+00> : vector<8x32xf32>
    %198 = tpu.matmul %196, %197, %cst_100 {dimension_numbers = #tpu.dot_dimension_numbers<[1], [0], [0], [1], [0, 0, 1, 1], [], []>} : vector<8x8xf32>, vector<8x32xf32>, vector<8x32xf32> -> vector<8x32xf32>
    %199 = arith.addf %179, %198 : vector<8x32xf32>
    %200 = vector.extract_strided_slice %75 {offsets = [8, 16], sizes = [8, 8], strides = [1, 1]} : vector<16x32xf32> to vector<8x8xf32>
    %201 = vector.extract_strided_slice %76 {offsets = [8, 16], sizes = [8, 8], strides = [1, 1]} : vector<16x32xf32> to vector<8x8xf32>
    %cst_101 = arith.constant dense<0.000000e+00> : vector<8x8xf32>
    %202 = tpu.matmul %200, %201, %cst_101 {dimension_numbers = #tpu.dot_dimension_numbers<[1], [1], [0], [0], [0, 0, 1, 0], [], []>} : vector<8x8xf32>, vector<8x8xf32>, vector<8x8xf32> -> vector<8x8xf32>
    %cst_102 = arith.constant 0xFF800000 : f32
    %203 = vector.broadcast %cst_102 : f32 to vector<8x8xf32>
    %204 = arith.select %49, %202, %203 : vector<8x8xi1>, vector<8x8xf32>
    %cst_103 = arith.constant dense<0xFF800000> : vector<8xf32>
    %205 = vector.multi_reduction <maximumf>, %204, %cst_103 [1] : vector<8x8xf32> to vector<8xf32>
    %206 = vector.shape_cast %205 : vector<8xf32> to vector<8x1xf32>
    %207 = vector.broadcast %206 : vector<8x1xf32> to vector<8x8xf32>
    %208 = arith.subf %204, %207 : vector<8x8xf32>
    %209 = math.exp %208 : vector<8x8xf32>
    %cst_104 = arith.constant dense<0.000000e+00> : vector<8xf32>
    %210 = vector.multi_reduction <add>, %209, %cst_104 [1] : vector<8x8xf32> to vector<8xf32>
    %211 = vector.shape_cast %210 : vector<8xf32> to vector<8x1xf32>
    %212 = tpu.reciprocal %211 {approx = true} : vector<8x1xf32> -> vector<8x1xf32>
    %213 = vector.broadcast %212 : vector<8x1xf32> to vector<8x8xf32>
    %214 = arith.mulf %209, %213 : vector<8x8xf32>
    %215 = vector.extract_strided_slice %77 {offsets = [8, 16], sizes = [8, 8], strides = [1, 1]} : vector<16x32xf32> to vector<8x8xf32>
    %cst_105 = arith.constant dense<0.000000e+00> : vector<8x8xf32>
    %216 = tpu.matmul %214, %215, %cst_105 {dimension_numbers = #tpu.dot_dimension_numbers<[1], [0], [0], [1], [0, 0, 1, 1], [], []>} : vector<8x8xf32>, vector<8x8xf32>, vector<8x8xf32> -> vector<8x8xf32>
    %217 = vector.extract_strided_slice %57 {offsets = [16, 0], sizes = [8, 32], strides = [1, 1]} : vector<32x32xf32> to vector<8x32xf32>
    %cst_106 = arith.constant dense<0.000000e+00> : vector<8x32xf32>
    %218 = tpu.matmul %216, %217, %cst_106 {dimension_numbers = #tpu.dot_dimension_numbers<[1], [0], [0], [1], [0, 0, 1, 1], [], []>} : vector<8x8xf32>, vector<8x32xf32>, vector<8x32xf32> -> vector<8x32xf32>
    %219 = arith.addf %199, %218 : vector<8x32xf32>
    %220 = vector.extract_strided_slice %75 {offsets = [8, 24], sizes = [8, 8], strides = [1, 1]} : vector<16x32xf32> to vector<8x8xf32>
    %221 = vector.extract_strided_slice %76 {offsets = [8, 24], sizes = [8, 8], strides = [1, 1]} : vector<16x32xf32> to vector<8x8xf32>
    %cst_107 = arith.constant dense<0.000000e+00> : vector<8x8xf32>
    %222 = tpu.matmul %220, %221, %cst_107 {dimension_numbers = #tpu.dot_dimension_numbers<[1], [1], [0], [0], [0, 0, 1, 0], [], []>} : vector<8x8xf32>, vector<8x8xf32>, vector<8x8xf32> -> vector<8x8xf32>
    %cst_108 = arith.constant 0xFF800000 : f32
    %223 = vector.broadcast %cst_108 : f32 to vector<8x8xf32>
    %224 = arith.select %49, %222, %223 : vector<8x8xi1>, vector<8x8xf32>
    %cst_109 = arith.constant dense<0xFF800000> : vector<8xf32>
    %225 = vector.multi_reduction <maximumf>, %224, %cst_109 [1] : vector<8x8xf32> to vector<8xf32>
    %226 = vector.shape_cast %225 : vector<8xf32> to vector<8x1xf32>
    %227 = vector.broadcast %226 : vector<8x1xf32> to vector<8x8xf32>
    %228 = arith.subf %224, %227 : vector<8x8xf32>
    %229 = math.exp %228 : vector<8x8xf32>
    %cst_110 = arith.constant dense<0.000000e+00> : vector<8xf32>
    %230 = vector.multi_reduction <add>, %229, %cst_110 [1] : vector<8x8xf32> to vector<8xf32>
    %231 = vector.shape_cast %230 : vector<8xf32> to vector<8x1xf32>
    %232 = tpu.reciprocal %231 {approx = true} : vector<8x1xf32> -> vector<8x1xf32>
    %233 = vector.broadcast %232 : vector<8x1xf32> to vector<8x8xf32>
    %234 = arith.mulf %229, %233 : vector<8x8xf32>
    %235 = vector.extract_strided_slice %77 {offsets = [8, 24], sizes = [8, 8], strides = [1, 1]} : vector<16x32xf32> to vector<8x8xf32>
    %cst_111 = arith.constant dense<0.000000e+00> : vector<8x8xf32>
    %236 = tpu.matmul %234, %235, %cst_111 {dimension_numbers = #tpu.dot_dimension_numbers<[1], [0], [0], [1], [0, 0, 1, 1], [], []>} : vector<8x8xf32>, vector<8x8xf32>, vector<8x8xf32> -> vector<8x8xf32>
    %237 = vector.extract_strided_slice %57 {offsets = [24, 0], sizes = [8, 32], strides = [1, 1]} : vector<32x32xf32> to vector<8x32xf32>
    %cst_112 = arith.constant dense<0.000000e+00> : vector<8x32xf32>
    %238 = tpu.matmul %236, %237, %cst_112 {dimension_numbers = #tpu.dot_dimension_numbers<[1], [0], [0], [1], [0, 0, 1, 1], [], []>} : vector<8x8xf32>, vector<8x32xf32>, vector<8x32xf32> -> vector<8x32xf32>
    %239 = arith.addf %219, %238 : vector<8x32xf32>
    %240 = tpu.concatenate %158, %239 in 0 : vector<8x32xf32>, vector<8x32xf32> -> vector<16x32xf32>
    %241 = vector.broadcast %59 : vector<1x32xf32> to vector<16x32xf32>
    %242 = arith.addf %240, %241 : vector<16x32xf32>
    %243 = arith.addf %51, %242 : vector<16x32xf32>
    %244 = vector.extract_strided_slice %69 {offsets = [0, 0], sizes = [1, 32], strides = [1, 1]} : vector<3x32xf32> to vector<1x32xf32>
    %245 = vector.extract_strided_slice %71 {offsets = [0, 0], sizes = [1, 32], strides = [1, 1]} : vector<3x32xf32> to vector<1x32xf32>
    %cst_113 = arith.constant dense<0.000000e+00> : vector<16xf32>
    %246 = vector.multi_reduction <add>, %243, %cst_113 [1] : vector<16x32xf32> to vector<16xf32>
    %247 = vector.shape_cast %246 : vector<16xf32> to vector<16x1xf32>
    %cst_114 = arith.constant 3.200000e+01 : f32
    %248 = vector.broadcast %cst_114 : f32 to vector<16x1xf32>
    %249 = arith.divf %247, %248 : vector<16x1xf32>
    %250 = vector.broadcast %249 : vector<16x1xf32> to vector<16x32xf32>
    %251 = arith.subf %243, %250 : vector<16x32xf32>
    %252 = arith.mulf %251, %251 : vector<16x32xf32>
    %cst_115 = arith.constant dense<0.000000e+00> : vector<16xf32>
    %253 = vector.multi_reduction <add>, %252, %cst_115 [1] : vector<16x32xf32> to vector<16xf32>
    %254 = vector.shape_cast %253 : vector<16xf32> to vector<16x1xf32>
    %cst_116 = arith.constant 3.200000e+01 : f32
    %255 = vector.broadcast %cst_116 : f32 to vector<16x1xf32>
    %256 = arith.divf %254, %255 : vector<16x1xf32>
    %257 = vector.broadcast %249 : vector<16x1xf32> to vector<16x32xf32>
    %258 = arith.subf %243, %257 : vector<16x32xf32>
    %cst_117 = arith.constant 9.99999974E-6 : f32
    %259 = vector.broadcast %cst_117 : f32 to vector<16x1xf32>
    %260 = arith.addf %256, %259 : vector<16x1xf32>
    %261 = math.rsqrt %260 : vector<16x1xf32>
    %262 = vector.broadcast %261 : vector<16x1xf32> to vector<16x32xf32>
    %263 = arith.mulf %258, %262 : vector<16x32xf32>
    %264 = vector.broadcast %244 : vector<1x32xf32> to vector<16x32xf32>
    %265 = arith.mulf %263, %264 : vector<16x32xf32>
    %266 = vector.broadcast %245 : vector<1x32xf32> to vector<16x32xf32>
    %267 = arith.addf %265, %266 : vector<16x32xf32>
    %268 = arith.addf %267, %39 : vector<16x32xf32>
    %269 = vector.extract_strided_slice %69 {offsets = [1, 0], sizes = [1, 32], strides = [1, 1]} : vector<3x32xf32> to vector<1x32xf32>
    %270 = vector.extract_strided_slice %71 {offsets = [1, 0], sizes = [1, 32], strides = [1, 1]} : vector<3x32xf32> to vector<1x32xf32>
    %cst_118 = arith.constant dense<0.000000e+00> : vector<16xf32>
    %271 = vector.multi_reduction <add>, %268, %cst_118 [1] : vector<16x32xf32> to vector<16xf32>
    %272 = vector.shape_cast %271 : vector<16xf32> to vector<16x1xf32>
    %cst_119 = arith.constant 3.200000e+01 : f32
    %273 = vector.broadcast %cst_119 : f32 to vector<16x1xf32>
    %274 = arith.divf %272, %273 : vector<16x1xf32>
    %275 = vector.broadcast %274 : vector<16x1xf32> to vector<16x32xf32>
    %276 = arith.subf %268, %275 : vector<16x32xf32>
    %277 = arith.mulf %276, %276 : vector<16x32xf32>
    %cst_120 = arith.constant dense<0.000000e+00> : vector<16xf32>
    %278 = vector.multi_reduction <add>, %277, %cst_120 [1] : vector<16x32xf32> to vector<16xf32>
    %279 = vector.shape_cast %278 : vector<16xf32> to vector<16x1xf32>
    %cst_121 = arith.constant 3.200000e+01 : f32
    %280 = vector.broadcast %cst_121 : f32 to vector<16x1xf32>
    %281 = arith.divf %279, %280 : vector<16x1xf32>
    %282 = vector.broadcast %274 : vector<16x1xf32> to vector<16x32xf32>
    %283 = arith.subf %268, %282 : vector<16x32xf32>
    %cst_122 = arith.constant 9.99999974E-6 : f32
    %284 = vector.broadcast %cst_122 : f32 to vector<16x1xf32>
    %285 = arith.addf %281, %284 : vector<16x1xf32>
    %286 = math.rsqrt %285 : vector<16x1xf32>
    %287 = vector.broadcast %286 : vector<16x1xf32> to vector<16x32xf32>
    %288 = arith.mulf %283, %287 : vector<16x32xf32>
    %289 = vector.broadcast %269 : vector<1x32xf32> to vector<16x32xf32>
    %290 = arith.mulf %288, %289 : vector<16x32xf32>
    %291 = vector.broadcast %270 : vector<1x32xf32> to vector<16x32xf32>
    %292 = arith.addf %290, %291 : vector<16x32xf32>
    %cst_123 = arith.constant dense<0.000000e+00> : vector<16x64xf32>
    %293 = tpu.matmul %292, %61, %cst_123 {dimension_numbers = #tpu.dot_dimension_numbers<[1], [0], [0], [1], [0, 0, 1, 1], [], []>} : vector<16x32xf32>, vector<32x64xf32>, vector<16x64xf32> -> vector<16x64xf32>
    %294 = vector.broadcast %63 : vector<1x64xf32> to vector<16x64xf32>
    %295 = arith.addf %293, %294 : vector<16x64xf32>
    %cst_124 = arith.constant 0.000000e+00 : f32
    %296 = vector.broadcast %cst_124 : f32 to vector<16x64xf32>
    %297 = arith.maximumf %295, %296 : vector<16x64xf32>
    %cst_125 = arith.constant dense<0.000000e+00> : vector<16x32xf32>
    %298 = tpu.matmul %297, %65, %cst_125 {dimension_numbers = #tpu.dot_dimension_numbers<[1], [0], [0], [1], [0, 0, 1, 1], [], []>} : vector<16x64xf32>, vector<64x32xf32>, vector<16x32xf32> -> vector<16x32xf32>
    %299 = vector.broadcast %67 : vector<1x32xf32> to vector<16x32xf32>
    %300 = arith.addf %298, %299 : vector<16x32xf32>
    %301 = arith.addf %292, %300 : vector<16x32xf32>
    %302 = vector.extract_strided_slice %69 {offsets = [2, 0], sizes = [1, 32], strides = [1, 1]} : vector<3x32xf32> to vector<1x32xf32>
    %303 = vector.extract_strided_slice %71 {offsets = [2, 0], sizes = [1, 32], strides = [1, 1]} : vector<3x32xf32> to vector<1x32xf32>
    %cst_126 = arith.constant dense<0.000000e+00> : vector<16xf32>
    %304 = vector.multi_reduction <add>, %301, %cst_126 [1] : vector<16x32xf32> to vector<16xf32>
    %305 = vector.shape_cast %304 : vector<16xf32> to vector<16x1xf32>
    %cst_127 = arith.constant 3.200000e+01 : f32
    %306 = vector.broadcast %cst_127 : f32 to vector<16x1xf32>
    %307 = arith.divf %305, %306 : vector<16x1xf32>
    %308 = vector.broadcast %307 : vector<16x1xf32> to vector<16x32xf32>
    %309 = arith.subf %301, %308 : vector<16x32xf32>
    %310 = arith.mulf %309, %309 : vector<16x32xf32>
    %cst_128 = arith.constant dense<0.000000e+00> : vector<16xf32>
    %311 = vector.multi_reduction <add>, %310, %cst_128 [1] : vector<16x32xf32> to vector<16xf32>
    %312 = vector.shape_cast %311 : vector<16xf32> to vector<16x1xf32>
    %cst_129 = arith.constant 3.200000e+01 : f32
    %313 = vector.broadcast %cst_129 : f32 to vector<16x1xf32>
    %314 = arith.divf %312, %313 : vector<16x1xf32>
    %315 = vector.broadcast %307 : vector<16x1xf32> to vector<16x32xf32>
    %316 = arith.subf %301, %315 : vector<16x32xf32>
    %cst_130 = arith.constant 9.99999974E-6 : f32
    %317 = vector.broadcast %cst_130 : f32 to vector<16x1xf32>
    %318 = arith.addf %314, %317 : vector<16x1xf32>
    %319 = math.rsqrt %318 : vector<16x1xf32>
    %320 = vector.broadcast %319 : vector<16x1xf32> to vector<16x32xf32>
    %321 = arith.mulf %316, %320 : vector<16x32xf32>
    %322 = vector.broadcast %302 : vector<1x32xf32> to vector<16x32xf32>
    %323 = arith.mulf %321, %322 : vector<16x32xf32>
    %324 = vector.broadcast %303 : vector<1x32xf32> to vector<16x32xf32>
    %325 = arith.addf %323, %324 : vector<16x32xf32>
    %c1_131 = arith.constant 1 : index
    %c0_132 = arith.constant 0 : index
    %c0_133 = arith.constant 0 : index
    %326 = vector.load %arg5[%c1_131, %c0_132, %c0_133] : memref<2x32x96xf32, #tpu.memory_space<vmem>>, vector<1x32x96xf32>
    %327 = vector.shape_cast %326 : vector<1x32x96xf32> to vector<32x96xf32>
    %c1_134 = arith.constant 1 : index
    %c0_135 = arith.constant 0 : index
    %c0_136 = arith.constant 0 : index
    %328 = vector.load %arg6[%c1_134, %c0_135, %c0_136] : memref<2x1x96xf32, #tpu.memory_space<vmem>>, vector<1x1x96xf32>
    %329 = vector.shape_cast %328 : vector<1x1x96xf32> to vector<1x96xf32>
    %c1_137 = arith.constant 1 : index
    %c0_138 = arith.constant 0 : index
    %c0_139 = arith.constant 0 : index
    %330 = vector.load %arg7[%c1_137, %c0_138, %c0_139] : memref<2x32x32xf32, #tpu.memory_space<vmem>>, vector<1x32x32xf32>
    %331 = vector.shape_cast %330 : vector<1x32x32xf32> to vector<32x32xf32>
    %c1_140 = arith.constant 1 : index
    %c0_141 = arith.constant 0 : index
    %c0_142 = arith.constant 0 : index
    %332 = vector.load %arg8[%c1_140, %c0_141, %c0_142] : memref<2x1x32xf32, #tpu.memory_space<vmem>>, vector<1x1x32xf32>
    %333 = vector.shape_cast %332 : vector<1x1x32xf32> to vector<1x32xf32>
    %c1_143 = arith.constant 1 : index
    %c0_144 = arith.constant 0 : index
    %c0_145 = arith.constant 0 : index
    %334 = vector.load %arg11[%c1_143, %c0_144, %c0_145] : memref<2x32x64xf32, #tpu.memory_space<vmem>>, vector<1x32x64xf32>
    %335 = vector.shape_cast %334 : vector<1x32x64xf32> to vector<32x64xf32>
    %c1_146 = arith.constant 1 : index
    %c0_147 = arith.constant 0 : index
    %c0_148 = arith.constant 0 : index
    %336 = vector.load %arg12[%c1_146, %c0_147, %c0_148] : memref<2x1x64xf32, #tpu.memory_space<vmem>>, vector<1x1x64xf32>
    %337 = vector.shape_cast %336 : vector<1x1x64xf32> to vector<1x64xf32>
    %c1_149 = arith.constant 1 : index
    %c0_150 = arith.constant 0 : index
    %c0_151 = arith.constant 0 : index
    %338 = vector.load %arg13[%c1_149, %c0_150, %c0_151] : memref<2x64x32xf32, #tpu.memory_space<vmem>>, vector<1x64x32xf32>
    %339 = vector.shape_cast %338 : vector<1x64x32xf32> to vector<64x32xf32>
    %c1_152 = arith.constant 1 : index
    %c0_153 = arith.constant 0 : index
    %c0_154 = arith.constant 0 : index
    %340 = vector.load %arg14[%c1_152, %c0_153, %c0_154] : memref<2x1x32xf32, #tpu.memory_space<vmem>>, vector<1x1x32xf32>
    %341 = vector.shape_cast %340 : vector<1x1x32xf32> to vector<1x32xf32>
    %c1_155 = arith.constant 1 : index
    %c0_156 = arith.constant 0 : index
    %c0_157 = arith.constant 0 : index
    %342 = vector.load %arg15[%c1_155, %c0_156, %c0_157] : memref<2x3x32xf32, #tpu.memory_space<vmem>>, vector<1x3x32xf32>
    %343 = vector.shape_cast %342 : vector<1x3x32xf32> to vector<3x32xf32>
    %c1_158 = arith.constant 1 : index
    %c0_159 = arith.constant 0 : index
    %c0_160 = arith.constant 0 : index
    %344 = vector.load %arg16[%c1_158, %c0_159, %c0_160] : memref<2x3x32xf32, #tpu.memory_space<vmem>>, vector<1x3x32xf32>
    %345 = vector.shape_cast %344 : vector<1x3x32xf32> to vector<3x32xf32>
    %cst_161 = arith.constant dense<0.000000e+00> : vector<16x96xf32>
    %346 = tpu.matmul %325, %327, %cst_161 {dimension_numbers = #tpu.dot_dimension_numbers<[1], [0], [0], [1], [0, 0, 1, 1], [], []>} : vector<16x32xf32>, vector<32x96xf32>, vector<16x96xf32> -> vector<16x96xf32>
    %347 = vector.broadcast %329 : vector<1x96xf32> to vector<16x96xf32>
    %348 = arith.addf %346, %347 : vector<16x96xf32>
    %349 = vector.extract_strided_slice %348 {offsets = [0, 0], sizes = [16, 32], strides = [1, 1]} : vector<16x96xf32> to vector<16x32xf32>
    %350 = vector.extract_strided_slice %348 {offsets = [0, 32], sizes = [16, 32], strides = [1, 1]} : vector<16x96xf32> to vector<16x32xf32>
    %351 = vector.extract_strided_slice %348 {offsets = [0, 64], sizes = [16, 32], strides = [1, 1]} : vector<16x96xf32> to vector<16x32xf32>
    %cst_162 = arith.constant 0.000000e+00 : f32
    %352 = vector.broadcast %cst_162 : f32 to vector<8x32xf32>
    %353 = vector.extract_strided_slice %349 {offsets = [0, 0], sizes = [8, 8], strides = [1, 1]} : vector<16x32xf32> to vector<8x8xf32>
    %354 = vector.extract_strided_slice %350 {offsets = [0, 0], sizes = [8, 8], strides = [1, 1]} : vector<16x32xf32> to vector<8x8xf32>
    %cst_163 = arith.constant dense<0.000000e+00> : vector<8x8xf32>
    %355 = tpu.matmul %353, %354, %cst_163 {dimension_numbers = #tpu.dot_dimension_numbers<[1], [1], [0], [0], [0, 0, 1, 0], [], []>} : vector<8x8xf32>, vector<8x8xf32>, vector<8x8xf32> -> vector<8x8xf32>
    %cst_164 = arith.constant 0xFF800000 : f32
    %356 = vector.broadcast %cst_164 : f32 to vector<8x8xf32>
    %357 = arith.select %49, %355, %356 : vector<8x8xi1>, vector<8x8xf32>
    %cst_165 = arith.constant dense<0xFF800000> : vector<8xf32>
    %358 = vector.multi_reduction <maximumf>, %357, %cst_165 [1] : vector<8x8xf32> to vector<8xf32>
    %359 = vector.shape_cast %358 : vector<8xf32> to vector<8x1xf32>
    %360 = vector.broadcast %359 : vector<8x1xf32> to vector<8x8xf32>
    %361 = arith.subf %357, %360 : vector<8x8xf32>
    %362 = math.exp %361 : vector<8x8xf32>
    %cst_166 = arith.constant dense<0.000000e+00> : vector<8xf32>
    %363 = vector.multi_reduction <add>, %362, %cst_166 [1] : vector<8x8xf32> to vector<8xf32>
    %364 = vector.shape_cast %363 : vector<8xf32> to vector<8x1xf32>
    %365 = tpu.reciprocal %364 {approx = true} : vector<8x1xf32> -> vector<8x1xf32>
    %366 = vector.broadcast %365 : vector<8x1xf32> to vector<8x8xf32>
    %367 = arith.mulf %362, %366 : vector<8x8xf32>
    %368 = vector.extract_strided_slice %351 {offsets = [0, 0], sizes = [8, 8], strides = [1, 1]} : vector<16x32xf32> to vector<8x8xf32>
    %cst_167 = arith.constant dense<0.000000e+00> : vector<8x8xf32>
    %369 = tpu.matmul %367, %368, %cst_167 {dimension_numbers = #tpu.dot_dimension_numbers<[1], [0], [0], [1], [0, 0, 1, 1], [], []>} : vector<8x8xf32>, vector<8x8xf32>, vector<8x8xf32> -> vector<8x8xf32>
    %370 = vector.extract_strided_slice %331 {offsets = [0, 0], sizes = [8, 32], strides = [1, 1]} : vector<32x32xf32> to vector<8x32xf32>
    %cst_168 = arith.constant dense<0.000000e+00> : vector<8x32xf32>
    %371 = tpu.matmul %369, %370, %cst_168 {dimension_numbers = #tpu.dot_dimension_numbers<[1], [0], [0], [1], [0, 0, 1, 1], [], []>} : vector<8x8xf32>, vector<8x32xf32>, vector<8x32xf32> -> vector<8x32xf32>
    %372 = arith.addf %352, %371 : vector<8x32xf32>
    %373 = vector.extract_strided_slice %349 {offsets = [0, 8], sizes = [8, 8], strides = [1, 1]} : vector<16x32xf32> to vector<8x8xf32>
    %374 = vector.extract_strided_slice %350 {offsets = [0, 8], sizes = [8, 8], strides = [1, 1]} : vector<16x32xf32> to vector<8x8xf32>
    %cst_169 = arith.constant dense<0.000000e+00> : vector<8x8xf32>
    %375 = tpu.matmul %373, %374, %cst_169 {dimension_numbers = #tpu.dot_dimension_numbers<[1], [1], [0], [0], [0, 0, 1, 0], [], []>} : vector<8x8xf32>, vector<8x8xf32>, vector<8x8xf32> -> vector<8x8xf32>
    %cst_170 = arith.constant 0xFF800000 : f32
    %376 = vector.broadcast %cst_170 : f32 to vector<8x8xf32>
    %377 = arith.select %49, %375, %376 : vector<8x8xi1>, vector<8x8xf32>
    %cst_171 = arith.constant dense<0xFF800000> : vector<8xf32>
    %378 = vector.multi_reduction <maximumf>, %377, %cst_171 [1] : vector<8x8xf32> to vector<8xf32>
    %379 = vector.shape_cast %378 : vector<8xf32> to vector<8x1xf32>
    %380 = vector.broadcast %379 : vector<8x1xf32> to vector<8x8xf32>
    %381 = arith.subf %377, %380 : vector<8x8xf32>
    %382 = math.exp %381 : vector<8x8xf32>
    %cst_172 = arith.constant dense<0.000000e+00> : vector<8xf32>
    %383 = vector.multi_reduction <add>, %382, %cst_172 [1] : vector<8x8xf32> to vector<8xf32>
    %384 = vector.shape_cast %383 : vector<8xf32> to vector<8x1xf32>
    %385 = tpu.reciprocal %384 {approx = true} : vector<8x1xf32> -> vector<8x1xf32>
    %386 = vector.broadcast %385 : vector<8x1xf32> to vector<8x8xf32>
    %387 = arith.mulf %382, %386 : vector<8x8xf32>
    %388 = vector.extract_strided_slice %351 {offsets = [0, 8], sizes = [8, 8], strides = [1, 1]} : vector<16x32xf32> to vector<8x8xf32>
    %cst_173 = arith.constant dense<0.000000e+00> : vector<8x8xf32>
    %389 = tpu.matmul %387, %388, %cst_173 {dimension_numbers = #tpu.dot_dimension_numbers<[1], [0], [0], [1], [0, 0, 1, 1], [], []>} : vector<8x8xf32>, vector<8x8xf32>, vector<8x8xf32> -> vector<8x8xf32>
    %390 = vector.extract_strided_slice %331 {offsets = [8, 0], sizes = [8, 32], strides = [1, 1]} : vector<32x32xf32> to vector<8x32xf32>
    %cst_174 = arith.constant dense<0.000000e+00> : vector<8x32xf32>
    %391 = tpu.matmul %389, %390, %cst_174 {dimension_numbers = #tpu.dot_dimension_numbers<[1], [0], [0], [1], [0, 0, 1, 1], [], []>} : vector<8x8xf32>, vector<8x32xf32>, vector<8x32xf32> -> vector<8x32xf32>
    %392 = arith.addf %372, %391 : vector<8x32xf32>
    %393 = vector.extract_strided_slice %349 {offsets = [0, 16], sizes = [8, 8], strides = [1, 1]} : vector<16x32xf32> to vector<8x8xf32>
    %394 = vector.extract_strided_slice %350 {offsets = [0, 16], sizes = [8, 8], strides = [1, 1]} : vector<16x32xf32> to vector<8x8xf32>
    %cst_175 = arith.constant dense<0.000000e+00> : vector<8x8xf32>
    %395 = tpu.matmul %393, %394, %cst_175 {dimension_numbers = #tpu.dot_dimension_numbers<[1], [1], [0], [0], [0, 0, 1, 0], [], []>} : vector<8x8xf32>, vector<8x8xf32>, vector<8x8xf32> -> vector<8x8xf32>
    %cst_176 = arith.constant 0xFF800000 : f32
    %396 = vector.broadcast %cst_176 : f32 to vector<8x8xf32>
    %397 = arith.select %49, %395, %396 : vector<8x8xi1>, vector<8x8xf32>
    %cst_177 = arith.constant dense<0xFF800000> : vector<8xf32>
    %398 = vector.multi_reduction <maximumf>, %397, %cst_177 [1] : vector<8x8xf32> to vector<8xf32>
    %399 = vector.shape_cast %398 : vector<8xf32> to vector<8x1xf32>
    %400 = vector.broadcast %399 : vector<8x1xf32> to vector<8x8xf32>
    %401 = arith.subf %397, %400 : vector<8x8xf32>
    %402 = math.exp %401 : vector<8x8xf32>
    %cst_178 = arith.constant dense<0.000000e+00> : vector<8xf32>
    %403 = vector.multi_reduction <add>, %402, %cst_178 [1] : vector<8x8xf32> to vector<8xf32>
    %404 = vector.shape_cast %403 : vector<8xf32> to vector<8x1xf32>
    %405 = tpu.reciprocal %404 {approx = true} : vector<8x1xf32> -> vector<8x1xf32>
    %406 = vector.broadcast %405 : vector<8x1xf32> to vector<8x8xf32>
    %407 = arith.mulf %402, %406 : vector<8x8xf32>
    %408 = vector.extract_strided_slice %351 {offsets = [0, 16], sizes = [8, 8], strides = [1, 1]} : vector<16x32xf32> to vector<8x8xf32>
    %cst_179 = arith.constant dense<0.000000e+00> : vector<8x8xf32>
    %409 = tpu.matmul %407, %408, %cst_179 {dimension_numbers = #tpu.dot_dimension_numbers<[1], [0], [0], [1], [0, 0, 1, 1], [], []>} : vector<8x8xf32>, vector<8x8xf32>, vector<8x8xf32> -> vector<8x8xf32>
    %410 = vector.extract_strided_slice %331 {offsets = [16, 0], sizes = [8, 32], strides = [1, 1]} : vector<32x32xf32> to vector<8x32xf32>
    %cst_180 = arith.constant dense<0.000000e+00> : vector<8x32xf32>
    %411 = tpu.matmul %409, %410, %cst_180 {dimension_numbers = #tpu.dot_dimension_numbers<[1], [0], [0], [1], [0, 0, 1, 1], [], []>} : vector<8x8xf32>, vector<8x32xf32>, vector<8x32xf32> -> vector<8x32xf32>
    %412 = arith.addf %392, %411 : vector<8x32xf32>
    %413 = vector.extract_strided_slice %349 {offsets = [0, 24], sizes = [8, 8], strides = [1, 1]} : vector<16x32xf32> to vector<8x8xf32>
    %414 = vector.extract_strided_slice %350 {offsets = [0, 24], sizes = [8, 8], strides = [1, 1]} : vector<16x32xf32> to vector<8x8xf32>
    %cst_181 = arith.constant dense<0.000000e+00> : vector<8x8xf32>
    %415 = tpu.matmul %413, %414, %cst_181 {dimension_numbers = #tpu.dot_dimension_numbers<[1], [1], [0], [0], [0, 0, 1, 0], [], []>} : vector<8x8xf32>, vector<8x8xf32>, vector<8x8xf32> -> vector<8x8xf32>
    %cst_182 = arith.constant 0xFF800000 : f32
    %416 = vector.broadcast %cst_182 : f32 to vector<8x8xf32>
    %417 = arith.select %49, %415, %416 : vector<8x8xi1>, vector<8x8xf32>
    %cst_183 = arith.constant dense<0xFF800000> : vector<8xf32>
    %418 = vector.multi_reduction <maximumf>, %417, %cst_183 [1] : vector<8x8xf32> to vector<8xf32>
    %419 = vector.shape_cast %418 : vector<8xf32> to vector<8x1xf32>
    %420 = vector.broadcast %419 : vector<8x1xf32> to vector<8x8xf32>
    %421 = arith.subf %417, %420 : vector<8x8xf32>
    %422 = math.exp %421 : vector<8x8xf32>
    %cst_184 = arith.constant dense<0.000000e+00> : vector<8xf32>
    %423 = vector.multi_reduction <add>, %422, %cst_184 [1] : vector<8x8xf32> to vector<8xf32>
    %424 = vector.shape_cast %423 : vector<8xf32> to vector<8x1xf32>
    %425 = tpu.reciprocal %424 {approx = true} : vector<8x1xf32> -> vector<8x1xf32>
    %426 = vector.broadcast %425 : vector<8x1xf32> to vector<8x8xf32>
    %427 = arith.mulf %422, %426 : vector<8x8xf32>
    %428 = vector.extract_strided_slice %351 {offsets = [0, 24], sizes = [8, 8], strides = [1, 1]} : vector<16x32xf32> to vector<8x8xf32>
    %cst_185 = arith.constant dense<0.000000e+00> : vector<8x8xf32>
    %429 = tpu.matmul %427, %428, %cst_185 {dimension_numbers = #tpu.dot_dimension_numbers<[1], [0], [0], [1], [0, 0, 1, 1], [], []>} : vector<8x8xf32>, vector<8x8xf32>, vector<8x8xf32> -> vector<8x8xf32>
    %430 = vector.extract_strided_slice %331 {offsets = [24, 0], sizes = [8, 32], strides = [1, 1]} : vector<32x32xf32> to vector<8x32xf32>
    %cst_186 = arith.constant dense<0.000000e+00> : vector<8x32xf32>
    %431 = tpu.matmul %429, %430, %cst_186 {dimension_numbers = #tpu.dot_dimension_numbers<[1], [0], [0], [1], [0, 0, 1, 1], [], []>} : vector<8x8xf32>, vector<8x32xf32>, vector<8x32xf32> -> vector<8x32xf32>
    %432 = arith.addf %412, %431 : vector<8x32xf32>
    %cst_187 = arith.constant 0.000000e+00 : f32
    %433 = vector.broadcast %cst_187 : f32 to vector<8x32xf32>
    %434 = vector.extract_strided_slice %349 {offsets = [8, 0], sizes = [8, 8], strides = [1, 1]} : vector<16x32xf32> to vector<8x8xf32>
    %435 = vector.extract_strided_slice %350 {offsets = [8, 0], sizes = [8, 8], strides = [1, 1]} : vector<16x32xf32> to vector<8x8xf32>
    %cst_188 = arith.constant dense<0.000000e+00> : vector<8x8xf32>
    %436 = tpu.matmul %434, %435, %cst_188 {dimension_numbers = #tpu.dot_dimension_numbers<[1], [1], [0], [0], [0, 0, 1, 0], [], []>} : vector<8x8xf32>, vector<8x8xf32>, vector<8x8xf32> -> vector<8x8xf32>
    %cst_189 = arith.constant 0xFF800000 : f32
    %437 = vector.broadcast %cst_189 : f32 to vector<8x8xf32>
    %438 = arith.select %49, %436, %437 : vector<8x8xi1>, vector<8x8xf32>
    %cst_190 = arith.constant dense<0xFF800000> : vector<8xf32>
    %439 = vector.multi_reduction <maximumf>, %438, %cst_190 [1] : vector<8x8xf32> to vector<8xf32>
    %440 = vector.shape_cast %439 : vector<8xf32> to vector<8x1xf32>
    %441 = vector.broadcast %440 : vector<8x1xf32> to vector<8x8xf32>
    %442 = arith.subf %438, %441 : vector<8x8xf32>
    %443 = math.exp %442 : vector<8x8xf32>
    %cst_191 = arith.constant dense<0.000000e+00> : vector<8xf32>
    %444 = vector.multi_reduction <add>, %443, %cst_191 [1] : vector<8x8xf32> to vector<8xf32>
    %445 = vector.shape_cast %444 : vector<8xf32> to vector<8x1xf32>
    %446 = tpu.reciprocal %445 {approx = true} : vector<8x1xf32> -> vector<8x1xf32>
    %447 = vector.broadcast %446 : vector<8x1xf32> to vector<8x8xf32>
    %448 = arith.mulf %443, %447 : vector<8x8xf32>
    %449 = vector.extract_strided_slice %351 {offsets = [8, 0], sizes = [8, 8], strides = [1, 1]} : vector<16x32xf32> to vector<8x8xf32>
    %cst_192 = arith.constant dense<0.000000e+00> : vector<8x8xf32>
    %450 = tpu.matmul %448, %449, %cst_192 {dimension_numbers = #tpu.dot_dimension_numbers<[1], [0], [0], [1], [0, 0, 1, 1], [], []>} : vector<8x8xf32>, vector<8x8xf32>, vector<8x8xf32> -> vector<8x8xf32>
    %451 = vector.extract_strided_slice %331 {offsets = [0, 0], sizes = [8, 32], strides = [1, 1]} : vector<32x32xf32> to vector<8x32xf32>
    %cst_193 = arith.constant dense<0.000000e+00> : vector<8x32xf32>
    %452 = tpu.matmul %450, %451, %cst_193 {dimension_numbers = #tpu.dot_dimension_numbers<[1], [0], [0], [1], [0, 0, 1, 1], [], []>} : vector<8x8xf32>, vector<8x32xf32>, vector<8x32xf32> -> vector<8x32xf32>
    %453 = arith.addf %433, %452 : vector<8x32xf32>
    %454 = vector.extract_strided_slice %349 {offsets = [8, 8], sizes = [8, 8], strides = [1, 1]} : vector<16x32xf32> to vector<8x8xf32>
    %455 = vector.extract_strided_slice %350 {offsets = [8, 8], sizes = [8, 8], strides = [1, 1]} : vector<16x32xf32> to vector<8x8xf32>
    %cst_194 = arith.constant dense<0.000000e+00> : vector<8x8xf32>
    %456 = tpu.matmul %454, %455, %cst_194 {dimension_numbers = #tpu.dot_dimension_numbers<[1], [1], [0], [0], [0, 0, 1, 0], [], []>} : vector<8x8xf32>, vector<8x8xf32>, vector<8x8xf32> -> vector<8x8xf32>
    %cst_195 = arith.constant 0xFF800000 : f32
    %457 = vector.broadcast %cst_195 : f32 to vector<8x8xf32>
    %458 = arith.select %49, %456, %457 : vector<8x8xi1>, vector<8x8xf32>
    %cst_196 = arith.constant dense<0xFF800000> : vector<8xf32>
    %459 = vector.multi_reduction <maximumf>, %458, %cst_196 [1] : vector<8x8xf32> to vector<8xf32>
    %460 = vector.shape_cast %459 : vector<8xf32> to vector<8x1xf32>
    %461 = vector.broadcast %460 : vector<8x1xf32> to vector<8x8xf32>
    %462 = arith.subf %458, %461 : vector<8x8xf32>
    %463 = math.exp %462 : vector<8x8xf32>
    %cst_197 = arith.constant dense<0.000000e+00> : vector<8xf32>
    %464 = vector.multi_reduction <add>, %463, %cst_197 [1] : vector<8x8xf32> to vector<8xf32>
    %465 = vector.shape_cast %464 : vector<8xf32> to vector<8x1xf32>
    %466 = tpu.reciprocal %465 {approx = true} : vector<8x1xf32> -> vector<8x1xf32>
    %467 = vector.broadcast %466 : vector<8x1xf32> to vector<8x8xf32>
    %468 = arith.mulf %463, %467 : vector<8x8xf32>
    %469 = vector.extract_strided_slice %351 {offsets = [8, 8], sizes = [8, 8], strides = [1, 1]} : vector<16x32xf32> to vector<8x8xf32>
    %cst_198 = arith.constant dense<0.000000e+00> : vector<8x8xf32>
    %470 = tpu.matmul %468, %469, %cst_198 {dimension_numbers = #tpu.dot_dimension_numbers<[1], [0], [0], [1], [0, 0, 1, 1], [], []>} : vector<8x8xf32>, vector<8x8xf32>, vector<8x8xf32> -> vector<8x8xf32>
    %471 = vector.extract_strided_slice %331 {offsets = [8, 0], sizes = [8, 32], strides = [1, 1]} : vector<32x32xf32> to vector<8x32xf32>
    %cst_199 = arith.constant dense<0.000000e+00> : vector<8x32xf32>
    %472 = tpu.matmul %470, %471, %cst_199 {dimension_numbers = #tpu.dot_dimension_numbers<[1], [0], [0], [1], [0, 0, 1, 1], [], []>} : vector<8x8xf32>, vector<8x32xf32>, vector<8x32xf32> -> vector<8x32xf32>
    %473 = arith.addf %453, %472 : vector<8x32xf32>
    %474 = vector.extract_strided_slice %349 {offsets = [8, 16], sizes = [8, 8], strides = [1, 1]} : vector<16x32xf32> to vector<8x8xf32>
    %475 = vector.extract_strided_slice %350 {offsets = [8, 16], sizes = [8, 8], strides = [1, 1]} : vector<16x32xf32> to vector<8x8xf32>
    %cst_200 = arith.constant dense<0.000000e+00> : vector<8x8xf32>
    %476 = tpu.matmul %474, %475, %cst_200 {dimension_numbers = #tpu.dot_dimension_numbers<[1], [1], [0], [0], [0, 0, 1, 0], [], []>} : vector<8x8xf32>, vector<8x8xf32>, vector<8x8xf32> -> vector<8x8xf32>
    %cst_201 = arith.constant 0xFF800000 : f32
    %477 = vector.broadcast %cst_201 : f32 to vector<8x8xf32>
    %478 = arith.select %49, %476, %477 : vector<8x8xi1>, vector<8x8xf32>
    %cst_202 = arith.constant dense<0xFF800000> : vector<8xf32>
    %479 = vector.multi_reduction <maximumf>, %478, %cst_202 [1] : vector<8x8xf32> to vector<8xf32>
    %480 = vector.shape_cast %479 : vector<8xf32> to vector<8x1xf32>
    %481 = vector.broadcast %480 : vector<8x1xf32> to vector<8x8xf32>
    %482 = arith.subf %478, %481 : vector<8x8xf32>
    %483 = math.exp %482 : vector<8x8xf32>
    %cst_203 = arith.constant dense<0.000000e+00> : vector<8xf32>
    %484 = vector.multi_reduction <add>, %483, %cst_203 [1] : vector<8x8xf32> to vector<8xf32>
    %485 = vector.shape_cast %484 : vector<8xf32> to vector<8x1xf32>
    %486 = tpu.reciprocal %485 {approx = true} : vector<8x1xf32> -> vector<8x1xf32>
    %487 = vector.broadcast %486 : vector<8x1xf32> to vector<8x8xf32>
    %488 = arith.mulf %483, %487 : vector<8x8xf32>
    %489 = vector.extract_strided_slice %351 {offsets = [8, 16], sizes = [8, 8], strides = [1, 1]} : vector<16x32xf32> to vector<8x8xf32>
    %cst_204 = arith.constant dense<0.000000e+00> : vector<8x8xf32>
    %490 = tpu.matmul %488, %489, %cst_204 {dimension_numbers = #tpu.dot_dimension_numbers<[1], [0], [0], [1], [0, 0, 1, 1], [], []>} : vector<8x8xf32>, vector<8x8xf32>, vector<8x8xf32> -> vector<8x8xf32>
    %491 = vector.extract_strided_slice %331 {offsets = [16, 0], sizes = [8, 32], strides = [1, 1]} : vector<32x32xf32> to vector<8x32xf32>
    %cst_205 = arith.constant dense<0.000000e+00> : vector<8x32xf32>
    %492 = tpu.matmul %490, %491, %cst_205 {dimension_numbers = #tpu.dot_dimension_numbers<[1], [0], [0], [1], [0, 0, 1, 1], [], []>} : vector<8x8xf32>, vector<8x32xf32>, vector<8x32xf32> -> vector<8x32xf32>
    %493 = arith.addf %473, %492 : vector<8x32xf32>
    %494 = vector.extract_strided_slice %349 {offsets = [8, 24], sizes = [8, 8], strides = [1, 1]} : vector<16x32xf32> to vector<8x8xf32>
    %495 = vector.extract_strided_slice %350 {offsets = [8, 24], sizes = [8, 8], strides = [1, 1]} : vector<16x32xf32> to vector<8x8xf32>
    %cst_206 = arith.constant dense<0.000000e+00> : vector<8x8xf32>
    %496 = tpu.matmul %494, %495, %cst_206 {dimension_numbers = #tpu.dot_dimension_numbers<[1], [1], [0], [0], [0, 0, 1, 0], [], []>} : vector<8x8xf32>, vector<8x8xf32>, vector<8x8xf32> -> vector<8x8xf32>
    %cst_207 = arith.constant 0xFF800000 : f32
    %497 = vector.broadcast %cst_207 : f32 to vector<8x8xf32>
    %498 = arith.select %49, %496, %497 : vector<8x8xi1>, vector<8x8xf32>
    %cst_208 = arith.constant dense<0xFF800000> : vector<8xf32>
    %499 = vector.multi_reduction <maximumf>, %498, %cst_208 [1] : vector<8x8xf32> to vector<8xf32>
    %500 = vector.shape_cast %499 : vector<8xf32> to vector<8x1xf32>
    %501 = vector.broadcast %500 : vector<8x1xf32> to vector<8x8xf32>
    %502 = arith.subf %498, %501 : vector<8x8xf32>
    %503 = math.exp %502 : vector<8x8xf32>
    %cst_209 = arith.constant dense<0.000000e+00> : vector<8xf32>
    %504 = vector.multi_reduction <add>, %503, %cst_209 [1] : vector<8x8xf32> to vector<8xf32>
    %505 = vector.shape_cast %504 : vector<8xf32> to vector<8x1xf32>
    %506 = tpu.reciprocal %505 {approx = true} : vector<8x1xf32> -> vector<8x1xf32>
    %507 = vector.broadcast %506 : vector<8x1xf32> to vector<8x8xf32>
    %508 = arith.mulf %503, %507 : vector<8x8xf32>
    %509 = vector.extract_strided_slice %351 {offsets = [8, 24], sizes = [8, 8], strides = [1, 1]} : vector<16x32xf32> to vector<8x8xf32>
    %cst_210 = arith.constant dense<0.000000e+00> : vector<8x8xf32>
    %510 = tpu.matmul %508, %509, %cst_210 {dimension_numbers = #tpu.dot_dimension_numbers<[1], [0], [0], [1], [0, 0, 1, 1], [], []>} : vector<8x8xf32>, vector<8x8xf32>, vector<8x8xf32> -> vector<8x8xf32>
    %511 = vector.extract_strided_slice %331 {offsets = [24, 0], sizes = [8, 32], strides = [1, 1]} : vector<32x32xf32> to vector<8x32xf32>
    %cst_211 = arith.constant dense<0.000000e+00> : vector<8x32xf32>
    %512 = tpu.matmul %510, %511, %cst_211 {dimension_numbers = #tpu.dot_dimension_numbers<[1], [0], [0], [1], [0, 0, 1, 1], [], []>} : vector<8x8xf32>, vector<8x32xf32>, vector<8x32xf32> -> vector<8x32xf32>
    %513 = arith.addf %493, %512 : vector<8x32xf32>
    %514 = tpu.concatenate %432, %513 in 0 : vector<8x32xf32>, vector<8x32xf32> -> vector<16x32xf32>
    %515 = vector.broadcast %333 : vector<1x32xf32> to vector<16x32xf32>
    %516 = arith.addf %514, %515 : vector<16x32xf32>
    %517 = arith.addf %325, %516 : vector<16x32xf32>
    %518 = vector.extract_strided_slice %343 {offsets = [0, 0], sizes = [1, 32], strides = [1, 1]} : vector<3x32xf32> to vector<1x32xf32>
    %519 = vector.extract_strided_slice %345 {offsets = [0, 0], sizes = [1, 32], strides = [1, 1]} : vector<3x32xf32> to vector<1x32xf32>
    %cst_212 = arith.constant dense<0.000000e+00> : vector<16xf32>
    %520 = vector.multi_reduction <add>, %517, %cst_212 [1] : vector<16x32xf32> to vector<16xf32>
    %521 = vector.shape_cast %520 : vector<16xf32> to vector<16x1xf32>
    %cst_213 = arith.constant 3.200000e+01 : f32
    %522 = vector.broadcast %cst_213 : f32 to vector<16x1xf32>
    %523 = arith.divf %521, %522 : vector<16x1xf32>
    %524 = vector.broadcast %523 : vector<16x1xf32> to vector<16x32xf32>
    %525 = arith.subf %517, %524 : vector<16x32xf32>
    %526 = arith.mulf %525, %525 : vector<16x32xf32>
    %cst_214 = arith.constant dense<0.000000e+00> : vector<16xf32>
    %527 = vector.multi_reduction <add>, %526, %cst_214 [1] : vector<16x32xf32> to vector<16xf32>
    %528 = vector.shape_cast %527 : vector<16xf32> to vector<16x1xf32>
    %cst_215 = arith.constant 3.200000e+01 : f32
    %529 = vector.broadcast %cst_215 : f32 to vector<16x1xf32>
    %530 = arith.divf %528, %529 : vector<16x1xf32>
    %531 = vector.broadcast %523 : vector<16x1xf32> to vector<16x32xf32>
    %532 = arith.subf %517, %531 : vector<16x32xf32>
    %cst_216 = arith.constant 9.99999974E-6 : f32
    %533 = vector.broadcast %cst_216 : f32 to vector<16x1xf32>
    %534 = arith.addf %530, %533 : vector<16x1xf32>
    %535 = math.rsqrt %534 : vector<16x1xf32>
    %536 = vector.broadcast %535 : vector<16x1xf32> to vector<16x32xf32>
    %537 = arith.mulf %532, %536 : vector<16x32xf32>
    %538 = vector.broadcast %518 : vector<1x32xf32> to vector<16x32xf32>
    %539 = arith.mulf %537, %538 : vector<16x32xf32>
    %540 = vector.broadcast %519 : vector<1x32xf32> to vector<16x32xf32>
    %541 = arith.addf %539, %540 : vector<16x32xf32>
    %542 = arith.addf %541, %46 : vector<16x32xf32>
    %543 = vector.extract_strided_slice %343 {offsets = [1, 0], sizes = [1, 32], strides = [1, 1]} : vector<3x32xf32> to vector<1x32xf32>
    %544 = vector.extract_strided_slice %345 {offsets = [1, 0], sizes = [1, 32], strides = [1, 1]} : vector<3x32xf32> to vector<1x32xf32>
    %cst_217 = arith.constant dense<0.000000e+00> : vector<16xf32>
    %545 = vector.multi_reduction <add>, %542, %cst_217 [1] : vector<16x32xf32> to vector<16xf32>
    %546 = vector.shape_cast %545 : vector<16xf32> to vector<16x1xf32>
    %cst_218 = arith.constant 3.200000e+01 : f32
    %547 = vector.broadcast %cst_218 : f32 to vector<16x1xf32>
    %548 = arith.divf %546, %547 : vector<16x1xf32>
    %549 = vector.broadcast %548 : vector<16x1xf32> to vector<16x32xf32>
    %550 = arith.subf %542, %549 : vector<16x32xf32>
    %551 = arith.mulf %550, %550 : vector<16x32xf32>
    %cst_219 = arith.constant dense<0.000000e+00> : vector<16xf32>
    %552 = vector.multi_reduction <add>, %551, %cst_219 [1] : vector<16x32xf32> to vector<16xf32>
    %553 = vector.shape_cast %552 : vector<16xf32> to vector<16x1xf32>
    %cst_220 = arith.constant 3.200000e+01 : f32
    %554 = vector.broadcast %cst_220 : f32 to vector<16x1xf32>
    %555 = arith.divf %553, %554 : vector<16x1xf32>
    %556 = vector.broadcast %548 : vector<16x1xf32> to vector<16x32xf32>
    %557 = arith.subf %542, %556 : vector<16x32xf32>
    %cst_221 = arith.constant 9.99999974E-6 : f32
    %558 = vector.broadcast %cst_221 : f32 to vector<16x1xf32>
    %559 = arith.addf %555, %558 : vector<16x1xf32>
    %560 = math.rsqrt %559 : vector<16x1xf32>
    %561 = vector.broadcast %560 : vector<16x1xf32> to vector<16x32xf32>
    %562 = arith.mulf %557, %561 : vector<16x32xf32>
    %563 = vector.broadcast %543 : vector<1x32xf32> to vector<16x32xf32>
    %564 = arith.mulf %562, %563 : vector<16x32xf32>
    %565 = vector.broadcast %544 : vector<1x32xf32> to vector<16x32xf32>
    %566 = arith.addf %564, %565 : vector<16x32xf32>
    %cst_222 = arith.constant dense<0.000000e+00> : vector<16x64xf32>
    %567 = tpu.matmul %566, %335, %cst_222 {dimension_numbers = #tpu.dot_dimension_numbers<[1], [0], [0], [1], [0, 0, 1, 1], [], []>} : vector<16x32xf32>, vector<32x64xf32>, vector<16x64xf32> -> vector<16x64xf32>
    %568 = vector.broadcast %337 : vector<1x64xf32> to vector<16x64xf32>
    %569 = arith.addf %567, %568 : vector<16x64xf32>
    %cst_223 = arith.constant 0.000000e+00 : f32
    %570 = vector.broadcast %cst_223 : f32 to vector<16x64xf32>
    %571 = arith.maximumf %569, %570 : vector<16x64xf32>
    %cst_224 = arith.constant dense<0.000000e+00> : vector<16x32xf32>
    %572 = tpu.matmul %571, %339, %cst_224 {dimension_numbers = #tpu.dot_dimension_numbers<[1], [0], [0], [1], [0, 0, 1, 1], [], []>} : vector<16x64xf32>, vector<64x32xf32>, vector<16x32xf32> -> vector<16x32xf32>
    %573 = vector.broadcast %341 : vector<1x32xf32> to vector<16x32xf32>
    %574 = arith.addf %572, %573 : vector<16x32xf32>
    %575 = arith.addf %566, %574 : vector<16x32xf32>
    %576 = vector.extract_strided_slice %343 {offsets = [2, 0], sizes = [1, 32], strides = [1, 1]} : vector<3x32xf32> to vector<1x32xf32>
    %577 = vector.extract_strided_slice %345 {offsets = [2, 0], sizes = [1, 32], strides = [1, 1]} : vector<3x32xf32> to vector<1x32xf32>
    %cst_225 = arith.constant dense<0.000000e+00> : vector<16xf32>
    %578 = vector.multi_reduction <add>, %575, %cst_225 [1] : vector<16x32xf32> to vector<16xf32>
    %579 = vector.shape_cast %578 : vector<16xf32> to vector<16x1xf32>
    %cst_226 = arith.constant 3.200000e+01 : f32
    %580 = vector.broadcast %cst_226 : f32 to vector<16x1xf32>
    %581 = arith.divf %579, %580 : vector<16x1xf32>
    %582 = vector.broadcast %581 : vector<16x1xf32> to vector<16x32xf32>
    %583 = arith.subf %575, %582 : vector<16x32xf32>
    %584 = arith.mulf %583, %583 : vector<16x32xf32>
    %cst_227 = arith.constant dense<0.000000e+00> : vector<16xf32>
    %585 = vector.multi_reduction <add>, %584, %cst_227 [1] : vector<16x32xf32> to vector<16xf32>
    %586 = vector.shape_cast %585 : vector<16xf32> to vector<16x1xf32>
    %cst_228 = arith.constant 3.200000e+01 : f32
    %587 = vector.broadcast %cst_228 : f32 to vector<16x1xf32>
    %588 = arith.divf %586, %587 : vector<16x1xf32>
    %589 = vector.broadcast %581 : vector<16x1xf32> to vector<16x32xf32>
    %590 = arith.subf %575, %589 : vector<16x32xf32>
    %cst_229 = arith.constant 9.99999974E-6 : f32
    %591 = vector.broadcast %cst_229 : f32 to vector<16x1xf32>
    %592 = arith.addf %588, %591 : vector<16x1xf32>
    %593 = math.rsqrt %592 : vector<16x1xf32>
    %594 = vector.broadcast %593 : vector<16x1xf32> to vector<16x32xf32>
    %595 = arith.mulf %590, %594 : vector<16x32xf32>
    %596 = vector.broadcast %576 : vector<1x32xf32> to vector<16x32xf32>
    %597 = arith.mulf %595, %596 : vector<16x32xf32>
    %598 = vector.broadcast %577 : vector<1x32xf32> to vector<16x32xf32>
    %599 = arith.addf %597, %598 : vector<16x32xf32>
    %c0_230 = arith.constant 0 : index
    %c0_231 = arith.constant 0 : index
    %600 = vector.load %arg17[%c0_230, %c0_231] : memref<32x128xf32, #tpu.memory_space<vmem>>, vector<32x128xf32>
    %cst_232 = arith.constant dense<0.000000e+00> : vector<16x128xf32>
    %601 = tpu.matmul %599, %600, %cst_232 {dimension_numbers = #tpu.dot_dimension_numbers<[1], [0], [0], [1], [0, 0, 1, 1], [], []>} : vector<16x32xf32>, vector<32x128xf32>, vector<16x128xf32> -> vector<16x128xf32>
    %c0_233 = arith.constant 0 : index
    %c0_234 = arith.constant 0 : index
    %602 = vector.load %arg18[%c0_233, %c0_234] : memref<1x128xf32, #tpu.memory_space<vmem>>, vector<1x128xf32>
    %603 = vector.broadcast %602 : vector<1x128xf32> to vector<16x128xf32>
    %604 = arith.addf %601, %603 : vector<16x128xf32>
    %605 = vector.shape_cast %604 : vector<16x128xf32> to vector<2x8x128xf32>
    %c0_235 = arith.constant 0 : index
    %c0_236 = arith.constant 0 : index
    %c0_237 = arith.constant 0 : index
    %606 = vector.load %arg19[%c0_235, %c0_236, %c0_237] : memref<2x8x128xf32, #tpu.memory_space<vmem>>, vector<2x8x128xf32>
    tpu.vector_store %arg19[%c0_235, %c0_236, %c0_237], %605 {strides = array<i32>} : memref<2x8x128xf32, #tpu.memory_space<vmem>>, vector<2x8x128xf32>,
    return
  }
  func.func @transform_0(%arg0: i32) -> (i32, i32, i32) {
    %c0_i32 = arith.constant 0 : i32
    %c0_i32_0 = arith.constant 0 : i32
    %c0_i32_1 = arith.constant 0 : i32
    return %arg0, %c0_i32, %c0_i32_0 : i32, i32, i32
  }
  func.func @transform_1(%arg0: i32) -> (i32, i32, i32) {
    %c0_i32 = arith.constant 0 : i32
    %c0_i32_0 = arith.constant 0 : i32
    %c0_i32_1 = arith.constant 0 : i32
    return %arg0, %c0_i32, %c0_i32_0 : i32, i32, i32
  }
  func.func @transform_2(%arg0: i32) -> (i32, i32) {
    %c0_i32 = arith.constant 0 : i32
    %c0_i32_0 = arith.constant 0 : i32
    %c0_i32_1 = arith.constant 0 : i32
    return %c0_i32, %c0_i32_0 : i32, i32
  }
  func.func @transform_3(%arg0: i32) -> (i32, i32) {
    %c0_i32 = arith.constant 0 : i32
    %c0_i32_0 = arith.constant 0 : i32
    %c0_i32_1 = arith.constant 0 : i32
    return %c0_i32, %c0_i32_0 : i32, i32
  }
  func.func @transform_4(%arg0: i32) -> (i32, i32, i32) {
    %c0_i32 = arith.constant 0 : i32
    %c0_i32_0 = arith.constant 0 : i32
    %c0_i32_1 = arith.constant 0 : i32
    %c0_i32_2 = arith.constant 0 : i32
    return %c0_i32, %c0_i32_0, %c0_i32_1 : i32, i32, i32
  }
  func.func @transform_5(%arg0: i32) -> (i32, i32, i32) {
    %c0_i32 = arith.constant 0 : i32
    %c0_i32_0 = arith.constant 0 : i32
    %c0_i32_1 = arith.constant 0 : i32
    %c0_i32_2 = arith.constant 0 : i32
    return %c0_i32, %c0_i32_0, %c0_i32_1 : i32, i32, i32
  }
  func.func @transform_6(%arg0: i32) -> (i32, i32, i32) {
    %c0_i32 = arith.constant 0 : i32
    %c0_i32_0 = arith.constant 0 : i32
    %c0_i32_1 = arith.constant 0 : i32
    %c0_i32_2 = arith.constant 0 : i32
    return %c0_i32, %c0_i32_0, %c0_i32_1 : i32, i32, i32
  }
  func.func @transform_7(%arg0: i32) -> (i32, i32, i32) {
    %c0_i32 = arith.constant 0 : i32
    %c0_i32_0 = arith.constant 0 : i32
    %c0_i32_1 = arith.constant 0 : i32
    %c0_i32_2 = arith.constant 0 : i32
    return %c0_i32, %c0_i32_0, %c0_i32_1 : i32, i32, i32
  }
  func.func @transform_8(%arg0: i32) -> (i32, i32, i32) {
    %c0_i32 = arith.constant 0 : i32
    %c0_i32_0 = arith.constant 0 : i32
    %c0_i32_1 = arith.constant 0 : i32
    %c0_i32_2 = arith.constant 0 : i32
    return %c0_i32, %c0_i32_0, %c0_i32_1 : i32, i32, i32
  }
  func.func @transform_9(%arg0: i32) -> (i32, i32, i32) {
    %c0_i32 = arith.constant 0 : i32
    %c0_i32_0 = arith.constant 0 : i32
    %c0_i32_1 = arith.constant 0 : i32
    %c0_i32_2 = arith.constant 0 : i32
    return %c0_i32, %c0_i32_0, %c0_i32_1 : i32, i32, i32
  }
  func.func @transform_10(%arg0: i32) -> (i32, i32, i32) {
    %c0_i32 = arith.constant 0 : i32
    %c0_i32_0 = arith.constant 0 : i32
    %c0_i32_1 = arith.constant 0 : i32
    %c0_i32_2 = arith.constant 0 : i32
    return %c0_i32, %c0_i32_0, %c0_i32_1 : i32, i32, i32
  }
  func.func @transform_11(%arg0: i32) -> (i32, i32, i32) {
    %c0_i32 = arith.constant 0 : i32
    %c0_i32_0 = arith.constant 0 : i32
    %c0_i32_1 = arith.constant 0 : i32
    %c0_i32_2 = arith.constant 0 : i32
    return %c0_i32, %c0_i32_0, %c0_i32_1 : i32, i32, i32
  }
  func.func @transform_12(%arg0: i32) -> (i32, i32, i32) {
    %c0_i32 = arith.constant 0 : i32
    %c0_i32_0 = arith.constant 0 : i32
    %c0_i32_1 = arith.constant 0 : i32
    %c0_i32_2 = arith.constant 0 : i32
    return %c0_i32, %c0_i32_0, %c0_i32_1 : i32, i32, i32
  }
  func.func @transform_13(%arg0: i32) -> (i32, i32, i32) {
    %c0_i32 = arith.constant 0 : i32
    %c0_i32_0 = arith.constant 0 : i32
    %c0_i32_1 = arith.constant 0 : i32
    %c0_i32_2 = arith.constant 0 : i32
    return %c0_i32, %c0_i32_0, %c0_i32_1 : i32, i32, i32
  }
  func.func @transform_14(%arg0: i32) -> (i32, i32, i32) {
    %c0_i32 = arith.constant 0 : i32
    %c0_i32_0 = arith.constant 0 : i32
    %c0_i32_1 = arith.constant 0 : i32
    %c0_i32_2 = arith.constant 0 : i32
    return %c0_i32, %c0_i32_0, %c0_i32_1 : i32, i32, i32
  }
  func.func @transform_15(%arg0: i32) -> (i32, i32, i32) {
    %c0_i32 = arith.constant 0 : i32
    %c0_i32_0 = arith.constant 0 : i32
    %c0_i32_1 = arith.constant 0 : i32
    %c0_i32_2 = arith.constant 0 : i32
    return %c0_i32, %c0_i32_0, %c0_i32_1 : i32, i32, i32
  }
  func.func @transform_16(%arg0: i32) -> (i32, i32) {
    %c0_i32 = arith.constant 0 : i32
    %c0_i32_0 = arith.constant 0 : i32
    %c0_i32_1 = arith.constant 0 : i32
    return %c0_i32, %c0_i32_0 : i32, i32
  }
  func.func @transform_17(%arg0: i32) -> (i32, i32) {
    %c0_i32 = arith.constant 0 : i32
    %c0_i32_0 = arith.constant 0 : i32
    %c0_i32_1 = arith.constant 0 : i32
    return %c0_i32, %c0_i32_0 : i32, i32
  }
  func.func @transform_18(%arg0: i32) -> (i32, i32, i32) {
    %c0_i32 = arith.constant 0 : i32
    %c0_i32_0 = arith.constant 0 : i32
    %c0_i32_1 = arith.constant 0 : i32
    return %arg0, %c0_i32, %c0_i32_0 : i32, i32, i32
  }
}

</mosaic_0001>

<llo_original>
// kernel: image_captioning_forward.1
$region0: #{image_captioning_forward.1}
  #allocation0 [shape = 'u32[]', space=smem, size = 0x4, offset = 0x4, fixed_abs, tag = 'smem constant byte address 0x4 - core index']
  #allocation1 [shape = 'u32[72,128]{1,0:T(1,128)}', space=vmem, size = 0x9000, scoped, tag = 'internal scratch']
  %s0 = inlined_call_operand.vmem [shape: f32[2,8,32], index: 0, kind: input, shape index: {}]
  %s1 = inlined_call_operand.vmem [shape: f32[2,4,256], index: 1, kind: input, shape index: {}]
  %s2 = inlined_call_operand.vmem [shape: f32[4,32], index: 2, kind: input, shape index: {}]
  %s3 = inlined_call_operand.vmem [shape: f32[1,32], index: 3, kind: input, shape index: {}]
  %s4 = inlined_call_operand.vmem [shape: f32[2,32,96], index: 4, kind: input, shape index: {}]
  %s5 = inlined_call_operand.vmem [shape: f32[2,1,96], index: 5, kind: input, shape index: {}]
  %s6 = inlined_call_operand.vmem [shape: f32[2,32,32], index: 6, kind: input, shape index: {}]
  %s7 = inlined_call_operand.vmem [shape: f32[2,1,32], index: 7, kind: input, shape index: {}]
  %s8 = inlined_call_operand.vmem [shape: f32[2,32,32], index: 8, kind: input, shape index: {}]
  %s9 = inlined_call_operand.vmem [shape: f32[2,1,32], index: 9, kind: input, shape index: {}]
  %s10 = inlined_call_operand.vmem [shape: f32[2,32,64], index: 10, kind: input, shape index: {}]
  %s11 = inlined_call_operand.vmem [shape: f32[2,1,64], index: 11, kind: input, shape index: {}]
  %s12 = inlined_call_operand.vmem [shape: f32[2,64,32], index: 12, kind: input, shape index: {}]
  %s13 = inlined_call_operand.vmem [shape: f32[2,1,32], index: 13, kind: input, shape index: {}]
  %s14 = inlined_call_operand.vmem [shape: f32[2,3,32], index: 14, kind: input, shape index: {}]
  %s15 = inlined_call_operand.vmem [shape: f32[2,3,32], index: 15, kind: input, shape index: {}]
  %s16 = inlined_call_operand.vmem [shape: f32[32,128], index: 16, kind: input, shape index: {}]
  %s17 = inlined_call_operand.vmem [shape: f32[1,128], index: 17, kind: input, shape index: {}]
  %s18 = inlined_call_operand.hbm [shape: f32[2,8,128], index: 18, kind: output, shape index: {}]
  %s19 = sld [smem:[#allocation0]]
  $region82: #{image_captioning_forward.1} parent=0
    _
  %s21 = ssub.s32 1, %s19
  %s22 = scalar_select 0, %s21, %s19
  $region1: #{image_captioning_forward.1} parent=0
    #allocation2 [shape = 'u8[8192]{0}', space=vmem, size = 0x2000, scoped, tag = 'output window, operand 0, single buffered']
    #allocation3 [shape = 's32[1]{0}', space=sflag, size = 0x4, scoped, tag = 'scoped memory for image_captioning_forward.1']
    %23 = vsyncpa [#allocation3], 0
    // Predicated region
    $region2: #{image_captioning_forward.1} parent=1 // pred_check
      _
    $region3: #{image_captioning_forward.1} parent=1 // pred_check_branch
      %25 = sbr.rel (0) target = $region5
    $region4: #{image_captioning_forward.1} parent=1 // pred_region
      _
    $region5: #{image_captioning_forward.1} parent=1 // pred_fallthru
      _
    // Predicated region
    $region6: #{image_captioning_forward.1} parent=1 // pred_check
      _
    $region7: #{image_captioning_forward.1} parent=1 // pred_check_branch
      %27 = sbr.rel (0) target = $region9
    $region8: #{image_captioning_forward.1} parent=1 // pred_region
      _
    $region9: #{image_captioning_forward.1} parent=1 // pred_fallthru
      _
    // Predicated region
    $region10: #{image_captioning_forward.1} parent=1 // pred_check
      _
    $region11: #{image_captioning_forward.1} parent=1 // pred_check_branch
      %29 = sbr.rel (0) target = $region13
    $region12: #{image_captioning_forward.1} parent=1 // pred_region
      _
    $region13: #{image_captioning_forward.1} parent=1 // pred_fallthru
      _
    // Predicated region
    $region14: #{image_captioning_forward.1} parent=1 // pred_check
      _
    $region15: #{image_captioning_forward.1} parent=1 // pred_check_branch
      %31 = sbr.rel (0) target = $region17
    $region16: #{image_captioning_forward.1} parent=1 // pred_region
      _
    $region17: #{image_captioning_forward.1} parent=1 // pred_fallthru
      _
    // Predicated region
    $region18: #{image_captioning_forward.1} parent=1 // pred_check
      _
    $region19: #{image_captioning_forward.1} parent=1 // pred_check_branch
      %33 = sbr.rel (0) target = $region21
    $region20: #{image_captioning_forward.1} parent=1 // pred_region
      _
    $region21: #{image_captioning_forward.1} parent=1 // pred_fallthru
      _
    // Predicated region
    $region22: #{image_captioning_forward.1} parent=1 // pred_check
      _
    $region23: #{image_captioning_forward.1} parent=1 // pred_check_branch
      %35 = sbr.rel (0) target = $region25
    $region24: #{image_captioning_forward.1} parent=1 // pred_region
      _
    $region25: #{image_captioning_forward.1} parent=1 // pred_fallthru
      _
    // Predicated region
    $region26: #{image_captioning_forward.1} parent=1 // pred_check
      _
    $region27: #{image_captioning_forward.1} parent=1 // pred_check_branch
      %37 = sbr.rel (0) target = $region29
    $region28: #{image_captioning_forward.1} parent=1 // pred_region
      _
    $region29: #{image_captioning_forward.1} parent=1 // pred_fallthru
      _
    // Predicated region
    $region30: #{image_captioning_forward.1} parent=1 // pred_check
      _
    $region31: #{image_captioning_forward.1} parent=1 // pred_check_branch
      %39 = sbr.rel (0) target = $region33
    $region32: #{image_captioning_forward.1} parent=1 // pred_region
      _
    $region33: #{image_captioning_forward.1} parent=1 // pred_fallthru
      _
    // Predicated region
    $region34: #{image_captioning_forward.1} parent=1 // pred_check
      _
    $region35: #{image_captioning_forward.1} parent=1 // pred_check_branch
      %41 = sbr.rel (0) target = $region37
    $region36: #{image_captioning_forward.1} parent=1 // pred_region
      _
    $region37: #{image_captioning_forward.1} parent=1 // pred_fallthru
      _
    // Predicated region
    $region38: #{image_captioning_forward.1} parent=1 // pred_check
      _
    $region39: #{image_captioning_forward.1} parent=1 // pred_check_branch
      %43 = sbr.rel (0) target = $region41
    $region40: #{image_captioning_forward.1} parent=1 // pred_region
      _
    $region41: #{image_captioning_forward.1} parent=1 // pred_fallthru
      _
    // Predicated region
    $region42: #{image_captioning_forward.1} parent=1 // pred_check
      _
    $region43: #{image_captioning_forward.1} parent=1 // pred_check_branch
      %45 = sbr.rel (0) target = $region45
    $region44: #{image_captioning_forward.1} parent=1 // pred_region
      _
    $region45: #{image_captioning_forward.1} parent=1 // pred_fallthru
      _
    // Predicated region
    $region46: #{image_captioning_forward.1} parent=1 // pred_check
      _
    $region47: #{image_captioning_forward.1} parent=1 // pred_check_branch
      %47 = sbr.rel (0) target = $region49
    $region48: #{image_captioning_forward.1} parent=1 // pred_region
      _
    $region49: #{image_captioning_forward.1} parent=1 // pred_fallthru
      _
    // Predicated region
    $region50: #{image_captioning_forward.1} parent=1 // pred_check
      _
    $region51: #{image_captioning_forward.1} parent=1 // pred_check_branch
      %49 = sbr.rel (0) target = $region53
    $region52: #{image_captioning_forward.1} parent=1 // pred_region
      _
    $region53: #{image_captioning_forward.1} parent=1 // pred_fallthru
      _
    // Predicated region
    $region54: #{image_captioning_forward.1} parent=1 // pred_check
      _
    $region55: #{image_captioning_forward.1} parent=1 // pred_check_branch
      %51 = sbr.rel (0) target = $region57
    $region56: #{image_captioning_forward.1} parent=1 // pred_region
      _
    $region57: #{image_captioning_forward.1} parent=1 // pred_fallthru
      _
    // Predicated region
    $region58: #{image_captioning_forward.1} parent=1 // pred_check
      _
    $region59: #{image_captioning_forward.1} parent=1 // pred_check_branch
      %53 = sbr.rel (0) target = $region61
    $region60: #{image_captioning_forward.1} parent=1 // pred_region
      _
    $region61: #{image_captioning_forward.1} parent=1 // pred_fallthru
      _
    // Predicated region
    $region62: #{image_captioning_forward.1} parent=1 // pred_check
      _
    $region63: #{image_captioning_forward.1} parent=1 // pred_check_branch
      %55 = sbr.rel (0) target = $region65
    $region64: #{image_captioning_forward.1} parent=1 // pred_region
      _
    $region65: #{image_captioning_forward.1} parent=1 // pred_fallthru
      _
    // Predicated region
    $region66: #{image_captioning_forward.1} parent=1 // pred_check
      _
    $region67: #{image_captioning_forward.1} parent=1 // pred_check_branch
      %57 = sbr.rel (0) target = $region69
    $region68: #{image_captioning_forward.1} parent=1 // pred_region
      _
    $region69: #{image_captioning_forward.1} parent=1 // pred_fallthru
      _
    // Predicated region
    $region70: #{image_captioning_forward.1} parent=1 // pred_check
      _
    $region71: #{image_captioning_forward.1} parent=1 // pred_check_branch
      %59 = sbr.rel (0) target = $region73
    $region72: #{image_captioning_forward.1} parent=1 // pred_region
      _
    $region73: #{image_captioning_forward.1} parent=1 // pred_fallthru
      _
    %v60 = vld [vmem:[%s1] sm:$0xff]
    %62 = vst [vmem:[#allocation1] ss:$2 sm:$0xff] %v60
    %v63 = vld.sshfl [vmem:[#allocation1] sm:$0xff pattern:$0x75316420]
    %v64 = vld.sshfl [vmem:[#allocation1 + $0x8] sm:$0xff pattern:$0x75316420]
    %vm67 = vcmask 1043456
    %v68 = vsel %vm67, %v63, 0.0
    %v69 = vsel %vm67, %v64, 0.0
    %v70 = vadd.f32 %v68, %v69
    %71 = vadd.xlane.f32.xlu0 %v70
    %v72 = vpop.xlane.xlu0 %71
    %v73 = vrcp.pop 256.0
    %v74 = vmul.f32 256.0, %v73
    %v75 = vsub.f32 1.0, %v74
    %v76 = vmul.f32 %v73, %v75
    %v77 = vadd.f32 %v73, %v76
    %vm78 = vweird.f32 %v73
    %v79 = vsel %vm78, %v73, %v77
    %v80 = vmul.f32 %v72, %v79
    %v81 = vld [vmem:[%s2] sm:$0xf]
    %v82 = vmul.f32 %v80, %v81
    %vm83 = vcmask 257024
    %v84 = vsel %vm83, %v82, 0.0
    %v85 = vrot.slane %v84, 4
    %v86 = vadd.f32 %v84, %v85
    %v87 = vrot.slane %v86, 2
    %v88 = vadd.f32 %v86, %v87
    %v89 = vrot.slane %v88, 1
    %v90 = vadd.f32 %v88, %v89
    %s91 = scalar_lea.vmem %s1, 8
    %v92 = vld [vmem:[%s91] sm:$0xff]
    %94 = vst [vmem:[#allocation1] ss:$2 sm:$0xff] %v92
    %v95 = vld.sshfl [vmem:[#allocation1] sm:$0xff pattern:$0x75316420]
    %v96 = vld.sshfl [vmem:[#allocation1 + $0x8] sm:$0xff pattern:$0x75316420]
    %v99 = vsel %vm67, %v95, 0.0
    %v100 = vsel %vm67, %v96, 0.0
    %v101 = vadd.f32 %v99, %v100
    %102 = vadd.xlane.f32.xlu0 %v101
    %v103 = vpop.xlane.xlu0 %102
    %v104 = vmul.f32 %v103, %v79
    %v105 = vmul.f32 %v104, %v81
    %v106 = vsel %vm83, %v105, 0.0
    %v107 = vrot.slane %v106, 4
    %v108 = vadd.f32 %v106, %v107
    %v109 = vrot.slane %v108, 2
    %v110 = vadd.f32 %v108, %v109
    %v111 = vrot.slane %v110, 1
    %v112 = vadd.f32 %v110, %v111
    %vm113 = vcmask 1040384
    %v114 = vsel %vm113, %v90, %v112
    %v115 = vld [vmem:[%s3] sm:$0x1]
    %v117 = vperm.slane %v115, 0
    %v119 = vadd.f32 %v114, %v117
    %v120 = vperm.slane %v119, 0
    %v121 = vperm.slane %v119, 1
    %v122 = vld [vmem:[%s8] sm:$0xff]
    %v123 = vld [vmem:[%s8 + $0x8] sm:$0xff]
    %v124 = vld [vmem:[%s8 + $0x10] sm:$0xff]
    %v125 = vld [vmem:[%s8 + $0x18] sm:$0xff]
    %v126 = vld [vmem:[%s9] sm:$0x1]
    %v128 = vperm.slane %v126, 0
    %vm130 = vcmask 261120
    %v132 = vsel %vm130, %v120, 0
    %v135 = vsel %vm130, %v121, 0
    %137 = vmatpush.msra.mxu0 0.0
    %138 = vmatpush.msra.mxu0 0.0
    %139 = vmatpush.msra.mxu0 0.0
    %140 = vmatpush.msra.mxu0 0.0
    %141 = vmatpush.msra.mxu0 0.0
    %142 = vmatpush.msra.mxu0 0.0
    %143 = vmatpush.msra.mxu0 0.0
    %144 = vmatpush.msra.mxu0 0.0
    %145 = vmatpush.msra.mxu0 0.0
    %146 = vmatpush.msra.mxu0 0.0
    %147 = vmatpush.msra.mxu0 0.0
    %148 = vmatpush.msra.mxu0 0.0
    %149 = vmatpush.msra.mxu0 %v125
    %150 = vmatpush.msra.mxu0 %v124
    %151 = vmatpush.msra.mxu0 %v123
    %152 = vmatpush.msra.mxu0 %v122
    %153 = vmatmul.f32.gmra.mxu0 %v132
    %v154 = vpop.f32.mrf.mxu0
    %v155 = vadd.f32 %v128, %v154
    %156 = vmatmul.f32.gmra.mxu0 %v135
    %v157 = vpop.f32.mrf.mxu0
    %v158 = vadd.f32 %v128, %v157
    %159 = vdwg.mxu0
    %s160 = scalar_lea.vmem %s8, 32
    %v161 = vld [vmem:[%s160] sm:$0xff]
    %v162 = vld [vmem:[%s160 + $0x8] sm:$0xff]
    %v163 = vld [vmem:[%s160 + $0x10] sm:$0xff]
    %v164 = vld [vmem:[%s160 + $0x18] sm:$0xff]
    %s165 = scalar_lea.vmem %s9, 1
    %v166 = vld [vmem:[%s165] sm:$0x1]
    %v168 = vperm.slane %v166, 0
    %170 = vmatpush.msra.mxu0 0.0
    %171 = vmatpush.msra.mxu0 0.0
    %172 = vmatpush.msra.mxu0 0.0
    %173 = vmatpush.msra.mxu0 0.0
    %174 = vmatpush.msra.mxu0 0.0
    %175 = vmatpush.msra.mxu0 0.0
    %176 = vmatpush.msra.mxu0 0.0
    %177 = vmatpush.msra.mxu0 0.0
    %178 = vmatpush.msra.mxu0 0.0
    %179 = vmatpush.msra.mxu0 0.0
    %180 = vmatpush.msra.mxu0 0.0
    %181 = vmatpush.msra.mxu0 0.0
    %182 = vmatpush.msra.mxu0 %v164
    %183 = vmatpush.msra.mxu0 %v163
    %184 = vmatpush.msra.mxu0 %v162
    %185 = vmatpush.msra.mxu0 %v161
    %186 = vmatmul.f32.gmra.mxu0 %v132
    %v187 = vpop.f32.mrf.mxu0
    %v188 = vadd.f32 %v168, %v187
    %189 = vmatmul.f32.gmra.mxu0 %v135
    %v190 = vpop.f32.mrf.mxu0
    %v191 = vadd.f32 %v168, %v190
    %192 = vdwg.mxu0
    %v193 = vlaneseq
    %v194 = vshrl.u32 %v193, 7
    %v195 = vlaneseq
    %v196 = vand.u32 %v195, 127
    %vm197 = vcmp.le.s32.totalorder %v196, %v194
    %v198 = vld [vmem:[%s0] sm:$0xff]
    %v199 = vld [vmem:[%s0 + $0x8] sm:$0xff]
    %v200 = vld [vmem:[%s4] sm:$0xff]
    %v201 = vld [vmem:[%s4 + $0x8] sm:$0xff]
    %v202 = vld [vmem:[%s4 + $0x10] sm:$0xff]
    %v203 = vld [vmem:[%s4 + $0x18] sm:$0xff]
    %v204 = vld [vmem:[%s5] sm:$0x1]
    %v205 = vld [vmem:[%s6] sm:$0xff]
    %v206 = vld [vmem:[%s6 + $0x8] sm:$0xff]
    %v207 = vld [vmem:[%s6 + $0x10] sm:$0xff]
    %v208 = vld [vmem:[%s6 + $0x18] sm:$0xff]
    %v209 = vld [vmem:[%s7] sm:$0x1]
    %v210 = vld [vmem:[%s10] sm:$0xff]
    %v211 = vld [vmem:[%s10 + $0x8] sm:$0xff]
    %v212 = vld [vmem:[%s10 + $0x10] sm:$0xff]
    %v213 = vld [vmem:[%s10 + $0x18] sm:$0xff]
    %v214 = vld [vmem:[%s11] sm:$0x1]
    %v215 = vld [vmem:[%s12] sm:$0xff]
    %v216 = vld [vmem:[%s12 + $0x8] sm:$0xff]
    %v217 = vld [vmem:[%s12 + $0x10] sm:$0xff]
    %v218 = vld [vmem:[%s12 + $0x18] sm:$0xff]
    %v219 = vld [vmem:[%s12 + $0x20] sm:$0xff]
    %v220 = vld [vmem:[%s12 + $0x28] sm:$0xff]
    %v221 = vld [vmem:[%s12 + $0x30] sm:$0xff]
    %v222 = vld [vmem:[%s12 + $0x38] sm:$0xff]
    %v223 = vld [vmem:[%s13] sm:$0x1]
    %v224 = vld [vmem:[%s14] sm:$0x7]
    %v225 = vld [vmem:[%s15] sm:$0x7]
    %v227 = vperm.slane %v204, 0
    %v230 = vsel %vm130, %v198, 0
    %v233 = vsel %vm130, %v199, 0
    %235 = vmatpush.msra.mxu0 0.0
    %236 = vmatpush.msra.mxu0 0.0
    %237 = vmatpush.msra.mxu0 0.0
    %238 = vmatpush.msra.mxu0 0.0
    %239 = vmatpush.msra.mxu0 0.0
    %240 = vmatpush.msra.mxu0 0.0
    %241 = vmatpush.msra.mxu0 0.0
    %242 = vmatpush.msra.mxu0 0.0
    %243 = vmatpush.msra.mxu0 0.0
    %244 = vmatpush.msra.mxu0 0.0
    %245 = vmatpush.msra.mxu0 0.0
    %246 = vmatpush.msra.mxu0 0.0
    %247 = vmatpush.msra.mxu0 %v203
    %248 = vmatpush.msra.mxu0 %v202
    %249 = vmatpush.msra.mxu0 %v201
    %250 = vmatpush.msra.mxu0 %v200
    %251 = vmatmul.f32.gmra.mxu0 %v230
    %v252 = vpop.f32.mrf.mxu0
    %v253 = vadd.f32 %v227, %v252
    %254 = vmatmul.f32.gmra.mxu0 %v233
    %v255 = vpop.f32.mrf.mxu0
    %v256 = vadd.f32 %v227, %v255
    %257 = vdwg.mxu0
    %259 = vrot.lane.b32.xlu0 %v253, 96
    %v260 = vpop.permute.xlu0 %259
    %vm261 = vcmask 64512
    %v262 = vsel %vm261, %v253, 0
    %v264 = vsel %vm261, %v260, 0
    %266 = vmatpush.xpose.msra.mxu0 0.0
    %267 = vmatpush.xpose.msra.mxu0 0.0
    %268 = vmatpush.xpose.msra.mxu0 0.0
    %269 = vmatpush.xpose.msra.mxu0 0.0
    %270 = vmatpush.xpose.msra.mxu0 0.0
    %271 = vmatpush.xpose.msra.mxu0 0.0
    %272 = vmatpush.xpose.msra.mxu0 0.0
    %273 = vmatpush.xpose.msra.mxu0 0.0
    %274 = vmatpush.xpose.msra.mxu0 0.0
    %275 = vmatpush.xpose.msra.mxu0 0.0
    %276 = vmatpush.xpose.msra.mxu0 0.0
    %277 = vmatpush.xpose.msra.mxu0 0.0
    %278 = vmatpush.xpose.msra.mxu0 0.0
    %279 = vmatpush.xpose.msra.mxu0 0.0
    %280 = vmatpush.xpose.msra.mxu0 0.0
    %281 = vmatpush.xpose.msra.mxu0 %v264
    %282 = vmatmul.f32.gmra.mxu0 %v262
    %v283 = vpop.f32.mrf.mxu0
    %v284 = vadd.f32 0.0, %v283
    %285 = vdwg.mxu0
    %v286 = vsel %vm197, %v284, -inf
    %v287 = vsel %vm261, %v286, -inf
    %288 = vmax.xlane.f32.xlu0 %v287
    %v289 = vpop.xlane.xlu0 %288
    %v290 = vsub.f32 %v286, %v289
    %v291 = vmul.f32 %v290, 1.442695
    %v292 = vpow.pop %v291
    %v293 = vsel %vm261, %v292, 0.0
    %294 = vadd.xlane.f32.xlu0 %v293
    %v295 = vpop.xlane.xlu0 %294
    %v296 = vrcp.pop %v295
    %v297 = vmul.f32 %v292, %v296
    %298 = vrot.lane.b32.xlu0 %v253, 64
    %v299 = vpop.permute.xlu0 %298
    %v302 = vsel %vm261, %v297, 0
    %304 = vmatpush.msra.mxu0 0.0
    %305 = vmatpush.msra.mxu0 0.0
    %306 = vmatpush.msra.mxu0 0.0
    %307 = vmatpush.msra.mxu0 0.0
    %308 = vmatpush.msra.mxu0 0.0
    %309 = vmatpush.msra.mxu0 0.0
    %310 = vmatpush.msra.mxu0 0.0
    %311 = vmatpush.msra.mxu0 0.0
    %312 = vmatpush.msra.mxu0 0.0
    %313 = vmatpush.msra.mxu0 0.0
    %314 = vmatpush.msra.mxu0 0.0
    %315 = vmatpush.msra.mxu0 0.0
    %316 = vmatpush.msra.mxu0 0.0
    %317 = vmatpush.msra.mxu0 0.0
    %318 = vmatpush.msra.mxu0 0.0
    %319 = vmatpush.msra.mxu0 %v299
    %320 = vmatmul.f32.gmra.mxu0 %v302
    %v321 = vpop.f32.mrf.mxu0
    %v322 = vadd.f32 0.0, %v321
    %323 = vdwg.mxu0
    %324 = vrot.lane.b32.xlu0 %v253, 120
    %v325 = vpop.permute.xlu0 %324
    %326 = vrot.lane.b32.xlu0 %v253, 88
    %v327 = vpop.permute.xlu0 %326
    %v328 = vsel %vm261, %v325, 0
    %v330 = vsel %vm261, %v327, 0
    %332 = vmatpush.xpose.msra.mxu0 0.0
    %333 = vmatpush.xpose.msra.mxu0 0.0
    %334 = vmatpush.xpose.msra.mxu0 0.0
    %335 = vmatpush.xpose.msra.mxu0 0.0
    %336 = vmatpush.xpose.msra.mxu0 0.0
    %337 = vmatpush.xpose.msra.mxu0 0.0
    %338 = vmatpush.xpose.msra.mxu0 0.0
    %339 = vmatpush.xpose.msra.mxu0 0.0
    %340 = vmatpush.xpose.msra.mxu0 0.0
    %341 = vmatpush.xpose.msra.mxu0 0.0
    %342 = vmatpush.xpose.msra.mxu0 0.0
    %343 = vmatpush.xpose.msra.mxu0 0.0
    %344 = vmatpush.xpose.msra.mxu0 0.0
    %345 = vmatpush.xpose.msra.mxu0 0.0
    %346 = vmatpush.xpose.msra.mxu0 0.0
    %347 = vmatpush.xpose.msra.mxu0 %v330
    %348 = vmatmul.f32.gmra.mxu0 %v328
    %v349 = vpop.f32.mrf.mxu0
    %v350 = vadd.f32 0.0, %v349
    %351 = vdwg.mxu0
    %v352 = vsel %vm197, %v350, -inf
    %v353 = vsel %vm261, %v352, -inf
    %354 = vmax.xlane.f32.xlu0 %v353
    %v355 = vpop.xlane.xlu0 %354
    %v356 = vsub.f32 %v352, %v355
    %v357 = vmul.f32 %v356, 1.442695
    %v358 = vpow.pop %v357
    %v359 = vsel %vm261, %v358, 0.0
    %360 = vadd.xlane.f32.xlu0 %v359
    %v361 = vpop.xlane.xlu0 %360
    %v362 = vrcp.pop %v361
    %v363 = vmul.f32 %v358, %v362
    %364 = vrot.lane.b32.xlu0 %v253, 56
    %v365 = vpop.permute.xlu0 %364
    %v368 = vsel %vm261, %v363, 0
    %370 = vmatpush.msra.mxu0 0.0
    %371 = vmatpush.msra.mxu0 0.0
    %372 = vmatpush.msra.mxu0 0.0
    %373 = vmatpush.msra.mxu0 0.0
    %374 = vmatpush.msra.mxu0 0.0
    %375 = vmatpush.msra.mxu0 0.0
    %376 = vmatpush.msra.mxu0 0.0
    %377 = vmatpush.msra.mxu0 0.0
    %378 = vmatpush.msra.mxu0 0.0
    %379 = vmatpush.msra.mxu0 0.0
    %380 = vmatpush.msra.mxu0 0.0
    %381 = vmatpush.msra.mxu0 0.0
    %382 = vmatpush.msra.mxu0 0.0
    %383 = vmatpush.msra.mxu0 0.0
    %384 = vmatpush.msra.mxu0 0.0
    %385 = vmatpush.msra.mxu0 %v365
    %386 = vmatmul.f32.gmra.mxu0 %v368
    %v387 = vpop.f32.mrf.mxu0
    %v388 = vadd.f32 0.0, %v387
    %389 = vdwg.mxu0
    %v391 = vsel %vm261, %v388, 0
    %393 = vmatpush.msra.mxu0 0.0
    %394 = vmatpush.msra.mxu0 0.0
    %395 = vmatpush.msra.mxu0 0.0
    %396 = vmatpush.msra.mxu0 0.0
    %397 = vmatpush.msra.mxu0 0.0
    %398 = vmatpush.msra.mxu0 0.0
    %399 = vmatpush.msra.mxu0 0.0
    %400 = vmatpush.msra.mxu0 0.0
    %401 = vmatpush.msra.mxu0 0.0
    %402 = vmatpush.msra.mxu0 0.0
    %403 = vmatpush.msra.mxu0 0.0
    %404 = vmatpush.msra.mxu0 0.0
    %405 = vmatpush.msra.mxu0 0.0
    %406 = vmatpush.msra.mxu0 0.0
    %407 = vmatpush.msra.mxu0 0.0
    %408 = vmatpush.msra.mxu0 %v206
    %409 = vmatmul.f32.gmra.mxu0 %v391
    %v410 = vpop.f32.mrf.mxu0
    %v411 = vadd.f32 0.0, %v410
    %412 = vdwg.mxu0
    %v414 = vsel %vm261, %v322, 0
    %416 = vmatpush.msra.mxu0 0.0
    %417 = vmatpush.msra.mxu0 0.0
    %418 = vmatpush.msra.mxu0 0.0
    %419 = vmatpush.msra.mxu0 0.0
    %420 = vmatpush.msra.mxu0 0.0
    %421 = vmatpush.msra.mxu0 0.0
    %422 = vmatpush.msra.mxu0 0.0
    %423 = vmatpush.msra.mxu0 0.0
    %424 = vmatpush.msra.mxu0 0.0
    %425 = vmatpush.msra.mxu0 0.0
    %426 = vmatpush.msra.mxu0 0.0
    %427 = vmatpush.msra.mxu0 0.0
    %428 = vmatpush.msra.mxu0 0.0
    %429 = vmatpush.msra.mxu0 0.0
    %430 = vmatpush.msra.mxu0 0.0
    %431 = vmatpush.msra.mxu0 %v205
    %432 = vmatmul.f32.gmra.mxu0 %v414
    %v433 = vpop.f32.mrf.mxu0
    %v434 = vadd.f32 %v411, %v433
    %435 = vdwg.mxu0
    %436 = vrot.lane.b32.xlu0 %v253, 112
    %v437 = vpop.permute.xlu0 %436
    %438 = vrot.lane.b32.xlu0 %v253, 80
    %v439 = vpop.permute.xlu0 %438
    %v440 = vsel %vm261, %v437, 0
    %v442 = vsel %vm261, %v439, 0
    %444 = vmatpush.xpose.msra.mxu0 0.0
    %445 = vmatpush.xpose.msra.mxu0 0.0
    %446 = vmatpush.xpose.msra.mxu0 0.0
    %447 = vmatpush.xpose.msra.mxu0 0.0
    %448 = vmatpush.xpose.msra.mxu0 0.0
    %449 = vmatpush.xpose.msra.mxu0 0.0
    %450 = vmatpush.xpose.msra.mxu0 0.0
    %451 = vmatpush.xpose.msra.mxu0 0.0
    %452 = vmatpush.xpose.msra.mxu0 0.0
    %453 = vmatpush.xpose.msra.mxu0 0.0
    %454 = vmatpush.xpose.msra.mxu0 0.0
    %455 = vmatpush.xpose.msra.mxu0 0.0
    %456 = vmatpush.xpose.msra.mxu0 0.0
    %457 = vmatpush.xpose.msra.mxu0 0.0
    %458 = vmatpush.xpose.msra.mxu0 0.0
    %459 = vmatpush.xpose.msra.mxu0 %v442
    %460 = vmatmul.f32.gmra.mxu0 %v440
    %v461 = vpop.f32.mrf.mxu0
    %v462 = vadd.f32 0.0, %v461
    %463 = vdwg.mxu0
    %v464 = vsel %vm197, %v462, -inf
    %v465 = vsel %vm261, %v464, -inf
    %466 = vmax.xlane.f32.xlu0 %v465
    %v467 = vpop.xlane.xlu0 %466
    %v468 = vsub.f32 %v464, %v467
    %v469 = vmul.f32 %v468, 1.442695
    %v470 = vpow.pop %v469
    %v471 = vsel %vm261, %v470, 0.0
    %472 = vadd.xlane.f32.xlu0 %v471
    %v473 = vpop.xlane.xlu0 %472
    %v474 = vrcp.pop %v473
    %v475 = vmul.f32 %v470, %v474
    %476 = vrot.lane.b32.xlu0 %v253, 48
    %v477 = vpop.permute.xlu0 %476
    %v480 = vsel %vm261, %v475, 0
    %482 = vmatpush.msra.mxu0 0.0
    %483 = vmatpush.msra.mxu0 0.0
    %484 = vmatpush.msra.mxu0 0.0
    %485 = vmatpush.msra.mxu0 0.0
    %486 = vmatpush.msra.mxu0 0.0
    %487 = vmatpush.msra.mxu0 0.0
    %488 = vmatpush.msra.mxu0 0.0
    %489 = vmatpush.msra.mxu0 0.0
    %490 = vmatpush.msra.mxu0 0.0
    %491 = vmatpush.msra.mxu0 0.0
    %492 = vmatpush.msra.mxu0 0.0
    %493 = vmatpush.msra.mxu0 0.0
    %494 = vmatpush.msra.mxu0 0.0
    %495 = vmatpush.msra.mxu0 0.0
    %496 = vmatpush.msra.mxu0 0.0
    %497 = vmatpush.msra.mxu0 %v477
    %498 = vmatmul.f32.gmra.mxu0 %v480
    %v499 = vpop.f32.mrf.mxu0
    %v500 = vadd.f32 0.0, %v499
    %501 = vdwg.mxu0
    %v503 = vsel %vm261, %v500, 0
    %505 = vmatpush.msra.mxu0 0.0
    %506 = vmatpush.msra.mxu0 0.0
    %507 = vmatpush.msra.mxu0 0.0
    %508 = vmatpush.msra.mxu0 0.0
    %509 = vmatpush.msra.mxu0 0.0
    %510 = vmatpush.msra.mxu0 0.0
    %511 = vmatpush.msra.mxu0 0.0
    %512 = vmatpush.msra.mxu0 0.0
    %513 = vmatpush.msra.mxu0 0.0
    %514 = vmatpush.msra.mxu0 0.0
    %515 = vmatpush.msra.mxu0 0.0
    %516 = vmatpush.msra.mxu0 0.0
    %517 = vmatpush.msra.mxu0 0.0
    %518 = vmatpush.msra.mxu0 0.0
    %519 = vmatpush.msra.mxu0 0.0
    %520 = vmatpush.msra.mxu0 %v207
    %521 = vmatmul.f32.gmra.mxu0 %v503
    %v522 = vpop.f32.mrf.mxu0
    %v523 = vadd.f32 0.0, %v522
    %524 = vdwg.mxu0
    %v525 = vadd.f32 %v434, %v523
    %526 = vrot.lane.b32.xlu0 %v253, 104
    %v527 = vpop.permute.xlu0 %526
    %528 = vrot.lane.b32.xlu0 %v253, 72
    %v529 = vpop.permute.xlu0 %528
    %v530 = vsel %vm261, %v527, 0
    %v532 = vsel %vm261, %v529, 0
    %534 = vmatpush.xpose.msra.mxu0 0.0
    %535 = vmatpush.xpose.msra.mxu0 0.0
    %536 = vmatpush.xpose.msra.mxu0 0.0
    %537 = vmatpush.xpose.msra.mxu0 0.0
    %538 = vmatpush.xpose.msra.mxu0 0.0
    %539 = vmatpush.xpose.msra.mxu0 0.0
    %540 = vmatpush.xpose.msra.mxu0 0.0
    %541 = vmatpush.xpose.msra.mxu0 0.0
    %542 = vmatpush.xpose.msra.mxu0 0.0
    %543 = vmatpush.xpose.msra.mxu0 0.0
    %544 = vmatpush.xpose.msra.mxu0 0.0
    %545 = vmatpush.xpose.msra.mxu0 0.0
    %546 = vmatpush.xpose.msra.mxu0 0.0
    %547 = vmatpush.xpose.msra.mxu0 0.0
    %548 = vmatpush.xpose.msra.mxu0 0.0
    %549 = vmatpush.xpose.msra.mxu0 %v532
    %550 = vmatmul.f32.gmra.mxu0 %v530
    %v551 = vpop.f32.mrf.mxu0
    %v552 = vadd.f32 0.0, %v551
    %553 = vdwg.mxu0
    %v554 = vsel %vm197, %v552, -inf
    %v555 = vsel %vm261, %v554, -inf
    %556 = vmax.xlane.f32.xlu0 %v555
    %v557 = vpop.xlane.xlu0 %556
    %v558 = vsub.f32 %v554, %v557
    %v559 = vmul.f32 %v558, 1.442695
    %v560 = vpow.pop %v559
    %v561 = vsel %vm261, %v560, 0.0
    %562 = vadd.xlane.f32.xlu0 %v561
    %v563 = vpop.xlane.xlu0 %562
    %v564 = vrcp.pop %v563
    %v565 = vmul.f32 %v560, %v564
    %566 = vrot.lane.b32.xlu0 %v253, 40
    %v567 = vpop.permute.xlu0 %566
    %v570 = vsel %vm261, %v565, 0
    %572 = vmatpush.msra.mxu0 0.0
    %573 = vmatpush.msra.mxu0 0.0
    %574 = vmatpush.msra.mxu0 0.0
    %575 = vmatpush.msra.mxu0 0.0
    %576 = vmatpush.msra.mxu0 0.0
    %577 = vmatpush.msra.mxu0 0.0
    %578 = vmatpush.msra.mxu0 0.0
    %579 = vmatpush.msra.mxu0 0.0
    %580 = vmatpush.msra.mxu0 0.0
    %581 = vmatpush.msra.mxu0 0.0
    %582 = vmatpush.msra.mxu0 0.0
    %583 = vmatpush.msra.mxu0 0.0
    %584 = vmatpush.msra.mxu0 0.0
    %585 = vmatpush.msra.mxu0 0.0
    %586 = vmatpush.msra.mxu0 0.0
    %587 = vmatpush.msra.mxu0 %v567
    %588 = vmatmul.f32.gmra.mxu0 %v570
    %v589 = vpop.f32.mrf.mxu0
    %v590 = vadd.f32 0.0, %v589
    %591 = vdwg.mxu0
    %v593 = vsel %vm261, %v590, 0
    %595 = vmatpush.msra.mxu0 0.0
    %596 = vmatpush.msra.mxu0 0.0
    %597 = vmatpush.msra.mxu0 0.0
    %598 = vmatpush.msra.mxu0 0.0
    %599 = vmatpush.msra.mxu0 0.0
    %600 = vmatpush.msra.mxu0 0.0
    %601 = vmatpush.msra.mxu0 0.0
    %602 = vmatpush.msra.mxu0 0.0
    %603 = vmatpush.msra.mxu0 0.0
    %604 = vmatpush.msra.mxu0 0.0
    %605 = vmatpush.msra.mxu0 0.0
    %606 = vmatpush.msra.mxu0 0.0
    %607 = vmatpush.msra.mxu0 0.0
    %608 = vmatpush.msra.mxu0 0.0
    %609 = vmatpush.msra.mxu0 0.0
    %610 = vmatpush.msra.mxu0 %v208
    %611 = vmatmul.f32.gmra.mxu0 %v593
    %v612 = vpop.f32.mrf.mxu0
    %v613 = vadd.f32 0.0, %v612
    %614 = vdwg.mxu0
    %v615 = vadd.f32 %v525, %v613
    %617 = vrot.lane.b32.xlu0 %v256, 96
    %v618 = vpop.permute.xlu0 %617
    %v619 = vsel %vm261, %v256, 0
    %v621 = vsel %vm261, %v618, 0
    %623 = vmatpush.xpose.msra.mxu0 0.0
    %624 = vmatpush.xpose.msra.mxu0 0.0
    %625 = vmatpush.xpose.msra.mxu0 0.0
    %626 = vmatpush.xpose.msra.mxu0 0.0
    %627 = vmatpush.xpose.msra.mxu0 0.0
    %628 = vmatpush.xpose.msra.mxu0 0.0
    %629 = vmatpush.xpose.msra.mxu0 0.0
    %630 = vmatpush.xpose.msra.mxu0 0.0
    %631 = vmatpush.xpose.msra.mxu0 0.0
    %632 = vmatpush.xpose.msra.mxu0 0.0
    %633 = vmatpush.xpose.msra.mxu0 0.0
    %634 = vmatpush.xpose.msra.mxu0 0.0
    %635 = vmatpush.xpose.msra.mxu0 0.0
    %636 = vmatpush.xpose.msra.mxu0 0.0
    %637 = vmatpush.xpose.msra.mxu0 0.0
    %638 = vmatpush.xpose.msra.mxu0 %v621
    %639 = vmatmul.f32.gmra.mxu0 %v619
    %v640 = vpop.f32.mrf.mxu0
    %v641 = vadd.f32 0.0, %v640
    %642 = vdwg.mxu0
    %v643 = vsel %vm197, %v641, -inf
    %v644 = vsel %vm261, %v643, -inf
    %645 = vmax.xlane.f32.xlu0 %v644
    %v646 = vpop.xlane.xlu0 %645
    %v647 = vsub.f32 %v643, %v646
    %v648 = vmul.f32 %v647, 1.442695
    %v649 = vpow.pop %v648
    %v650 = vsel %vm261, %v649, 0.0
    %651 = vadd.xlane.f32.xlu0 %v650
    %v652 = vpop.xlane.xlu0 %651
    %v653 = vrcp.pop %v652
    %v654 = vmul.f32 %v649, %v653
    %655 = vrot.lane.b32.xlu0 %v256, 64
    %v656 = vpop.permute.xlu0 %655
    %v659 = vsel %vm261, %v654, 0
    %661 = vmatpush.msra.mxu0 0.0
    %662 = vmatpush.msra.mxu0 0.0
    %663 = vmatpush.msra.mxu0 0.0
    %664 = vmatpush.msra.mxu0 0.0
    %665 = vmatpush.msra.mxu0 0.0
    %666 = vmatpush.msra.mxu0 0.0
    %667 = vmatpush.msra.mxu0 0.0
    %668 = vmatpush.msra.mxu0 0.0
    %669 = vmatpush.msra.mxu0 0.0
    %670 = vmatpush.msra.mxu0 0.0
    %671 = vmatpush.msra.mxu0 0.0
    %672 = vmatpush.msra.mxu0 0.0
    %673 = vmatpush.msra.mxu0 0.0
    %674 = vmatpush.msra.mxu0 0.0
    %675 = vmatpush.msra.mxu0 0.0
    %676 = vmatpush.msra.mxu0 %v656
    %677 = vmatmul.f32.gmra.mxu0 %v659
    %v678 = vpop.f32.mrf.mxu0
    %v679 = vadd.f32 0.0, %v678
    %680 = vdwg.mxu0
    %681 = vrot.lane.b32.xlu0 %v256, 120
    %v682 = vpop.permute.xlu0 %681
    %683 = vrot.lane.b32.xlu0 %v256, 88
    %v684 = vpop.permute.xlu0 %683
    %v685 = vsel %vm261, %v682, 0
    %v687 = vsel %vm261, %v684, 0
    %689 = vmatpush.xpose.msra.mxu0 0.0
    %690 = vmatpush.xpose.msra.mxu0 0.0
    %691 = vmatpush.xpose.msra.mxu0 0.0
    %692 = vmatpush.xpose.msra.mxu0 0.0
    %693 = vmatpush.xpose.msra.mxu0 0.0
    %694 = vmatpush.xpose.msra.mxu0 0.0
    %695 = vmatpush.xpose.msra.mxu0 0.0
    %696 = vmatpush.xpose.msra.mxu0 0.0
    %697 = vmatpush.xpose.msra.mxu0 0.0
    %698 = vmatpush.xpose.msra.mxu0 0.0
    %699 = vmatpush.xpose.msra.mxu0 0.0
    %700 = vmatpush.xpose.msra.mxu0 0.0
    %701 = vmatpush.xpose.msra.mxu0 0.0
    %702 = vmatpush.xpose.msra.mxu0 0.0
    %703 = vmatpush.xpose.msra.mxu0 0.0
    %704 = vmatpush.xpose.msra.mxu0 %v687
    %705 = vmatmul.f32.gmra.mxu0 %v685
    %v706 = vpop.f32.mrf.mxu0
    %v707 = vadd.f32 0.0, %v706
    %708 = vdwg.mxu0
    %v709 = vsel %vm197, %v707, -inf
    %v710 = vsel %vm261, %v709, -inf
    %711 = vmax.xlane.f32.xlu0 %v710
    %v712 = vpop.xlane.xlu0 %711
    %v713 = vsub.f32 %v709, %v712
    %v714 = vmul.f32 %v713, 1.442695
    %v715 = vpow.pop %v714
    %v716 = vsel %vm261, %v715, 0.0
    %717 = vadd.xlane.f32.xlu0 %v716
    %v718 = vpop.xlane.xlu0 %717
    %v719 = vrcp.pop %v718
    %v720 = vmul.f32 %v715, %v719
    %721 = vrot.lane.b32.xlu0 %v256, 56
    %v722 = vpop.permute.xlu0 %721
    %v725 = vsel %vm261, %v720, 0
    %727 = vmatpush.msra.mxu0 0.0
    %728 = vmatpush.msra.mxu0 0.0
    %729 = vmatpush.msra.mxu0 0.0
    %730 = vmatpush.msra.mxu0 0.0
    %731 = vmatpush.msra.mxu0 0.0
    %732 = vmatpush.msra.mxu0 0.0
    %733 = vmatpush.msra.mxu0 0.0
    %734 = vmatpush.msra.mxu0 0.0
    %735 = vmatpush.msra.mxu0 0.0
    %736 = vmatpush.msra.mxu0 0.0
    %737 = vmatpush.msra.mxu0 0.0
    %738 = vmatpush.msra.mxu0 0.0
    %739 = vmatpush.msra.mxu0 0.0
    %740 = vmatpush.msra.mxu0 0.0
    %741 = vmatpush.msra.mxu0 0.0
    %742 = vmatpush.msra.mxu0 %v722
    %743 = vmatmul.f32.gmra.mxu0 %v725
    %v744 = vpop.f32.mrf.mxu0
    %v745 = vadd.f32 0.0, %v744
    %746 = vdwg.mxu0
    %v748 = vsel %vm261, %v745, 0
    %750 = vmatpush.msra.mxu0 0.0
    %751 = vmatpush.msra.mxu0 0.0
    %752 = vmatpush.msra.mxu0 0.0
    %753 = vmatpush.msra.mxu0 0.0
    %754 = vmatpush.msra.mxu0 0.0
    %755 = vmatpush.msra.mxu0 0.0
    %756 = vmatpush.msra.mxu0 0.0
    %757 = vmatpush.msra.mxu0 0.0
    %758 = vmatpush.msra.mxu0 0.0
    %759 = vmatpush.msra.mxu0 0.0
    %760 = vmatpush.msra.mxu0 0.0
    %761 = vmatpush.msra.mxu0 0.0
    %762 = vmatpush.msra.mxu0 0.0
    %763 = vmatpush.msra.mxu0 0.0
    %764 = vmatpush.msra.mxu0 0.0
    %765 = vmatpush.msra.mxu0 %v206
    %766 = vmatmul.f32.gmra.mxu0 %v748
    %v767 = vpop.f32.mrf.mxu0
    %v768 = vadd.f32 0.0, %v767
    %769 = vdwg.mxu0
    %v771 = vsel %vm261, %v679, 0
    %773 = vmatpush.msra.mxu0 0.0
    %774 = vmatpush.msra.mxu0 0.0
    %775 = vmatpush.msra.mxu0 0.0
    %776 = vmatpush.msra.mxu0 0.0
    %777 = vmatpush.msra.mxu0 0.0
    %778 = vmatpush.msra.mxu0 0.0
    %779 = vmatpush.msra.mxu0 0.0
    %780 = vmatpush.msra.mxu0 0.0
    %781 = vmatpush.msra.mxu0 0.0
    %782 = vmatpush.msra.mxu0 0.0
    %783 = vmatpush.msra.mxu0 0.0
    %784 = vmatpush.msra.mxu0 0.0
    %785 = vmatpush.msra.mxu0 0.0
    %786 = vmatpush.msra.mxu0 0.0
    %787 = vmatpush.msra.mxu0 0.0
    %788 = vmatpush.msra.mxu0 %v205
    %789 = vmatmul.f32.gmra.mxu0 %v771
    %v790 = vpop.f32.mrf.mxu0
    %v791 = vadd.f32 %v768, %v790
    %792 = vdwg.mxu0
    %793 = vrot.lane.b32.xlu0 %v256, 112
    %v794 = vpop.permute.xlu0 %793
    %795 = vrot.lane.b32.xlu0 %v256, 80
    %v796 = vpop.permute.xlu0 %795
    %v797 = vsel %vm261, %v794, 0
    %v799 = vsel %vm261, %v796, 0
    %801 = vmatpush.xpose.msra.mxu0 0.0
    %802 = vmatpush.xpose.msra.mxu0 0.0
    %803 = vmatpush.xpose.msra.mxu0 0.0
    %804 = vmatpush.xpose.msra.mxu0 0.0
    %805 = vmatpush.xpose.msra.mxu0 0.0
    %806 = vmatpush.xpose.msra.mxu0 0.0
    %807 = vmatpush.xpose.msra.mxu0 0.0
    %808 = vmatpush.xpose.msra.mxu0 0.0
    %809 = vmatpush.xpose.msra.mxu0 0.0
    %810 = vmatpush.xpose.msra.mxu0 0.0
    %811 = vmatpush.xpose.msra.mxu0 0.0
    %812 = vmatpush.xpose.msra.mxu0 0.0
    %813 = vmatpush.xpose.msra.mxu0 0.0
    %814 = vmatpush.xpose.msra.mxu0 0.0
    %815 = vmatpush.xpose.msra.mxu0 0.0
    %816 = vmatpush.xpose.msra.mxu0 %v799
    %817 = vmatmul.f32.gmra.mxu0 %v797
    %v818 = vpop.f32.mrf.mxu0
    %v819 = vadd.f32 0.0, %v818
    %820 = vdwg.mxu0
    %v821 = vsel %vm197, %v819, -inf
    %v822 = vsel %vm261, %v821, -inf
    %823 = vmax.xlane.f32.xlu0 %v822
    %v824 = vpop.xlane.xlu0 %823
    %v825 = vsub.f32 %v821, %v824
    %v826 = vmul.f32 %v825, 1.442695
    %v827 = vpow.pop %v826
    %v828 = vsel %vm261, %v827, 0.0
    %829 = vadd.xlane.f32.xlu0 %v828
    %v830 = vpop.xlane.xlu0 %829
    %v831 = vrcp.pop %v830
    %v832 = vmul.f32 %v827, %v831
    %833 = vrot.lane.b32.xlu0 %v256, 48
    %v834 = vpop.permute.xlu0 %833
    %v837 = vsel %vm261, %v832, 0
    %839 = vmatpush.msra.mxu0 0.0
    %840 = vmatpush.msra.mxu0 0.0
    %841 = vmatpush.msra.mxu0 0.0
    %842 = vmatpush.msra.mxu0 0.0
    %843 = vmatpush.msra.mxu0 0.0
    %844 = vmatpush.msra.mxu0 0.0
    %845 = vmatpush.msra.mxu0 0.0
    %846 = vmatpush.msra.mxu0 0.0
    %847 = vmatpush.msra.mxu0 0.0
    %848 = vmatpush.msra.mxu0 0.0
    %849 = vmatpush.msra.mxu0 0.0
    %850 = vmatpush.msra.mxu0 0.0
    %851 = vmatpush.msra.mxu0 0.0
    %852 = vmatpush.msra.mxu0 0.0
    %853 = vmatpush.msra.mxu0 0.0
    %854 = vmatpush.msra.mxu0 %v834
    %855 = vmatmul.f32.gmra.mxu0 %v837
    %v856 = vpop.f32.mrf.mxu0
    %v857 = vadd.f32 0.0, %v856
    %858 = vdwg.mxu0
    %v860 = vsel %vm261, %v857, 0
    %862 = vmatpush.msra.mxu0 0.0
    %863 = vmatpush.msra.mxu0 0.0
    %864 = vmatpush.msra.mxu0 0.0
    %865 = vmatpush.msra.mxu0 0.0
    %866 = vmatpush.msra.mxu0 0.0
    %867 = vmatpush.msra.mxu0 0.0
    %868 = vmatpush.msra.mxu0 0.0
    %869 = vmatpush.msra.mxu0 0.0
    %870 = vmatpush.msra.mxu0 0.0
    %871 = vmatpush.msra.mxu0 0.0
    %872 = vmatpush.msra.mxu0 0.0
    %873 = vmatpush.msra.mxu0 0.0
    %874 = vmatpush.msra.mxu0 0.0
    %875 = vmatpush.msra.mxu0 0.0
    %876 = vmatpush.msra.mxu0 0.0
    %877 = vmatpush.msra.mxu0 %v207
    %878 = vmatmul.f32.gmra.mxu0 %v860
    %v879 = vpop.f32.mrf.mxu0
    %v880 = vadd.f32 0.0, %v879
    %881 = vdwg.mxu0
    %v882 = vadd.f32 %v791, %v880
    %883 = vrot.lane.b32.xlu0 %v256, 104
    %v884 = vpop.permute.xlu0 %883
    %885 = vrot.lane.b32.xlu0 %v256, 72
    %v886 = vpop.permute.xlu0 %885
    %v887 = vsel %vm261, %v884, 0
    %v889 = vsel %vm261, %v886, 0
    %891 = vmatpush.xpose.msra.mxu0 0.0
    %892 = vmatpush.xpose.msra.mxu0 0.0
    %893 = vmatpush.xpose.msra.mxu0 0.0
    %894 = vmatpush.xpose.msra.mxu0 0.0
    %895 = vmatpush.xpose.msra.mxu0 0.0
    %896 = vmatpush.xpose.msra.mxu0 0.0
    %897 = vmatpush.xpose.msra.mxu0 0.0
    %898 = vmatpush.xpose.msra.mxu0 0.0
    %899 = vmatpush.xpose.msra.mxu0 0.0
    %900 = vmatpush.xpose.msra.mxu0 0.0
    %901 = vmatpush.xpose.msra.mxu0 0.0
    %902 = vmatpush.xpose.msra.mxu0 0.0
    %903 = vmatpush.xpose.msra.mxu0 0.0
    %904 = vmatpush.xpose.msra.mxu0 0.0
    %905 = vmatpush.xpose.msra.mxu0 0.0
    %906 = vmatpush.xpose.msra.mxu0 %v889
    %907 = vmatmul.f32.gmra.mxu0 %v887
    %v908 = vpop.f32.mrf.mxu0
    %v909 = vadd.f32 0.0, %v908
    %910 = vdwg.mxu0
    %v911 = vsel %vm197, %v909, -inf
    %v912 = vsel %vm261, %v911, -inf
    %913 = vmax.xlane.f32.xlu0 %v912
    %v914 = vpop.xlane.xlu0 %913
    %v915 = vsub.f32 %v911, %v914
    %v916 = vmul.f32 %v915, 1.442695
    %v917 = vpow.pop %v916
    %v918 = vsel %vm261, %v917, 0.0
    %919 = vadd.xlane.f32.xlu0 %v918
    %v920 = vpop.xlane.xlu0 %919
    %v921 = vrcp.pop %v920
    %v922 = vmul.f32 %v917, %v921
    %923 = vrot.lane.b32.xlu0 %v256, 40
    %v924 = vpop.permute.xlu0 %923
    %v927 = vsel %vm261, %v922, 0
    %929 = vmatpush.msra.mxu0 0.0
    %930 = vmatpush.msra.mxu0 0.0
    %931 = vmatpush.msra.mxu0 0.0
    %932 = vmatpush.msra.mxu0 0.0
    %933 = vmatpush.msra.mxu0 0.0
    %934 = vmatpush.msra.mxu0 0.0
    %935 = vmatpush.msra.mxu0 0.0
    %936 = vmatpush.msra.mxu0 0.0
    %937 = vmatpush.msra.mxu0 0.0
    %938 = vmatpush.msra.mxu0 0.0
    %939 = vmatpush.msra.mxu0 0.0
    %940 = vmatpush.msra.mxu0 0.0
    %941 = vmatpush.msra.mxu0 0.0
    %942 = vmatpush.msra.mxu0 0.0
    %943 = vmatpush.msra.mxu0 0.0
    %944 = vmatpush.msra.mxu0 %v924
    %945 = vmatmul.f32.gmra.mxu0 %v927
    %v946 = vpop.f32.mrf.mxu0
    %v947 = vadd.f32 0.0, %v946
    %948 = vdwg.mxu0
    %v950 = vsel %vm261, %v947, 0
    %952 = vmatpush.msra.mxu0 0.0
    %953 = vmatpush.msra.mxu0 0.0
    %954 = vmatpush.msra.mxu0 0.0
    %955 = vmatpush.msra.mxu0 0.0
    %956 = vmatpush.msra.mxu0 0.0
    %957 = vmatpush.msra.mxu0 0.0
    %958 = vmatpush.msra.mxu0 0.0
    %959 = vmatpush.msra.mxu0 0.0
    %960 = vmatpush.msra.mxu0 0.0
    %961 = vmatpush.msra.mxu0 0.0
    %962 = vmatpush.msra.mxu0 0.0
    %963 = vmatpush.msra.mxu0 0.0
    %964 = vmatpush.msra.mxu0 0.0
    %965 = vmatpush.msra.mxu0 0.0
    %966 = vmatpush.msra.mxu0 0.0
    %967 = vmatpush.msra.mxu0 %v208
    %968 = vmatmul.f32.gmra.mxu0 %v950
    %v969 = vpop.f32.mrf.mxu0
    %v970 = vadd.f32 0.0, %v969
    %971 = vdwg.mxu0
    %v972 = vadd.f32 %v882, %v970
    %v974 = vperm.slane %v209, 0
    %v976 = vadd.f32 %v615, %v974
    %v977 = vadd.f32 %v972, %v974
    %v978 = vadd.f32 %v198, %v976
    %v979 = vadd.f32 %v199, %v977
    %v980 = vsel %vm130, %v978, 0.0
    %981 = vadd.xlane.f32.xlu0 %v980
    %v982 = vpop.xlane.xlu0 %981
    %v983 = vsel %vm130, %v979, 0.0
    %984 = vadd.xlane.f32.xlu0 %v983
    %v985 = vpop.xlane.xlu0 %984
    %v986 = vrcp.pop 32.0
    %v987 = vmul.f32 32.0, %v986
    %v988 = vsub.f32 1.0, %v987
    %v989 = vmul.f32 %v986, %v988
    %v990 = vadd.f32 %v986, %v989
    %vm991 = vweird.f32 %v986
    %v992 = vsel %vm991, %v986, %v990
    %v993 = vmul.f32 %v982, %v992
    %v994 = vmul.f32 %v985, %v992
    %v995 = vsub.f32 %v978, %v993
    %v996 = vsub.f32 %v979, %v994
    %v997 = vmul.f32 %v995, %v995
    %v998 = vmul.f32 %v996, %v996
    %v999 = vsel %vm130, %v997, 0.0
    %1000 = vadd.xlane.f32.xlu0 %v999
    %v1001 = vpop.xlane.xlu0 %1000
    %v1002 = vsel %vm130, %v998, 0.0
    %1003 = vadd.xlane.f32.xlu0 %v1002
    %v1004 = vpop.xlane.xlu0 %1003
    %v1005 = vmul.f32 %v1001, %v992
    %v1006 = vmul.f32 %v1004, %v992
    %v1007 = vadd.f32 %v1005, 1e-05
    %v1008 = vadd.f32 %v1006, 1e-05
    %v1009 = vrsqrt.pop %v1007
    %v1010 = vmul.f32 %v1009, %v1007
    %v1011 = vmul.f32 %v1010, %v1009
    %v1012 = vmul.f32 0.5, %v1011
    %v1013 = vsub.f32 1.5, %v1012
    %v1014 = vmul.f32 %v1009, %v1013
    %vm1015 = vweird.f32 %v1007
    %vm1016 = vweird.f32 %v1009
    %vm1017 = vmor %vm1015, %vm1016
    %v1018 = vsel %vm1017, %v1009, %v1014
    %v1019 = vrsqrt.pop %v1008
    %v1020 = vmul.f32 %v1019, %v1008
    %v1021 = vmul.f32 %v1020, %v1019
    %v1022 = vmul.f32 0.5, %v1021
    %v1023 = vsub.f32 1.5, %v1022
    %v1024 = vmul.f32 %v1019, %v1023
    %vm1025 = vweird.f32 %v1008
    %vm1026 = vweird.f32 %v1019
    %vm1027 = vmor %vm1025, %vm1026
    %v1028 = vsel %vm1027, %v1019, %v1024
    %v1029 = vmul.f32 %v995, %v1018
    %v1030 = vmul.f32 %v996, %v1028
    %v1031 = vperm.slane %v224, 0
    %v1032 = vmul.f32 %v1029, %v1031
    %v1033 = vmul.f32 %v1030, %v1031
    %v1034 = vperm.slane %v225, 0
    %v1035 = vadd.f32 %v1032, %v1034
    %v1036 = vadd.f32 %v1033, %v1034
    %v1037 = vadd.f32 %v1035, %v155
    %v1038 = vadd.f32 %v1036, %v158
    %v1039 = vsel %vm130, %v1037, 0.0
    %1040 = vadd.xlane.f32.xlu0 %v1039
    %v1041 = vpop.xlane.xlu0 %1040
    %v1042 = vsel %vm130, %v1038, 0.0
    %1043 = vadd.xlane.f32.xlu0 %v1042
    %v1044 = vpop.xlane.xlu0 %1043
    %v1045 = vmul.f32 %v1041, %v992
    %v1046 = vmul.f32 %v1044, %v992
    %v1047 = vsub.f32 %v1037, %v1045
    %v1048 = vsub.f32 %v1038, %v1046
    %v1049 = vmul.f32 %v1047, %v1047
    %v1050 = vmul.f32 %v1048, %v1048
    %v1051 = vsel %vm130, %v1049, 0.0
    %1052 = vadd.xlane.f32.xlu0 %v1051
    %v1053 = vpop.xlane.xlu0 %1052
    %v1054 = vsel %vm130, %v1050, 0.0
    %1055 = vadd.xlane.f32.xlu0 %v1054
    %v1056 = vpop.xlane.xlu0 %1055
    %v1057 = vmul.f32 %v1053, %v992
    %v1058 = vmul.f32 %v1056, %v992
    %v1059 = vadd.f32 %v1057, 1e-05
    %v1060 = vadd.f32 %v1058, 1e-05
    %v1061 = vrsqrt.pop %v1059
    %v1062 = vmul.f32 %v1061, %v1059
    %v1063 = vmul.f32 %v1062, %v1061
    %v1064 = vmul.f32 0.5, %v1063
    %v1065 = vsub.f32 1.5, %v1064
    %v1066 = vmul.f32 %v1061, %v1065
    %vm1067 = vweird.f32 %v1059
    %vm1068 = vweird.f32 %v1061
    %vm1069 = vmor %vm1067, %vm1068
    %v1070 = vsel %vm1069, %v1061, %v1066
    %v1071 = vrsqrt.pop %v1060
    %v1072 = vmul.f32 %v1071, %v1060
    %v1073 = vmul.f32 %v1072, %v1071
    %v1074 = vmul.f32 0.5, %v1073
    %v1075 = vsub.f32 1.5, %v1074
    %v1076 = vmul.f32 %v1071, %v1075
    %vm1077 = vweird.f32 %v1060
    %vm1078 = vweird.f32 %v1071
    %vm1079 = vmor %vm1077, %vm1078
    %v1080 = vsel %vm1079, %v1071, %v1076
    %v1081 = vmul.f32 %v1047, %v1070
    %v1082 = vmul.f32 %v1048, %v1080
    %v1083 = vperm.slane %v224, 1
    %v1084 = vmul.f32 %v1081, %v1083
    %v1085 = vmul.f32 %v1082, %v1083
    %v1086 = vperm.slane %v225, 1
    %v1087 = vadd.f32 %v1084, %v1086
    %v1088 = vadd.f32 %v1085, %v1086
    %v1090 = vperm.slane %v214, 0
    %v1093 = vsel %vm130, %v1087, 0
    %v1096 = vsel %vm130, %v1088, 0
    %1098 = vmatpush.msra.mxu0 0.0
    %1099 = vmatpush.msra.mxu0 0.0
    %1100 = vmatpush.msra.mxu0 0.0
    %1101 = vmatpush.msra.mxu0 0.0
    %1102 = vmatpush.msra.mxu0 0.0
    %1103 = vmatpush.msra.mxu0 0.0
    %1104 = vmatpush.msra.mxu0 0.0
    %1105 = vmatpush.msra.mxu0 0.0
    %1106 = vmatpush.msra.mxu0 0.0
    %1107 = vmatpush.msra.mxu0 0.0
    %1108 = vmatpush.msra.mxu0 0.0
    %1109 = vmatpush.msra.mxu0 0.0
    %1110 = vmatpush.msra.mxu0 %v213
    %1111 = vmatpush.msra.mxu0 %v212
    %1112 = vmatpush.msra.mxu0 %v211
    %1113 = vmatpush.msra.mxu0 %v210
    %1114 = vmatmul.f32.gmra.mxu0 %v1093
    %v1115 = vpop.f32.mrf.mxu0
    %v1116 = vadd.f32 %v1090, %v1115
    %1117 = vmatmul.f32.gmra.mxu0 %v1096
    %v1118 = vpop.f32.mrf.mxu0
    %v1119 = vadd.f32 %v1090, %v1118
    %1120 = vdwg.mxu0
    %v1121 = vmax.f32 %v1116, 0.0
    %v1122 = vmax.f32 %v1119, 0.0
    %v1124 = vperm.slane %v223, 0
    %vm1126 = vcmask 523264
    %v1128 = vsel %vm1126, %v1121, 0
    %v1131 = vsel %vm1126, %v1122, 0
    %1133 = vmatpush.msra.mxu0 0.0
    %1134 = vmatpush.msra.mxu0 0.0
    %1135 = vmatpush.msra.mxu0 0.0
    %1136 = vmatpush.msra.mxu0 0.0
    %1137 = vmatpush.msra.mxu0 0.0
    %1138 = vmatpush.msra.mxu0 0.0
    %1139 = vmatpush.msra.mxu0 0.0
    %1140 = vmatpush.msra.mxu0 0.0
    %1141 = vmatpush.msra.mxu0 %v222
    %1142 = vmatpush.msra.mxu0 %v221
    %1143 = vmatpush.msra.mxu0 %v220
    %1144 = vmatpush.msra.mxu0 %v219
    %1145 = vmatpush.msra.mxu0 %v218
    %1146 = vmatpush.msra.mxu0 %v217
    %1147 = vmatpush.msra.mxu0 %v216
    %1148 = vmatpush.msra.mxu0 %v215
    %1149 = vmatmul.f32.gmra.mxu0 %v1128
    %v1150 = vpop.f32.mrf.mxu0
    %v1151 = vadd.f32 %v1124, %v1150
    %1152 = vmatmul.f32.gmra.mxu0 %v1131
    %v1153 = vpop.f32.mrf.mxu0
    %v1154 = vadd.f32 %v1124, %v1153
    %1155 = vdwg.mxu0
    %v1156 = vadd.f32 %v1087, %v1151
    %v1157 = vadd.f32 %v1088, %v1154
    %v1158 = vsel %vm130, %v1156, 0.0
    %1159 = vadd.xlane.f32.xlu0 %v1158
    %v1160 = vpop.xlane.xlu0 %1159
    %v1161 = vsel %vm130, %v1157, 0.0
    %1162 = vadd.xlane.f32.xlu0 %v1161
    %v1163 = vpop.xlane.xlu0 %1162
    %v1164 = vmul.f32 %v1160, %v992
    %v1165 = vmul.f32 %v1163, %v992
    %v1166 = vsub.f32 %v1156, %v1164
    %v1167 = vsub.f32 %v1157, %v1165
    %v1168 = vmul.f32 %v1166, %v1166
    %v1169 = vmul.f32 %v1167, %v1167
    %v1170 = vsel %vm130, %v1168, 0.0
    %1171 = vadd.xlane.f32.xlu0 %v1170
    %v1172 = vpop.xlane.xlu0 %1171
    %v1173 = vsel %vm130, %v1169, 0.0
    %1174 = vadd.xlane.f32.xlu0 %v1173
    %v1175 = vpop.xlane.xlu0 %1174
    %v1176 = vmul.f32 %v1172, %v992
    %v1177 = vmul.f32 %v1175, %v992
    %v1178 = vadd.f32 %v1176, 1e-05
    %v1179 = vadd.f32 %v1177, 1e-05
    %v1180 = vrsqrt.pop %v1178
    %v1181 = vmul.f32 %v1180, %v1178
    %v1182 = vmul.f32 %v1181, %v1180
    %v1183 = vmul.f32 0.5, %v1182
    %v1184 = vsub.f32 1.5, %v1183
    %v1185 = vmul.f32 %v1180, %v1184
    %vm1186 = vweird.f32 %v1178
    %vm1187 = vweird.f32 %v1180
    %vm1188 = vmor %vm1186, %vm1187
    %v1189 = vsel %vm1188, %v1180, %v1185
    %v1190 = vrsqrt.pop %v1179
    %v1191 = vmul.f32 %v1190, %v1179
    %v1192 = vmul.f32 %v1191, %v1190
    %v1193 = vmul.f32 0.5, %v1192
    %v1194 = vsub.f32 1.5, %v1193
    %v1195 = vmul.f32 %v1190, %v1194
    %vm1196 = vweird.f32 %v1179
    %vm1197 = vweird.f32 %v1190
    %vm1198 = vmor %vm1196, %vm1197
    %v1199 = vsel %vm1198, %v1190, %v1195
    %v1200 = vmul.f32 %v1166, %v1189
    %v1201 = vmul.f32 %v1167, %v1199
    %v1202 = vperm.slane %v224, 2
    %v1203 = vmul.f32 %v1200, %v1202
    %v1204 = vmul.f32 %v1201, %v1202
    %v1205 = vperm.slane %v225, 2
    %v1206 = vadd.f32 %v1203, %v1205
    %v1207 = vadd.f32 %v1204, %v1205
    %s1208 = scalar_lea.vmem %s4, 32
    %v1209 = vld [vmem:[%s1208] sm:$0xff]
    %v1210 = vld [vmem:[%s1208 + $0x8] sm:$0xff]
    %v1211 = vld [vmem:[%s1208 + $0x10] sm:$0xff]
    %v1212 = vld [vmem:[%s1208 + $0x18] sm:$0xff]
    %s1213 = scalar_lea.vmem %s5, 1
    %v1214 = vld [vmem:[%s1213] sm:$0x1]
    %s1215 = scalar_lea.vmem %s6, 32
    %v1216 = vld [vmem:[%s1215] sm:$0xff]
    %v1217 = vld [vmem:[%s1215 + $0x8] sm:$0xff]
    %v1218 = vld [vmem:[%s1215 + $0x10] sm:$0xff]
    %v1219 = vld [vmem:[%s1215 + $0x18] sm:$0xff]
    %s1220 = scalar_lea.vmem %s7, 1
    %v1221 = vld [vmem:[%s1220] sm:$0x1]
    %s1222 = scalar_lea.vmem %s10, 32
    %v1223 = vld [vmem:[%s1222] sm:$0xff]
    %v1224 = vld [vmem:[%s1222 + $0x8] sm:$0xff]
    %v1225 = vld [vmem:[%s1222 + $0x10] sm:$0xff]
    %v1226 = vld [vmem:[%s1222 + $0x18] sm:$0xff]
    %s1227 = scalar_lea.vmem %s11, 1
    %v1228 = vld [vmem:[%s1227] sm:$0x1]
    %s1229 = scalar_lea.vmem %s12, 64
    %v1230 = vld [vmem:[%s1229] sm:$0xff]
    %v1231 = vld [vmem:[%s1229 + $0x8] sm:$0xff]
    %v1232 = vld [vmem:[%s1229 + $0x10] sm:$0xff]
    %v1233 = vld [vmem:[%s1229 + $0x18] sm:$0xff]
    %v1234 = vld [vmem:[%s1229 + $0x20] sm:$0xff]
    %v1235 = vld [vmem:[%s1229 + $0x28] sm:$0xff]
    %v1236 = vld [vmem:[%s1229 + $0x30] sm:$0xff]
    %v1237 = vld [vmem:[%s1229 + $0x38] sm:$0xff]
    %s1238 = scalar_lea.vmem %s13, 1
    %v1239 = vld [vmem:[%s1238] sm:$0x1]
    %s1240 = scalar_lea.vmem %s14, 4
    %v1241 = vld [vmem:[%s1240] sm:$0x7]
    %s1242 = scalar_lea.vmem %s15, 4
    %v1243 = vld [vmem:[%s1242] sm:$0x7]
    %v1245 = vperm.slane %v1214, 0
    %v1248 = vsel %vm130, %v1206, 0
    %v1251 = vsel %vm130, %v1207, 0
    %1253 = vmatpush.msra.mxu0 0.0
    %1254 = vmatpush.msra.mxu0 0.0
    %1255 = vmatpush.msra.mxu0 0.0
    %1256 = vmatpush.msra.mxu0 0.0
    %1257 = vmatpush.msra.mxu0 0.0
    %1258 = vmatpush.msra.mxu0 0.0
    %1259 = vmatpush.msra.mxu0 0.0
    %1260 = vmatpush.msra.mxu0 0.0
    %1261 = vmatpush.msra.mxu0 0.0
    %1262 = vmatpush.msra.mxu0 0.0
    %1263 = vmatpush.msra.mxu0 0.0
    %1264 = vmatpush.msra.mxu0 0.0
    %1265 = vmatpush.msra.mxu0 %v1212
    %1266 = vmatpush.msra.mxu0 %v1211
    %1267 = vmatpush.msra.mxu0 %v1210
    %1268 = vmatpush.msra.mxu0 %v1209
    %1269 = vmatmul.f32.gmra.mxu0 %v1248
    %v1270 = vpop.f32.mrf.mxu0
    %v1271 = vadd.f32 %v1245, %v1270
    %1272 = vmatmul.f32.gmra.mxu0 %v1251
    %v1273 = vpop.f32.mrf.mxu0
    %v1274 = vadd.f32 %v1245, %v1273
    %1275 = vdwg.mxu0
    %1277 = vrot.lane.b32.xlu0 %v1271, 96
    %v1278 = vpop.permute.xlu0 %1277
    %v1279 = vsel %vm261, %v1271, 0
    %v1281 = vsel %vm261, %v1278, 0
    %1283 = vmatpush.xpose.msra.mxu0 0.0
    %1284 = vmatpush.xpose.msra.mxu0 0.0
    %1285 = vmatpush.xpose.msra.mxu0 0.0
    %1286 = vmatpush.xpose.msra.mxu0 0.0
    %1287 = vmatpush.xpose.msra.mxu0 0.0
    %1288 = vmatpush.xpose.msra.mxu0 0.0
    %1289 = vmatpush.xpose.msra.mxu0 0.0
    %1290 = vmatpush.xpose.msra.mxu0 0.0
    %1291 = vmatpush.xpose.msra.mxu0 0.0
    %1292 = vmatpush.xpose.msra.mxu0 0.0
    %1293 = vmatpush.xpose.msra.mxu0 0.0
    %1294 = vmatpush.xpose.msra.mxu0 0.0
    %1295 = vmatpush.xpose.msra.mxu0 0.0
    %1296 = vmatpush.xpose.msra.mxu0 0.0
    %1297 = vmatpush.xpose.msra.mxu0 0.0
    %1298 = vmatpush.xpose.msra.mxu0 %v1281
    %1299 = vmatmul.f32.gmra.mxu0 %v1279
    %v1300 = vpop.f32.mrf.mxu0
    %v1301 = vadd.f32 0.0, %v1300
    %1302 = vdwg.mxu0
    %v1303 = vsel %vm197, %v1301, -inf
    %v1304 = vsel %vm261, %v1303, -inf
    %1305 = vmax.xlane.f32.xlu0 %v1304
    %v1306 = vpop.xlane.xlu0 %1305
    %v1307 = vsub.f32 %v1303, %v1306
    %v1308 = vmul.f32 %v1307, 1.442695
    %v1309 = vpow.pop %v1308
    %v1310 = vsel %vm261, %v1309, 0.0
    %1311 = vadd.xlane.f32.xlu0 %v1310
    %v1312 = vpop.xlane.xlu0 %1311
    %v1313 = vrcp.pop %v1312
    %v1314 = vmul.f32 %v1309, %v1313
    %1315 = vrot.lane.b32.xlu0 %v1271, 64
    %v1316 = vpop.permute.xlu0 %1315
    %v1319 = vsel %vm261, %v1314, 0
    %1321 = vmatpush.msra.mxu0 0.0
    %1322 = vmatpush.msra.mxu0 0.0
    %1323 = vmatpush.msra.mxu0 0.0
    %1324 = vmatpush.msra.mxu0 0.0
    %1325 = vmatpush.msra.mxu0 0.0
    %1326 = vmatpush.msra.mxu0 0.0
    %1327 = vmatpush.msra.mxu0 0.0
    %1328 = vmatpush.msra.mxu0 0.0
    %1329 = vmatpush.msra.mxu0 0.0
    %1330 = vmatpush.msra.mxu0 0.0
    %1331 = vmatpush.msra.mxu0 0.0
    %1332 = vmatpush.msra.mxu0 0.0
    %1333 = vmatpush.msra.mxu0 0.0
    %1334 = vmatpush.msra.mxu0 0.0
    %1335 = vmatpush.msra.mxu0 0.0
    %1336 = vmatpush.msra.mxu0 %v1316
    %1337 = vmatmul.f32.gmra.mxu0 %v1319
    %v1338 = vpop.f32.mrf.mxu0
    %v1339 = vadd.f32 0.0, %v1338
    %1340 = vdwg.mxu0
    %1341 = vrot.lane.b32.xlu0 %v1271, 120
    %v1342 = vpop.permute.xlu0 %1341
    %1343 = vrot.lane.b32.xlu0 %v1271, 88
    %v1344 = vpop.permute.xlu0 %1343
    %v1345 = vsel %vm261, %v1342, 0
    %v1347 = vsel %vm261, %v1344, 0
    %1349 = vmatpush.xpose.msra.mxu0 0.0
    %1350 = vmatpush.xpose.msra.mxu0 0.0
    %1351 = vmatpush.xpose.msra.mxu0 0.0
    %1352 = vmatpush.xpose.msra.mxu0 0.0
    %1353 = vmatpush.xpose.msra.mxu0 0.0
    %1354 = vmatpush.xpose.msra.mxu0 0.0
    %1355 = vmatpush.xpose.msra.mxu0 0.0
    %1356 = vmatpush.xpose.msra.mxu0 0.0
    %1357 = vmatpush.xpose.msra.mxu0 0.0
    %1358 = vmatpush.xpose.msra.mxu0 0.0
    %1359 = vmatpush.xpose.msra.mxu0 0.0
    %1360 = vmatpush.xpose.msra.mxu0 0.0
    %1361 = vmatpush.xpose.msra.mxu0 0.0
    %1362 = vmatpush.xpose.msra.mxu0 0.0
    %1363 = vmatpush.xpose.msra.mxu0 0.0
    %1364 = vmatpush.xpose.msra.mxu0 %v1347
    %1365 = vmatmul.f32.gmra.mxu0 %v1345
    %v1366 = vpop.f32.mrf.mxu0
    %v1367 = vadd.f32 0.0, %v1366
    %1368 = vdwg.mxu0
    %v1369 = vsel %vm197, %v1367, -inf
    %v1370 = vsel %vm261, %v1369, -inf
    %1371 = vmax.xlane.f32.xlu0 %v1370
    %v1372 = vpop.xlane.xlu0 %1371
    %v1373 = vsub.f32 %v1369, %v1372
    %v1374 = vmul.f32 %v1373, 1.442695
    %v1375 = vpow.pop %v1374
    %v1376 = vsel %vm261, %v1375, 0.0
    %1377 = vadd.xlane.f32.xlu0 %v1376
    %v1378 = vpop.xlane.xlu0 %1377
    %v1379 = vrcp.pop %v1378
    %v1380 = vmul.f32 %v1375, %v1379
    %1381 = vrot.lane.b32.xlu0 %v1271, 56
    %v1382 = vpop.permute.xlu0 %1381
    %v1385 = vsel %vm261, %v1380, 0
    %1387 = vmatpush.msra.mxu0 0.0
    %1388 = vmatpush.msra.mxu0 0.0
    %1389 = vmatpush.msra.mxu0 0.0
    %1390 = vmatpush.msra.mxu0 0.0
    %1391 = vmatpush.msra.mxu0 0.0
    %1392 = vmatpush.msra.mxu0 0.0
    %1393 = vmatpush.msra.mxu0 0.0
    %1394 = vmatpush.msra.mxu0 0.0
    %1395 = vmatpush.msra.mxu0 0.0
    %1396 = vmatpush.msra.mxu0 0.0
    %1397 = vmatpush.msra.mxu0 0.0
    %1398 = vmatpush.msra.mxu0 0.0
    %1399 = vmatpush.msra.mxu0 0.0
    %1400 = vmatpush.msra.mxu0 0.0
    %1401 = vmatpush.msra.mxu0 0.0
    %1402 = vmatpush.msra.mxu0 %v1382
    %1403 = vmatmul.f32.gmra.mxu0 %v1385
    %v1404 = vpop.f32.mrf.mxu0
    %v1405 = vadd.f32 0.0, %v1404
    %1406 = vdwg.mxu0
    %v1408 = vsel %vm261, %v1405, 0
    %1410 = vmatpush.msra.mxu0 0.0
    %1411 = vmatpush.msra.mxu0 0.0
    %1412 = vmatpush.msra.mxu0 0.0
    %1413 = vmatpush.msra.mxu0 0.0
    %1414 = vmatpush.msra.mxu0 0.0
    %1415 = vmatpush.msra.mxu0 0.0
    %1416 = vmatpush.msra.mxu0 0.0
    %1417 = vmatpush.msra.mxu0 0.0
    %1418 = vmatpush.msra.mxu0 0.0
    %1419 = vmatpush.msra.mxu0 0.0
    %1420 = vmatpush.msra.mxu0 0.0
    %1421 = vmatpush.msra.mxu0 0.0
    %1422 = vmatpush.msra.mxu0 0.0
    %1423 = vmatpush.msra.mxu0 0.0
    %1424 = vmatpush.msra.mxu0 0.0
    %1425 = vmatpush.msra.mxu0 %v1217
    %1426 = vmatmul.f32.gmra.mxu0 %v1408
    %v1427 = vpop.f32.mrf.mxu0
    %v1428 = vadd.f32 0.0, %v1427
    %1429 = vdwg.mxu0
    %v1431 = vsel %vm261, %v1339, 0
    %1433 = vmatpush.msra.mxu0 0.0
    %1434 = vmatpush.msra.mxu0 0.0
    %1435 = vmatpush.msra.mxu0 0.0
    %1436 = vmatpush.msra.mxu0 0.0
    %1437 = vmatpush.msra.mxu0 0.0
    %1438 = vmatpush.msra.mxu0 0.0
    %1439 = vmatpush.msra.mxu0 0.0
    %1440 = vmatpush.msra.mxu0 0.0
    %1441 = vmatpush.msra.mxu0 0.0
    %1442 = vmatpush.msra.mxu0 0.0
    %1443 = vmatpush.msra.mxu0 0.0
    %1444 = vmatpush.msra.mxu0 0.0
    %1445 = vmatpush.msra.mxu0 0.0
    %1446 = vmatpush.msra.mxu0 0.0
    %1447 = vmatpush.msra.mxu0 0.0
    %1448 = vmatpush.msra.mxu0 %v1216
    %1449 = vmatmul.f32.gmra.mxu0 %v1431
    %v1450 = vpop.f32.mrf.mxu0
    %v1451 = vadd.f32 %v1428, %v1450
    %1452 = vdwg.mxu0
    %1453 = vrot.lane.b32.xlu0 %v1271, 112
    %v1454 = vpop.permute.xlu0 %1453
    %1455 = vrot.lane.b32.xlu0 %v1271, 80
    %v1456 = vpop.permute.xlu0 %1455
    %v1457 = vsel %vm261, %v1454, 0
    %v1459 = vsel %vm261, %v1456, 0
    %1461 = vmatpush.xpose.msra.mxu0 0.0
    %1462 = vmatpush.xpose.msra.mxu0 0.0
    %1463 = vmatpush.xpose.msra.mxu0 0.0
    %1464 = vmatpush.xpose.msra.mxu0 0.0
    %1465 = vmatpush.xpose.msra.mxu0 0.0
    %1466 = vmatpush.xpose.msra.mxu0 0.0
    %1467 = vmatpush.xpose.msra.mxu0 0.0
    %1468 = vmatpush.xpose.msra.mxu0 0.0
    %1469 = vmatpush.xpose.msra.mxu0 0.0
    %1470 = vmatpush.xpose.msra.mxu0 0.0
    %1471 = vmatpush.xpose.msra.mxu0 0.0
    %1472 = vmatpush.xpose.msra.mxu0 0.0
    %1473 = vmatpush.xpose.msra.mxu0 0.0
    %1474 = vmatpush.xpose.msra.mxu0 0.0
    %1475 = vmatpush.xpose.msra.mxu0 0.0
    %1476 = vmatpush.xpose.msra.mxu0 %v1459
    %1477 = vmatmul.f32.gmra.mxu0 %v1457
    %v1478 = vpop.f32.mrf.mxu0
    %v1479 = vadd.f32 0.0, %v1478
    %1480 = vdwg.mxu0
    %v1481 = vsel %vm197, %v1479, -inf
    %v1482 = vsel %vm261, %v1481, -inf
    %1483 = vmax.xlane.f32.xlu0 %v1482
    %v1484 = vpop.xlane.xlu0 %1483
    %v1485 = vsub.f32 %v1481, %v1484
    %v1486 = vmul.f32 %v1485, 1.442695
    %v1487 = vpow.pop %v1486
    %v1488 = vsel %vm261, %v1487, 0.0
    %1489 = vadd.xlane.f32.xlu0 %v1488
    %v1490 = vpop.xlane.xlu0 %1489
    %v1491 = vrcp.pop %v1490
    %v1492 = vmul.f32 %v1487, %v1491
    %1493 = vrot.lane.b32.xlu0 %v1271, 48
    %v1494 = vpop.permute.xlu0 %1493
    %v1497 = vsel %vm261, %v1492, 0
    %1499 = vmatpush.msra.mxu0 0.0
    %1500 = vmatpush.msra.mxu0 0.0
    %1501 = vmatpush.msra.mxu0 0.0
    %1502 = vmatpush.msra.mxu0 0.0
    %1503 = vmatpush.msra.mxu0 0.0
    %1504 = vmatpush.msra.mxu0 0.0
    %1505 = vmatpush.msra.mxu0 0.0
    %1506 = vmatpush.msra.mxu0 0.0
    %1507 = vmatpush.msra.mxu0 0.0
    %1508 = vmatpush.msra.mxu0 0.0
    %1509 = vmatpush.msra.mxu0 0.0
    %1510 = vmatpush.msra.mxu0 0.0
    %1511 = vmatpush.msra.mxu0 0.0
    %1512 = vmatpush.msra.mxu0 0.0
    %1513 = vmatpush.msra.mxu0 0.0
    %1514 = vmatpush.msra.mxu0 %v1494
    %1515 = vmatmul.f32.gmra.mxu0 %v1497
    %v1516 = vpop.f32.mrf.mxu0
    %v1517 = vadd.f32 0.0, %v1516
    %1518 = vdwg.mxu0
    %v1520 = vsel %vm261, %v1517, 0
    %1522 = vmatpush.msra.mxu0 0.0
    %1523 = vmatpush.msra.mxu0 0.0
    %1524 = vmatpush.msra.mxu0 0.0
    %1525 = vmatpush.msra.mxu0 0.0
    %1526 = vmatpush.msra.mxu0 0.0
    %1527 = vmatpush.msra.mxu0 0.0
    %1528 = vmatpush.msra.mxu0 0.0
    %1529 = vmatpush.msra.mxu0 0.0
    %1530 = vmatpush.msra.mxu0 0.0
    %1531 = vmatpush.msra.mxu0 0.0
    %1532 = vmatpush.msra.mxu0 0.0
    %1533 = vmatpush.msra.mxu0 0.0
    %1534 = vmatpush.msra.mxu0 0.0
    %1535 = vmatpush.msra.mxu0 0.0
    %1536 = vmatpush.msra.mxu0 0.0
    %1537 = vmatpush.msra.mxu0 %v1218
    %1538 = vmatmul.f32.gmra.mxu0 %v1520
    %v1539 = vpop.f32.mrf.mxu0
    %v1540 = vadd.f32 0.0, %v1539
    %1541 = vdwg.mxu0
    %v1542 = vadd.f32 %v1451, %v1540
    %1543 = vrot.lane.b32.xlu0 %v1271, 104
    %v1544 = vpop.permute.xlu0 %1543
    %1545 = vrot.lane.b32.xlu0 %v1271, 72
    %v1546 = vpop.permute.xlu0 %1545
    %v1547 = vsel %vm261, %v1544, 0
    %v1549 = vsel %vm261, %v1546, 0
    %1551 = vmatpush.xpose.msra.mxu0 0.0
    %1552 = vmatpush.xpose.msra.mxu0 0.0
    %1553 = vmatpush.xpose.msra.mxu0 0.0
    %1554 = vmatpush.xpose.msra.mxu0 0.0
    %1555 = vmatpush.xpose.msra.mxu0 0.0
    %1556 = vmatpush.xpose.msra.mxu0 0.0
    %1557 = vmatpush.xpose.msra.mxu0 0.0
    %1558 = vmatpush.xpose.msra.mxu0 0.0
    %1559 = vmatpush.xpose.msra.mxu0 0.0
    %1560 = vmatpush.xpose.msra.mxu0 0.0
    %1561 = vmatpush.xpose.msra.mxu0 0.0
    %1562 = vmatpush.xpose.msra.mxu0 0.0
    %1563 = vmatpush.xpose.msra.mxu0 0.0
    %1564 = vmatpush.xpose.msra.mxu0 0.0
    %1565 = vmatpush.xpose.msra.mxu0 0.0
    %1566 = vmatpush.xpose.msra.mxu0 %v1549
    %1567 = vmatmul.f32.gmra.mxu0 %v1547
    %v1568 = vpop.f32.mrf.mxu0
    %v1569 = vadd.f32 0.0, %v1568
    %1570 = vdwg.mxu0
    %v1571 = vsel %vm197, %v1569, -inf
    %v1572 = vsel %vm261, %v1571, -inf
    %1573 = vmax.xlane.f32.xlu0 %v1572
    %v1574 = vpop.xlane.xlu0 %1573
    %v1575 = vsub.f32 %v1571, %v1574
    %v1576 = vmul.f32 %v1575, 1.442695
    %v1577 = vpow.pop %v1576
    %v1578 = vsel %vm261, %v1577, 0.0
    %1579 = vadd.xlane.f32.xlu0 %v1578
    %v1580 = vpop.xlane.xlu0 %1579
    %v1581 = vrcp.pop %v1580
    %v1582 = vmul.f32 %v1577, %v1581
    %1583 = vrot.lane.b32.xlu0 %v1271, 40
    %v1584 = vpop.permute.xlu0 %1583
    %v1587 = vsel %vm261, %v1582, 0
    %1589 = vmatpush.msra.mxu0 0.0
    %1590 = vmatpush.msra.mxu0 0.0
    %1591 = vmatpush.msra.mxu0 0.0
    %1592 = vmatpush.msra.mxu0 0.0
    %1593 = vmatpush.msra.mxu0 0.0
    %1594 = vmatpush.msra.mxu0 0.0
    %1595 = vmatpush.msra.mxu0 0.0
    %1596 = vmatpush.msra.mxu0 0.0
    %1597 = vmatpush.msra.mxu0 0.0
    %1598 = vmatpush.msra.mxu0 0.0
    %1599 = vmatpush.msra.mxu0 0.0
    %1600 = vmatpush.msra.mxu0 0.0
    %1601 = vmatpush.msra.mxu0 0.0
    %1602 = vmatpush.msra.mxu0 0.0
    %1603 = vmatpush.msra.mxu0 0.0
    %1604 = vmatpush.msra.mxu0 %v1584
    %1605 = vmatmul.f32.gmra.mxu0 %v1587
    %v1606 = vpop.f32.mrf.mxu0
    %v1607 = vadd.f32 0.0, %v1606
    %1608 = vdwg.mxu0
    %v1610 = vsel %vm261, %v1607, 0
    %1612 = vmatpush.msra.mxu0 0.0
    %1613 = vmatpush.msra.mxu0 0.0
    %1614 = vmatpush.msra.mxu0 0.0
    %1615 = vmatpush.msra.mxu0 0.0
    %1616 = vmatpush.msra.mxu0 0.0
    %1617 = vmatpush.msra.mxu0 0.0
    %1618 = vmatpush.msra.mxu0 0.0
    %1619 = vmatpush.msra.mxu0 0.0
    %1620 = vmatpush.msra.mxu0 0.0
    %1621 = vmatpush.msra.mxu0 0.0
    %1622 = vmatpush.msra.mxu0 0.0
    %1623 = vmatpush.msra.mxu0 0.0
    %1624 = vmatpush.msra.mxu0 0.0
    %1625 = vmatpush.msra.mxu0 0.0
    %1626 = vmatpush.msra.mxu0 0.0
    %1627 = vmatpush.msra.mxu0 %v1219
    %1628 = vmatmul.f32.gmra.mxu0 %v1610
    %v1629 = vpop.f32.mrf.mxu0
    %v1630 = vadd.f32 0.0, %v1629
    %1631 = vdwg.mxu0
    %v1632 = vadd.f32 %v1542, %v1630
    %1634 = vrot.lane.b32.xlu0 %v1274, 96
    %v1635 = vpop.permute.xlu0 %1634
    %v1636 = vsel %vm261, %v1274, 0
    %v1638 = vsel %vm261, %v1635, 0
    %1640 = vmatpush.xpose.msra.mxu0 0.0
    %1641 = vmatpush.xpose.msra.mxu0 0.0
    %1642 = vmatpush.xpose.msra.mxu0 0.0
    %1643 = vmatpush.xpose.msra.mxu0 0.0
    %1644 = vmatpush.xpose.msra.mxu0 0.0
    %1645 = vmatpush.xpose.msra.mxu0 0.0
    %1646 = vmatpush.xpose.msra.mxu0 0.0
    %1647 = vmatpush.xpose.msra.mxu0 0.0
    %1648 = vmatpush.xpose.msra.mxu0 0.0
    %1649 = vmatpush.xpose.msra.mxu0 0.0
    %1650 = vmatpush.xpose.msra.mxu0 0.0
    %1651 = vmatpush.xpose.msra.mxu0 0.0
    %1652 = vmatpush.xpose.msra.mxu0 0.0
    %1653 = vmatpush.xpose.msra.mxu0 0.0
    %1654 = vmatpush.xpose.msra.mxu0 0.0
    %1655 = vmatpush.xpose.msra.mxu0 %v1638
    %1656 = vmatmul.f32.gmra.mxu0 %v1636
    %v1657 = vpop.f32.mrf.mxu0
    %v1658 = vadd.f32 0.0, %v1657
    %1659 = vdwg.mxu0
    %v1660 = vsel %vm197, %v1658, -inf
    %v1661 = vsel %vm261, %v1660, -inf
    %1662 = vmax.xlane.f32.xlu0 %v1661
    %v1663 = vpop.xlane.xlu0 %1662
    %v1664 = vsub.f32 %v1660, %v1663
    %v1665 = vmul.f32 %v1664, 1.442695
    %v1666 = vpow.pop %v1665
    %v1667 = vsel %vm261, %v1666, 0.0
    %1668 = vadd.xlane.f32.xlu0 %v1667
    %v1669 = vpop.xlane.xlu0 %1668
    %v1670 = vrcp.pop %v1669
    %v1671 = vmul.f32 %v1666, %v1670
    %1672 = vrot.lane.b32.xlu0 %v1274, 64
    %v1673 = vpop.permute.xlu0 %1672
    %v1676 = vsel %vm261, %v1671, 0
    %1678 = vmatpush.msra.mxu0 0.0
    %1679 = vmatpush.msra.mxu0 0.0
    %1680 = vmatpush.msra.mxu0 0.0
    %1681 = vmatpush.msra.mxu0 0.0
    %1682 = vmatpush.msra.mxu0 0.0
    %1683 = vmatpush.msra.mxu0 0.0
    %1684 = vmatpush.msra.mxu0 0.0
    %1685 = vmatpush.msra.mxu0 0.0
    %1686 = vmatpush.msra.mxu0 0.0
    %1687 = vmatpush.msra.mxu0 0.0
    %1688 = vmatpush.msra.mxu0 0.0
    %1689 = vmatpush.msra.mxu0 0.0
    %1690 = vmatpush.msra.mxu0 0.0
    %1691 = vmatpush.msra.mxu0 0.0
    %1692 = vmatpush.msra.mxu0 0.0
    %1693 = vmatpush.msra.mxu0 %v1673
    %1694 = vmatmul.f32.gmra.mxu0 %v1676
    %v1695 = vpop.f32.mrf.mxu0
    %v1696 = vadd.f32 0.0, %v1695
    %1697 = vdwg.mxu0
    %1698 = vrot.lane.b32.xlu0 %v1274, 120
    %v1699 = vpop.permute.xlu0 %1698
    %1700 = vrot.lane.b32.xlu0 %v1274, 88
    %v1701 = vpop.permute.xlu0 %1700
    %v1702 = vsel %vm261, %v1699, 0
    %v1704 = vsel %vm261, %v1701, 0
    %1706 = vmatpush.xpose.msra.mxu0 0.0
    %1707 = vmatpush.xpose.msra.mxu0 0.0
    %1708 = vmatpush.xpose.msra.mxu0 0.0
    %1709 = vmatpush.xpose.msra.mxu0 0.0
    %1710 = vmatpush.xpose.msra.mxu0 0.0
    %1711 = vmatpush.xpose.msra.mxu0 0.0
    %1712 = vmatpush.xpose.msra.mxu0 0.0
    %1713 = vmatpush.xpose.msra.mxu0 0.0
    %1714 = vmatpush.xpose.msra.mxu0 0.0
    %1715 = vmatpush.xpose.msra.mxu0 0.0
    %1716 = vmatpush.xpose.msra.mxu0 0.0
    %1717 = vmatpush.xpose.msra.mxu0 0.0
    %1718 = vmatpush.xpose.msra.mxu0 0.0
    %1719 = vmatpush.xpose.msra.mxu0 0.0
    %1720 = vmatpush.xpose.msra.mxu0 0.0
    %1721 = vmatpush.xpose.msra.mxu0 %v1704
    %1722 = vmatmul.f32.gmra.mxu0 %v1702
    %v1723 = vpop.f32.mrf.mxu0
    %v1724 = vadd.f32 0.0, %v1723
    %1725 = vdwg.mxu0
    %v1726 = vsel %vm197, %v1724, -inf
    %v1727 = vsel %vm261, %v1726, -inf
    %1728 = vmax.xlane.f32.xlu0 %v1727
    %v1729 = vpop.xlane.xlu0 %1728
    %v1730 = vsub.f32 %v1726, %v1729
    %v1731 = vmul.f32 %v1730, 1.442695
    %v1732 = vpow.pop %v1731
    %v1733 = vsel %vm261, %v1732, 0.0
    %1734 = vadd.xlane.f32.xlu0 %v1733
    %v1735 = vpop.xlane.xlu0 %1734
    %v1736 = vrcp.pop %v1735
    %v1737 = vmul.f32 %v1732, %v1736
    %1738 = vrot.lane.b32.xlu0 %v1274, 56
    %v1739 = vpop.permute.xlu0 %1738
    %v1742 = vsel %vm261, %v1737, 0
    %1744 = vmatpush.msra.mxu0 0.0
    %1745 = vmatpush.msra.mxu0 0.0
    %1746 = vmatpush.msra.mxu0 0.0
    %1747 = vmatpush.msra.mxu0 0.0
    %1748 = vmatpush.msra.mxu0 0.0
    %1749 = vmatpush.msra.mxu0 0.0
    %1750 = vmatpush.msra.mxu0 0.0
    %1751 = vmatpush.msra.mxu0 0.0
    %1752 = vmatpush.msra.mxu0 0.0
    %1753 = vmatpush.msra.mxu0 0.0
    %1754 = vmatpush.msra.mxu0 0.0
    %1755 = vmatpush.msra.mxu0 0.0
    %1756 = vmatpush.msra.mxu0 0.0
    %1757 = vmatpush.msra.mxu0 0.0
    %1758 = vmatpush.msra.mxu0 0.0
    %1759 = vmatpush.msra.mxu0 %v1739
    %1760 = vmatmul.f32.gmra.mxu0 %v1742
    %v1761 = vpop.f32.mrf.mxu0
    %v1762 = vadd.f32 0.0, %v1761
    %1763 = vdwg.mxu0
    %v1765 = vsel %vm261, %v1762, 0
    %1767 = vmatpush.msra.mxu0 0.0
    %1768 = vmatpush.msra.mxu0 0.0
    %1769 = vmatpush.msra.mxu0 0.0
    %1770 = vmatpush.msra.mxu0 0.0
    %1771 = vmatpush.msra.mxu0 0.0
    %1772 = vmatpush.msra.mxu0 0.0
    %1773 = vmatpush.msra.mxu0 0.0
    %1774 = vmatpush.msra.mxu0 0.0
    %1775 = vmatpush.msra.mxu0 0.0
    %1776 = vmatpush.msra.mxu0 0.0
    %1777 = vmatpush.msra.mxu0 0.0
    %1778 = vmatpush.msra.mxu0 0.0
    %1779 = vmatpush.msra.mxu0 0.0
    %1780 = vmatpush.msra.mxu0 0.0
    %1781 = vmatpush.msra.mxu0 0.0
    %1782 = vmatpush.msra.mxu0 %v1217
    %1783 = vmatmul.f32.gmra.mxu0 %v1765
    %v1784 = vpop.f32.mrf.mxu0
    %v1785 = vadd.f32 0.0, %v1784
    %1786 = vdwg.mxu0
    %v1788 = vsel %vm261, %v1696, 0
    %1790 = vmatpush.msra.mxu0 0.0
    %1791 = vmatpush.msra.mxu0 0.0
    %1792 = vmatpush.msra.mxu0 0.0
    %1793 = vmatpush.msra.mxu0 0.0
    %1794 = vmatpush.msra.mxu0 0.0
    %1795 = vmatpush.msra.mxu0 0.0
    %1796 = vmatpush.msra.mxu0 0.0
    %1797 = vmatpush.msra.mxu0 0.0
    %1798 = vmatpush.msra.mxu0 0.0
    %1799 = vmatpush.msra.mxu0 0.0
    %1800 = vmatpush.msra.mxu0 0.0
    %1801 = vmatpush.msra.mxu0 0.0
    %1802 = vmatpush.msra.mxu0 0.0
    %1803 = vmatpush.msra.mxu0 0.0
    %1804 = vmatpush.msra.mxu0 0.0
    %1805 = vmatpush.msra.mxu0 %v1216
    %1806 = vmatmul.f32.gmra.mxu0 %v1788
    %v1807 = vpop.f32.mrf.mxu0
    %v1808 = vadd.f32 %v1785, %v1807
    %1809 = vdwg.mxu0
    %1810 = vrot.lane.b32.xlu0 %v1274, 112
    %v1811 = vpop.permute.xlu0 %1810
    %1812 = vrot.lane.b32.xlu0 %v1274, 80
    %v1813 = vpop.permute.xlu0 %1812
    %v1814 = vsel %vm261, %v1811, 0
    %v1816 = vsel %vm261, %v1813, 0
    %1818 = vmatpush.xpose.msra.mxu0 0.0
    %1819 = vmatpush.xpose.msra.mxu0 0.0
    %1820 = vmatpush.xpose.msra.mxu0 0.0
    %1821 = vmatpush.xpose.msra.mxu0 0.0
    %1822 = vmatpush.xpose.msra.mxu0 0.0
    %1823 = vmatpush.xpose.msra.mxu0 0.0
    %1824 = vmatpush.xpose.msra.mxu0 0.0
    %1825 = vmatpush.xpose.msra.mxu0 0.0
    %1826 = vmatpush.xpose.msra.mxu0 0.0
    %1827 = vmatpush.xpose.msra.mxu0 0.0
    %1828 = vmatpush.xpose.msra.mxu0 0.0
    %1829 = vmatpush.xpose.msra.mxu0 0.0
    %1830 = vmatpush.xpose.msra.mxu0 0.0
    %1831 = vmatpush.xpose.msra.mxu0 0.0
    %1832 = vmatpush.xpose.msra.mxu0 0.0
    %1833 = vmatpush.xpose.msra.mxu0 %v1816
    %1834 = vmatmul.f32.gmra.mxu0 %v1814
    %v1835 = vpop.f32.mrf.mxu0
    %v1836 = vadd.f32 0.0, %v1835
    %1837 = vdwg.mxu0
    %v1838 = vsel %vm197, %v1836, -inf
    %v1839 = vsel %vm261, %v1838, -inf
    %1840 = vmax.xlane.f32.xlu0 %v1839
    %v1841 = vpop.xlane.xlu0 %1840
    %v1842 = vsub.f32 %v1838, %v1841
    %v1843 = vmul.f32 %v1842, 1.442695
    %v1844 = vpow.pop %v1843
    %v1845 = vsel %vm261, %v1844, 0.0
    %1846 = vadd.xlane.f32.xlu0 %v1845
    %v1847 = vpop.xlane.xlu0 %1846
    %v1848 = vrcp.pop %v1847
    %v1849 = vmul.f32 %v1844, %v1848
    %1850 = vrot.lane.b32.xlu0 %v1274, 48
    %v1851 = vpop.permute.xlu0 %1850
    %v1854 = vsel %vm261, %v1849, 0
    %1856 = vmatpush.msra.mxu0 0.0
    %1857 = vmatpush.msra.mxu0 0.0
    %1858 = vmatpush.msra.mxu0 0.0
    %1859 = vmatpush.msra.mxu0 0.0
    %1860 = vmatpush.msra.mxu0 0.0
    %1861 = vmatpush.msra.mxu0 0.0
    %1862 = vmatpush.msra.mxu0 0.0
    %1863 = vmatpush.msra.mxu0 0.0
    %1864 = vmatpush.msra.mxu0 0.0
    %1865 = vmatpush.msra.mxu0 0.0
    %1866 = vmatpush.msra.mxu0 0.0
    %1867 = vmatpush.msra.mxu0 0.0
    %1868 = vmatpush.msra.mxu0 0.0
    %1869 = vmatpush.msra.mxu0 0.0
    %1870 = vmatpush.msra.mxu0 0.0
    %1871 = vmatpush.msra.mxu0 %v1851
    %1872 = vmatmul.f32.gmra.mxu0 %v1854
    %v1873 = vpop.f32.mrf.mxu0
    %v1874 = vadd.f32 0.0, %v1873
    %1875 = vdwg.mxu0
    %v1877 = vsel %vm261, %v1874, 0
    %1879 = vmatpush.msra.mxu0 0.0
    %1880 = vmatpush.msra.mxu0 0.0
    %1881 = vmatpush.msra.mxu0 0.0
    %1882 = vmatpush.msra.mxu0 0.0
    %1883 = vmatpush.msra.mxu0 0.0
    %1884 = vmatpush.msra.mxu0 0.0
    %1885 = vmatpush.msra.mxu0 0.0
    %1886 = vmatpush.msra.mxu0 0.0
    %1887 = vmatpush.msra.mxu0 0.0
    %1888 = vmatpush.msra.mxu0 0.0
    %1889 = vmatpush.msra.mxu0 0.0
    %1890 = vmatpush.msra.mxu0 0.0
    %1891 = vmatpush.msra.mxu0 0.0
    %1892 = vmatpush.msra.mxu0 0.0
    %1893 = vmatpush.msra.mxu0 0.0
    %1894 = vmatpush.msra.mxu0 %v1218
    %1895 = vmatmul.f32.gmra.mxu0 %v1877
    %v1896 = vpop.f32.mrf.mxu0
    %v1897 = vadd.f32 0.0, %v1896
    %1898 = vdwg.mxu0
    %v1899 = vadd.f32 %v1808, %v1897
    %1900 = vrot.lane.b32.xlu0 %v1274, 104
    %v1901 = vpop.permute.xlu0 %1900
    %1902 = vrot.lane.b32.xlu0 %v1274, 72
    %v1903 = vpop.permute.xlu0 %1902
    %v1904 = vsel %vm261, %v1901, 0
    %v1906 = vsel %vm261, %v1903, 0
    %1908 = vmatpush.xpose.msra.mxu0 0.0
    %1909 = vmatpush.xpose.msra.mxu0 0.0
    %1910 = vmatpush.xpose.msra.mxu0 0.0
    %1911 = vmatpush.xpose.msra.mxu0 0.0
    %1912 = vmatpush.xpose.msra.mxu0 0.0
    %1913 = vmatpush.xpose.msra.mxu0 0.0
    %1914 = vmatpush.xpose.msra.mxu0 0.0
    %1915 = vmatpush.xpose.msra.mxu0 0.0
    %1916 = vmatpush.xpose.msra.mxu0 0.0
    %1917 = vmatpush.xpose.msra.mxu0 0.0
    %1918 = vmatpush.xpose.msra.mxu0 0.0
    %1919 = vmatpush.xpose.msra.mxu0 0.0
    %1920 = vmatpush.xpose.msra.mxu0 0.0
    %1921 = vmatpush.xpose.msra.mxu0 0.0
    %1922 = vmatpush.xpose.msra.mxu0 0.0
    %1923 = vmatpush.xpose.msra.mxu0 %v1906
    %1924 = vmatmul.f32.gmra.mxu0 %v1904
    %v1925 = vpop.f32.mrf.mxu0
    %v1926 = vadd.f32 0.0, %v1925
    %1927 = vdwg.mxu0
    %v1928 = vsel %vm197, %v1926, -inf
    %v1929 = vsel %vm261, %v1928, -inf
    %1930 = vmax.xlane.f32.xlu0 %v1929
    %v1931 = vpop.xlane.xlu0 %1930
    %v1932 = vsub.f32 %v1928, %v1931
    %v1933 = vmul.f32 %v1932, 1.442695
    %v1934 = vpow.pop %v1933
    %v1935 = vsel %vm261, %v1934, 0.0
    %1936 = vadd.xlane.f32.xlu0 %v1935
    %v1937 = vpop.xlane.xlu0 %1936
    %v1938 = vrcp.pop %v1937
    %v1939 = vmul.f32 %v1934, %v1938
    %1940 = vrot.lane.b32.xlu0 %v1274, 40
    %v1941 = vpop.permute.xlu0 %1940
    %v1944 = vsel %vm261, %v1939, 0
    %1946 = vmatpush.msra.mxu0 0.0
    %1947 = vmatpush.msra.mxu0 0.0
    %1948 = vmatpush.msra.mxu0 0.0
    %1949 = vmatpush.msra.mxu0 0.0
    %1950 = vmatpush.msra.mxu0 0.0
    %1951 = vmatpush.msra.mxu0 0.0
    %1952 = vmatpush.msra.mxu0 0.0
    %1953 = vmatpush.msra.mxu0 0.0
    %1954 = vmatpush.msra.mxu0 0.0
    %1955 = vmatpush.msra.mxu0 0.0
    %1956 = vmatpush.msra.mxu0 0.0
    %1957 = vmatpush.msra.mxu0 0.0
    %1958 = vmatpush.msra.mxu0 0.0
    %1959 = vmatpush.msra.mxu0 0.0
    %1960 = vmatpush.msra.mxu0 0.0
    %1961 = vmatpush.msra.mxu0 %v1941
    %1962 = vmatmul.f32.gmra.mxu0 %v1944
    %v1963 = vpop.f32.mrf.mxu0
    %v1964 = vadd.f32 0.0, %v1963
    %1965 = vdwg.mxu0
    %v1967 = vsel %vm261, %v1964, 0
    %1969 = vmatpush.msra.mxu0 0.0
    %1970 = vmatpush.msra.mxu0 0.0
    %1971 = vmatpush.msra.mxu0 0.0
    %1972 = vmatpush.msra.mxu0 0.0
    %1973 = vmatpush.msra.mxu0 0.0
    %1974 = vmatpush.msra.mxu0 0.0
    %1975 = vmatpush.msra.mxu0 0.0
    %1976 = vmatpush.msra.mxu0 0.0
    %1977 = vmatpush.msra.mxu0 0.0
    %1978 = vmatpush.msra.mxu0 0.0
    %1979 = vmatpush.msra.mxu0 0.0
    %1980 = vmatpush.msra.mxu0 0.0
    %1981 = vmatpush.msra.mxu0 0.0
    %1982 = vmatpush.msra.mxu0 0.0
    %1983 = vmatpush.msra.mxu0 0.0
    %1984 = vmatpush.msra.mxu0 %v1219
    %1985 = vmatmul.f32.gmra.mxu0 %v1967
    %v1986 = vpop.f32.mrf.mxu0
    %v1987 = vadd.f32 0.0, %v1986
    %1988 = vdwg.mxu0
    %v1989 = vadd.f32 %v1899, %v1987
    %v1991 = vperm.slane %v1221, 0
    %v1993 = vadd.f32 %v1632, %v1991
    %v1994 = vadd.f32 %v1989, %v1991
    %v1995 = vadd.f32 %v1206, %v1993
    %v1996 = vadd.f32 %v1207, %v1994
    %v1997 = vsel %vm130, %v1995, 0.0
    %1998 = vadd.xlane.f32.xlu0 %v1997
    %v1999 = vpop.xlane.xlu0 %1998
    %v2000 = vsel %vm130, %v1996, 0.0
    %2001 = vadd.xlane.f32.xlu0 %v2000
    %v2002 = vpop.xlane.xlu0 %2001
    %v2003 = vmul.f32 %v1999, %v992
    %v2004 = vmul.f32 %v2002, %v992
    %v2005 = vsub.f32 %v1995, %v2003
    %v2006 = vsub.f32 %v1996, %v2004
    %v2007 = vmul.f32 %v2005, %v2005
    %v2008 = vmul.f32 %v2006, %v2006
    %v2009 = vsel %vm130, %v2007, 0.0
    %2010 = vadd.xlane.f32.xlu0 %v2009
    %v2011 = vpop.xlane.xlu0 %2010
    %v2012 = vsel %vm130, %v2008, 0.0
    %2013 = vadd.xlane.f32.xlu0 %v2012
    %v2014 = vpop.xlane.xlu0 %2013
    %v2015 = vmul.f32 %v2011, %v992
    %v2016 = vmul.f32 %v2014, %v992
    %v2017 = vadd.f32 %v2015, 1e-05
    %v2018 = vadd.f32 %v2016, 1e-05
    %v2019 = vrsqrt.pop %v2017
    %v2020 = vmul.f32 %v2019, %v2017
    %v2021 = vmul.f32 %v2020, %v2019
    %v2022 = vmul.f32 0.5, %v2021
    %v2023 = vsub.f32 1.5, %v2022
    %v2024 = vmul.f32 %v2019, %v2023
    %vm2025 = vweird.f32 %v2017
    %vm2026 = vweird.f32 %v2019
    %vm2027 = vmor %vm2025, %vm2026
    %v2028 = vsel %vm2027, %v2019, %v2024
    %v2029 = vrsqrt.pop %v2018
    %v2030 = vmul.f32 %v2029, %v2018
    %v2031 = vmul.f32 %v2030, %v2029
    %v2032 = vmul.f32 0.5, %v2031
    %v2033 = vsub.f32 1.5, %v2032
    %v2034 = vmul.f32 %v2029, %v2033
    %vm2035 = vweird.f32 %v2018
    %vm2036 = vweird.f32 %v2029
    %vm2037 = vmor %vm2035, %vm2036
    %v2038 = vsel %vm2037, %v2029, %v2034
    %v2039 = vmul.f32 %v2005, %v2028
    %v2040 = vmul.f32 %v2006, %v2038
    %v2041 = vperm.slane %v1241, 0
    %v2042 = vmul.f32 %v2039, %v2041
    %v2043 = vmul.f32 %v2040, %v2041
    %v2044 = vperm.slane %v1243, 0
    %v2045 = vadd.f32 %v2042, %v2044
    %v2046 = vadd.f32 %v2043, %v2044
    %v2047 = vadd.f32 %v2045, %v188
    %v2048 = vadd.f32 %v2046, %v191
    %v2049 = vsel %vm130, %v2047, 0.0
    %2050 = vadd.xlane.f32.xlu0 %v2049
    %v2051 = vpop.xlane.xlu0 %2050
    %v2052 = vsel %vm130, %v2048, 0.0
    %2053 = vadd.xlane.f32.xlu0 %v2052
    %v2054 = vpop.xlane.xlu0 %2053
    %v2055 = vmul.f32 %v2051, %v992
    %v2056 = vmul.f32 %v2054, %v992
    %v2057 = vsub.f32 %v2047, %v2055
    %v2058 = vsub.f32 %v2048, %v2056
    %v2059 = vmul.f32 %v2057, %v2057
    %v2060 = vmul.f32 %v2058, %v2058
    %v2061 = vsel %vm130, %v2059, 0.0
    %2062 = vadd.xlane.f32.xlu0 %v2061
    %v2063 = vpop.xlane.xlu0 %2062
    %v2064 = vsel %vm130, %v2060, 0.0
    %2065 = vadd.xlane.f32.xlu0 %v2064
    %v2066 = vpop.xlane.xlu0 %2065
    %v2067 = vmul.f32 %v2063, %v992
    %v2068 = vmul.f32 %v2066, %v992
    %v2069 = vadd.f32 %v2067, 1e-05
    %v2070 = vadd.f32 %v2068, 1e-05
    %v2071 = vrsqrt.pop %v2069
    %v2072 = vmul.f32 %v2071, %v2069
    %v2073 = vmul.f32 %v2072, %v2071
    %v2074 = vmul.f32 0.5, %v2073
    %v2075 = vsub.f32 1.5, %v2074
    %v2076 = vmul.f32 %v2071, %v2075
    %vm2077 = vweird.f32 %v2069
    %vm2078 = vweird.f32 %v2071
    %vm2079 = vmor %vm2077, %vm2078
    %v2080 = vsel %vm2079, %v2071, %v2076
    %v2081 = vrsqrt.pop %v2070
    %v2082 = vmul.f32 %v2081, %v2070
    %v2083 = vmul.f32 %v2082, %v2081
    %v2084 = vmul.f32 0.5, %v2083
    %v2085 = vsub.f32 1.5, %v2084
    %v2086 = vmul.f32 %v2081, %v2085
    %vm2087 = vweird.f32 %v2070
    %vm2088 = vweird.f32 %v2081
    %vm2089 = vmor %vm2087, %vm2088
    %v2090 = vsel %vm2089, %v2081, %v2086
    %v2091 = vmul.f32 %v2057, %v2080
    %v2092 = vmul.f32 %v2058, %v2090
    %v2093 = vperm.slane %v1241, 1
    %v2094 = vmul.f32 %v2091, %v2093
    %v2095 = vmul.f32 %v2092, %v2093
    %v2096 = vperm.slane %v1243, 1
    %v2097 = vadd.f32 %v2094, %v2096
    %v2098 = vadd.f32 %v2095, %v2096
    %v2100 = vperm.slane %v1228, 0
    %v2103 = vsel %vm130, %v2097, 0
    %v2106 = vsel %vm130, %v2098, 0
    %2108 = vmatpush.msra.mxu0 0.0
    %2109 = vmatpush.msra.mxu0 0.0
    %2110 = vmatpush.msra.mxu0 0.0
    %2111 = vmatpush.msra.mxu0 0.0
    %2112 = vmatpush.msra.mxu0 0.0
    %2113 = vmatpush.msra.mxu0 0.0
    %2114 = vmatpush.msra.mxu0 0.0
    %2115 = vmatpush.msra.mxu0 0.0
    %2116 = vmatpush.msra.mxu0 0.0
    %2117 = vmatpush.msra.mxu0 0.0
    %2118 = vmatpush.msra.mxu0 0.0
    %2119 = vmatpush.msra.mxu0 0.0
    %2120 = vmatpush.msra.mxu0 %v1226
    %2121 = vmatpush.msra.mxu0 %v1225
    %2122 = vmatpush.msra.mxu0 %v1224
    %2123 = vmatpush.msra.mxu0 %v1223
    %2124 = vmatmul.f32.gmra.mxu0 %v2103
    %v2125 = vpop.f32.mrf.mxu0
    %v2126 = vadd.f32 %v2100, %v2125
    %2127 = vmatmul.f32.gmra.mxu0 %v2106
    %v2128 = vpop.f32.mrf.mxu0
    %v2129 = vadd.f32 %v2100, %v2128
    %2130 = vdwg.mxu0
    %v2131 = vmax.f32 %v2126, 0.0
    %v2132 = vmax.f32 %v2129, 0.0
    %v2134 = vperm.slane %v1239, 0
    %v2137 = vsel %vm1126, %v2131, 0
    %v2140 = vsel %vm1126, %v2132, 0
    %2142 = vmatpush.msra.mxu0 0.0
    %2143 = vmatpush.msra.mxu0 0.0
    %2144 = vmatpush.msra.mxu0 0.0
    %2145 = vmatpush.msra.mxu0 0.0
    %2146 = vmatpush.msra.mxu0 0.0
    %2147 = vmatpush.msra.mxu0 0.0
    %2148 = vmatpush.msra.mxu0 0.0
    %2149 = vmatpush.msra.mxu0 0.0
    %2150 = vmatpush.msra.mxu0 %v1237
    %2151 = vmatpush.msra.mxu0 %v1236
    %2152 = vmatpush.msra.mxu0 %v1235
    %2153 = vmatpush.msra.mxu0 %v1234
    %2154 = vmatpush.msra.mxu0 %v1233
    %2155 = vmatpush.msra.mxu0 %v1232
    %2156 = vmatpush.msra.mxu0 %v1231
    %2157 = vmatpush.msra.mxu0 %v1230
    %2158 = vmatmul.f32.gmra.mxu0 %v2137
    %v2159 = vpop.f32.mrf.mxu0
    %v2160 = vadd.f32 %v2134, %v2159
    %2161 = vmatmul.f32.gmra.mxu0 %v2140
    %v2162 = vpop.f32.mrf.mxu0
    %v2163 = vadd.f32 %v2134, %v2162
    %2164 = vdwg.mxu0
    %v2165 = vadd.f32 %v2097, %v2160
    %v2166 = vadd.f32 %v2098, %v2163
    %v2167 = vsel %vm130, %v2165, 0.0
    %2168 = vadd.xlane.f32.xlu0 %v2167
    %v2169 = vpop.xlane.xlu0 %2168
    %v2170 = vsel %vm130, %v2166, 0.0
    %2171 = vadd.xlane.f32.xlu0 %v2170
    %v2172 = vpop.xlane.xlu0 %2171
    %v2173 = vmul.f32 %v2169, %v992
    %v2174 = vmul.f32 %v2172, %v992
    %v2175 = vsub.f32 %v2165, %v2173
    %v2176 = vsub.f32 %v2166, %v2174
    %v2177 = vmul.f32 %v2175, %v2175
    %v2178 = vmul.f32 %v2176, %v2176
    %v2179 = vsel %vm130, %v2177, 0.0
    %2180 = vadd.xlane.f32.xlu0 %v2179
    %v2181 = vpop.xlane.xlu0 %2180
    %v2182 = vsel %vm130, %v2178, 0.0
    %2183 = vadd.xlane.f32.xlu0 %v2182
    %v2184 = vpop.xlane.xlu0 %2183
    %v2185 = vmul.f32 %v2181, %v992
    %v2186 = vmul.f32 %v2184, %v992
    %v2187 = vadd.f32 %v2185, 1e-05
    %v2188 = vadd.f32 %v2186, 1e-05
    %v2189 = vrsqrt.pop %v2187
    %v2190 = vmul.f32 %v2189, %v2187
    %v2191 = vmul.f32 %v2190, %v2189
    %v2192 = vmul.f32 0.5, %v2191
    %v2193 = vsub.f32 1.5, %v2192
    %v2194 = vmul.f32 %v2189, %v2193
    %vm2195 = vweird.f32 %v2187
    %vm2196 = vweird.f32 %v2189
    %vm2197 = vmor %vm2195, %vm2196
    %v2198 = vsel %vm2197, %v2189, %v2194
    %v2199 = vrsqrt.pop %v2188
    %v2200 = vmul.f32 %v2199, %v2188
    %v2201 = vmul.f32 %v2200, %v2199
    %v2202 = vmul.f32 0.5, %v2201
    %v2203 = vsub.f32 1.5, %v2202
    %v2204 = vmul.f32 %v2199, %v2203
    %vm2205 = vweird.f32 %v2188
    %vm2206 = vweird.f32 %v2199
    %vm2207 = vmor %vm2205, %vm2206
    %v2208 = vsel %vm2207, %v2199, %v2204
    %v2209 = vmul.f32 %v2175, %v2198
    %v2210 = vmul.f32 %v2176, %v2208
    %v2211 = vperm.slane %v1241, 2
    %v2212 = vmul.f32 %v2209, %v2211
    %v2213 = vmul.f32 %v2210, %v2211
    %v2214 = vperm.slane %v1243, 2
    %v2215 = vadd.f32 %v2212, %v2214
    %v2216 = vadd.f32 %v2213, %v2214
    %v2217 = vld [vmem:[%s16] sm:$0xff]
    %v2218 = vld [vmem:[%s16 + $0x8] sm:$0xff]
    %v2219 = vld [vmem:[%s16 + $0x10] sm:$0xff]
    %v2220 = vld [vmem:[%s16 + $0x18] sm:$0xff]
    %v2221 = vld [vmem:[%s17] sm:$0x1]
    %v2223 = vperm.slane %v2221, 0
    %v2226 = vsel %vm130, %v2215, 0
    %v2229 = vsel %vm130, %v2216, 0
    %2231 = vmatpush.msra.mxu0 0.0
    %2232 = vmatpush.msra.mxu0 0.0
    %2233 = vmatpush.msra.mxu0 0.0
    %2234 = vmatpush.msra.mxu0 0.0
    %2235 = vmatpush.msra.mxu0 0.0
    %2236 = vmatpush.msra.mxu0 0.0
    %2237 = vmatpush.msra.mxu0 0.0
    %2238 = vmatpush.msra.mxu0 0.0
    %2239 = vmatpush.msra.mxu0 0.0
    %2240 = vmatpush.msra.mxu0 0.0
    %2241 = vmatpush.msra.mxu0 0.0
    %2242 = vmatpush.msra.mxu0 0.0
    %2243 = vmatpush.msra.mxu0 %v2220
    %2244 = vmatpush.msra.mxu0 %v2219
    %2245 = vmatpush.msra.mxu0 %v2218
    %2246 = vmatpush.msra.mxu0 %v2217
    %2247 = vmatmul.f32.gmra.mxu0 %v2226
    %v2248 = vpop.f32.mrf.mxu0
    %v2249 = vadd.f32 %v2223, %v2248
    %2250 = vmatmul.f32.gmra.mxu0 %v2229
    %v2251 = vpop.f32.mrf.mxu0
    %v2252 = vadd.f32 %v2223, %v2251
    %2253 = vdwg.mxu0
    %2254 = vst [vmem:[#allocation2] sm:$0xff] %v2249
    %2255 = vst [vmem:[#allocation2 + $0x8] sm:$0xff] %v2252
    // Predicated region
    $region74: #{image_captioning_forward.1} parent=1 // pred_check
      _
    $region75: #{image_captioning_forward.1} parent=1 // pred_check_branch
      %2257 = sbr.rel (0) target = $region77
    $region76: #{image_captioning_forward.1} parent=1 // pred_region
      %2259 = vsyncadd [#allocation3], 0
      %s2260 = sshll.u32 [#allocation2], 4
      %s2261 = int_to_ptr.vmem [resolvable:$true] %s2260
      %s2262 = sshll.u32 %s18, 4
      %s2263 = int_to_ptr.hbm [resolvable:$true] %s2262
      %2268 = dma.vmem_to_hbm [thread:$0]  %s2261, 256, %s2263, [#allocation3], 128, 128, 8
    $region77: #{image_captioning_forward.1} parent=1 // pred_fallthru
      _
    // Predicated region
    $region78: #{image_captioning_forward.1} parent=1 // pred_check
      _
    $region79: #{image_captioning_forward.1} parent=1 // pred_check_branch
      %2270 = sbr.rel (0) target = $region81
    $region80: #{image_captioning_forward.1} parent=1 // pred_region
      %2272 = dma.done [#allocation3], 256
    $region81: #{image_captioning_forward.1} parent=1 // pred_fallthru
      _
    %2273 = vsyncpa [#allocation3], 1

</llo_original>
